<compile_context>
chip_gen: v7x
topology: tpu7x:2x2x1
jax: 0.10.0
libtpu: 0.0.40
codegen_flags: <defaults>
</compile_context>

<pallas_src>
import jax
import jax.numpy as jnp
from jax.experimental import pallas as pl
from jax.experimental.pallas import tpu as pltpu


def _detect_tpu(default_vmem=64 << 20, default_cores=2):
    """Best-effort (VMEM bytes per core, TensorCores per chip).

    Fallbacks are conservative: 64 MiB (v7x per-TC VMEM, the smallest of v5e/v6e/v7x)
    and 2 cores (preferring an even grid is harmless on single-TC v5e/v6e, whereas
    assuming 1 core on v7x would idle a TensorCore)."""
    vmem, cores = default_vmem, default_cores
    try:
        info = pltpu.get_tpu_info()
        vmem = int(getattr(info, "vmem_capacity_bytes", vmem))
        for name in ("num_cores", "core_count", "num_tensorcores", "tensorcore_count"):
            val = getattr(info, name, None)
            if val:
                cores = int(val)
                break
    except Exception:
        pass
    return vmem, cores


def _spatial_graph_kernel(bt, C, H, Hp, compute_dtype):
    def kernel(x_ref, wqkv_ref, bqkv_ref, wo_ref, bo_ref, aff_ref, o_ref):
        # (Bt, C, H) -> (Bt*C, H): fill the MXU M dimension across folded batches
        # (leading-dim merge only; no lane relayout).
        x = x_ref[...].reshape(bt * C, H)

        # Fused Q/K/V projection: one (Bt*C, H) x (H, 3*Hp) bf16 matmul, f32 accumulate,
        # f32 packed bias. 1/sqrt(H) is pre-folded into the Q segment.
        qkv = jnp.dot(x, wqkv_ref[...], preferred_element_type=jnp.float32) + bqkv_ref[...]

        # Segment slices are 128-lane-tile aligned (Hp is a multiple of 128); padded
        # columns are exactly zero so every contraction below is exact.
        q = qkv[:, 0 * Hp:1 * Hp].reshape(bt, C, Hp)
        k = qkv[:, 1 * Hp:2 * Hp].reshape(bt, C, Hp)
        v = qkv[:, 2 * Hp:3 * Hp].reshape(bt, C, Hp)

        # Attention scores: contract the hidden dim directly (no materialized k.T),
        # gate by the spatial affinity buffer. These are tiny batched matmuls
        # (C x Hp x C); the large Bt keeps them pipelined behind the projections.
        scores = jnp.einsum("bch,bdh->bcd", q, k, preferred_element_type=jnp.float32)
        scores = scores * aff_ref[...][None, :, :]          # (Bt, C, C), f32

        # Softmax along the last dim, kept in f32 (mandatory on v5e); reciprocal on the
        # otherwise-idle EUP slot.
        m = jnp.max(scores, axis=-1, keepdims=True)
        p = jnp.exp(scores - m)
        attn = p * pl.reciprocal(jnp.sum(p, axis=-1, keepdims=True), approx=True)

        # attn @ v, then the output projection as a bf16 MXU matmul with f32 accumulate.
        ctx = jnp.einsum("bcd,bdh->bch", attn, v, preferred_element_type=jnp.float32)
        out = jnp.dot(ctx.reshape(bt * C, Hp).astype(compute_dtype), wo_ref[...],
                      preferred_element_type=jnp.float32) + bo_ref[...]
        o_ref[...] = out.reshape(bt, C, H).astype(o_ref.dtype)

    return kernel


def _pick_block_batch(B, C, H, Hp, vmem_budget_bytes, *, target_rows=1024,
                      num_cores=2, single_buffer_weights=True, compute_bytes=2):
    """Largest batch-fold Bt that (a) divides B, (b) keeps Bt*C within the target MXU
    row count, (c) fits the VMEM budget, and — when possible — (d) yields a grid that
    is a multiple of the TensorCore count (even grid keeps both v7x TCs busy; grid=1 is
    allowed on single-TC v5e/v6e where the grid is just a serial loop)."""
    wbuf = 1 if single_buffer_weights else 2

    def step_bytes(bt):
        x_b = 2 * bt * C * H * compute_bytes                 # x block, double-buffered
        o_b = 2 * bt * C * H * 4                             # out block, double-buffered
        w_b = wbuf * ((3 * H * Hp + Hp * H) * compute_bytes  # wqkv + wo
                      + (3 * Hp + H + C * C) * 4)            # bqkv + bo + affinity
        tmp_b = (bt * C * 3 * Hp + 2 * bt * C * Hp + 2 * bt * C * C) * 4
        return x_b + o_b + w_b + tmp_b

    fitting = []
    for bt in range(1, B + 1):
        if B % bt:
            continue
        if bt * C > max(target_rows, C):
            continue
        if step_bytes(bt) > vmem_budget_bytes:
            continue
        fitting.append(bt)
    if not fitting:
        fitting = [1]
    balanced = [bt for bt in fitting if (B // bt) % max(num_cores, 1) == 0]
    return max(balanced) if balanced else max(fitting)


def _build_spatial_graph_call(B, C, H, Hp, bt, compute_dtype, out_dtype,
                              vmem_limit_bytes, single_buffer_weights):
    grid = (B // bt,)

    if single_buffer_weights:
        # Grid-invariant blocks: single VMEM buffer (never re-fetched across steps).
        def const(shape):
            return pl.BlockSpec(shape, lambda g: (0,) * len(shape),
                                pipeline_mode=pl.Buffered(1))
    else:
        def const(shape):
            return pl.BlockSpec(shape, lambda g: (0,) * len(shape))

    return pl.pallas_call(
        _spatial_graph_kernel(bt, C, H, Hp, compute_dtype),
        out_shape=jax.ShapeDtypeStruct((B, C, H), out_dtype),
        grid_spec=pltpu.PrefetchScalarGridSpec(
            num_scalar_prefetch=0,
            grid=grid,
            in_specs=[
                pl.BlockSpec((bt, C, H), lambda g: (g, 0, 0)),   # x (batch-folded block)
                const((H, 3 * Hp)),                              # fused, padded Wqkv
                const((1, 3 * Hp)),                              # packed, padded bias
                const((Hp, H)), const((1, H)),                   # Wo (row-padded), bo
                const((C, C)),                                   # spatial_affinity
            ],
            out_specs=pl.BlockSpec((bt, C, H), lambda g: (g, 0, 0)),
        ),
        compiler_params=pltpu.CompilerParams(
            dimension_semantics=("parallel",),
            vmem_limit_bytes=int(vmem_limit_bytes),
        ),
    )


def spatial_graph_forward(x, params, affinity, *, block_batch=None,
                          compute_dtype=jnp.bfloat16, single_buffer_weights=True):
    """x: (B, C, H) float32.
    params: dict of (H, H) pre-transposed weights ("wq","wk","wv","wo") and (1, H) biases.
    compute_dtype: dtype of the MXU operands (bf16 default; accumulation is always f32)."""
    B, C, H = x.shape
    Hp = -(-H // 128) * 128               # per-segment lane padding (no-op when H % 128 == 0)
    inv_sqrt_h = 1.0 / (H ** 0.5)
    f32 = jnp.float32

    def pad_cols(a):                      # (r, H) -> (r, Hp), zero-padded columns
        return jnp.pad(a, ((0, 0), (0, Hp - H)))

    # Pack once: fold 1/sqrt(H) into the Q segment, zero-pad each segment to Hp lanes.
    wqkv = jnp.concatenate([pad_cols(params["wq"].astype(f32) * inv_sqrt_h),
                            pad_cols(params["wk"].astype(f32)),
                            pad_cols(params["wv"].astype(f32))], axis=1)   # (H, 3*Hp)
    bqkv = jnp.concatenate([pad_cols(params["bq"].astype(f32) * inv_sqrt_h),
                            pad_cols(params["bk"].astype(f32)),
                            pad_cols(params["bv"].astype(f32))], axis=1)   # (1, 3*Hp)
    wo = jnp.pad(params["wo"].astype(f32), ((0, Hp - H), (0, 0)))          # (Hp, H)
    bo = params["bo"].astype(f32)
    aff = affinity.astype(f32)

    # bf16 (or requested dtype) MXU operands; biases / affinity / softmax stay f32.
    x_c = x.astype(compute_dtype)
    wqkv = wqkv.astype(compute_dtype)
    wo = wo.astype(compute_dtype)

    vmem_bytes, num_cores = _detect_tpu()
    budget = min(vmem_bytes // 2, 28 << 20)                 # picker budget
    vmem_limit = min(vmem_bytes * 3 // 4, budget + (8 << 20))  # scoped limit for Mosaic

    if block_batch is None:
        bt = _pick_block_batch(B, C, H, Hp, budget,
                               num_cores=num_cores,
                               single_buffer_weights=single_buffer_weights,
                               compute_bytes=jnp.dtype(compute_dtype).itemsize)
    else:
        bt = block_batch
    assert B % bt == 0, (B, bt)

    args = (x_c, wqkv, bqkv, wo, bo, aff)
    try:
        call = _build_spatial_graph_call(B, C, H, Hp, bt, compute_dtype, x.dtype,
                                         vmem_limit, single_buffer_weights)
        return call(*args)
    except Exception:
        if not single_buffer_weights:
            raise
        # pl.Buffered(1) on the weight specs is a pure VMEM optimization; fall back to
        # default double-buffering if this JAX build rejects the pipeline_mode.
        call = _build_spatial_graph_call(B, C, H, Hp, bt, compute_dtype, x.dtype,
                                         vmem_limit, False)
        return call(*args)


def reference_forward(x, params, affinity):
    H = x.shape[-1]
    q = x @ params["wq"] + params["bq"]
    k = x @ params["wk"] + params["bk"]
    v = x @ params["wv"] + params["bv"]
    scores = jnp.einsum("bch,bdh->bcd", q, k) / (H ** 0.5)
    scores = scores * affinity[None]
    attn = jax.nn.softmax(scores, axis=-1)
    out = jnp.einsum("bcd,bdh->bch", attn, v)
    return out @ params["wo"] + params["bo"]


if __name__ == "__main__":
    B, C, H = 8, 16, 32        # batch, num_classes, hidden_dim (small test shapes)

    key = jax.random.PRNGKey(0)
    ks = jax.random.split(key, 10)

    def lin(kw, kb, fan_in):
        scale = 1.0 / (fan_in ** 0.5)
        w = jax.random.uniform(kw, (H, H), jnp.float32, -scale, scale)  # pre-transposed (H_in, H_out)
        b = jax.random.uniform(kb, (1, H), jnp.float32, -scale, scale)
        return w, b

    wq, bq = lin(ks[0], ks[1], H)
    wk, bk = lin(ks[2], ks[3], H)
    wv, bv = lin(ks[4], ks[5], H)
    wo, bo = lin(ks[6], ks[7], H)
    params = dict(wq=wq, bq=bq, wk=wk, bk=bk, wv=wv, bv=bv, wo=wo, bo=bo)

    affinity = jnp.eye(C, dtype=jnp.float32)           # registered buffer: identity
    x = jax.random.normal(ks[8], (B, C, H), jnp.float32)

    ref = reference_forward(x, params, affinity)

    # f32-operand path: tight check (only deviation is the EUP approximate reciprocal
    # in the softmax denominator).
    out_f32 = spatial_graph_forward(x, params, affinity, compute_dtype=jnp.float32)
    out_f32 = jax.block_until_ready(out_f32)
    assert out_f32.shape == (B, C, H)
    assert jnp.allclose(out_f32, ref, atol=2e-3, rtol=2e-3), "f32 path mismatch vs reference"

    # Production path: bf16 MXU operands, f32 accumulation / softmax. Looser tolerance
    # accounts for bf16 rounding of x / Wqkv / Wo (~0.4% per operand).
    out_bf16 = spatial_graph_forward(x, params, affinity)   # compute_dtype=bf16 default
    out_bf16 = jax.block_until_ready(out_bf16)
    assert out_bf16.shape == (B, C, H)
    assert jnp.allclose(out_bf16, ref, atol=3e-2, rtol=3e-2), "bf16 path mismatch vs reference"

    print("KERNEL_OK")
</pallas_src>

<mosaic_0001>
module attributes {stable_mosaic.version = 11 : i64} {
  func.func @kernel(%arg0: i32, %arg1: memref<4x16x32xf32, #tpu.memory_space<vmem>>, %arg2: memref<32x384xf32, #tpu.memory_space<vmem>>, %arg3: memref<1x384xf32, #tpu.memory_space<vmem>>, %arg4: memref<128x32xf32, #tpu.memory_space<vmem>>, %arg5: memref<1x32xf32, #tpu.memory_space<vmem>>, %arg6: memref<16x16xf32, #tpu.memory_space<vmem>>, %arg7: memref<4x16x32xf32, #tpu.memory_space<vmem>>) attributes {dimension_semantics = [#tpu.dimension_semantics<parallel>], iteration_bounds = array<i64: 2>, scalar_prefetch = 0 : i64, scratch_operands = 0 : i64, tpu.core_type = #tpu.core_type<tc>, window_params = [{transform_indices = @transform_0, window_bounds = array<i64: 4, 16, 32>}, {pipeline_mode = #tpu.pipeline_mode<synchronous>, transform_indices = @transform_1, window_bounds = array<i64: 32, 384>}, {pipeline_mode = #tpu.pipeline_mode<synchronous>, transform_indices = @transform_2, window_bounds = array<i64: 1, 384>}, {pipeline_mode = #tpu.pipeline_mode<synchronous>, transform_indices = @transform_3, window_bounds = array<i64: 128, 32>}, {pipeline_mode = #tpu.pipeline_mode<synchronous>, transform_indices = @transform_4, window_bounds = array<i64: 1, 32>}, {pipeline_mode = #tpu.pipeline_mode<synchronous>, transform_indices = @transform_5, window_bounds = array<i64: 16, 16>}, {transform_indices = @transform_6, window_bounds = array<i64: 4, 16, 32>}]} {
    %c0 = arith.constant 0 : index
    %c0_0 = arith.constant 0 : index
    %c0_1 = arith.constant 0 : index
    %0 = vector.load %arg1[%c0, %c0_0, %c0_1] : memref<4x16x32xf32, #tpu.memory_space<vmem>>, vector<4x16x32xf32>
    %1 = vector.shape_cast %0 : vector<4x16x32xf32> to vector<64x32xf32>
    %c0_2 = arith.constant 0 : index
    %c0_3 = arith.constant 0 : index
    %2 = vector.load %arg2[%c0_2, %c0_3] : memref<32x384xf32, #tpu.memory_space<vmem>>, vector<32x384xf32>
    %cst = arith.constant dense<0.000000e+00> : vector<64x384xf32>
    %3 = tpu.matmul %1, %2, %cst {dimension_numbers = #tpu.dot_dimension_numbers<[1], [0], [0], [1], [0, 0, 1, 1], [], []>} : vector<64x32xf32>, vector<32x384xf32>, vector<64x384xf32> -> vector<64x384xf32>
    %c0_4 = arith.constant 0 : index
    %c0_5 = arith.constant 0 : index
    %4 = vector.load %arg3[%c0_4, %c0_5] : memref<1x384xf32, #tpu.memory_space<vmem>>, vector<1x384xf32>
    %5 = vector.broadcast %4 : vector<1x384xf32> to vector<64x384xf32>
    %6 = arith.addf %3, %5 : vector<64x384xf32>
    %7 = vector.extract_strided_slice %6 {offsets = [0, 0], sizes = [64, 128], strides = [1, 1]} : vector<64x384xf32> to vector<64x128xf32>
    %8 = vector.shape_cast %7 : vector<64x128xf32> to vector<4x16x128xf32>
    %9 = vector.extract_strided_slice %6 {offsets = [0, 128], sizes = [64, 128], strides = [1, 1]} : vector<64x384xf32> to vector<64x128xf32>
    %10 = vector.shape_cast %9 : vector<64x128xf32> to vector<4x16x128xf32>
    %11 = vector.extract_strided_slice %6 {offsets = [0, 256], sizes = [64, 128], strides = [1, 1]} : vector<64x384xf32> to vector<64x128xf32>
    %12 = vector.shape_cast %11 : vector<64x128xf32> to vector<4x16x128xf32>
    "tpu.trace_start"() <{level = 10 : i32, message = "bch,bdh->bcd"}> : () -> ()
    %cst_6 = arith.constant dense<0.000000e+00> : vector<4x16x16xf32>
    %13 = tpu.matmul %8, %10, %cst_6 {dimension_numbers = #tpu.dot_dimension_numbers<[2], [2], [1], [1], [0, 0, 0, 1, 1, 1], [0], [0]>} : vector<4x16x128xf32>, vector<4x16x128xf32>, vector<4x16x16xf32> -> vector<4x16x16xf32>
    "tpu.trace_stop"() : () -> ()
    %c0_7 = arith.constant 0 : index
    %c0_8 = arith.constant 0 : index
    %14 = vector.load %arg6[%c0_7, %c0_8] : memref<16x16xf32, #tpu.memory_space<vmem>>, vector<16x16xf32>
    %15 = vector.shape_cast %14 : vector<16x16xf32> to vector<1x16x16xf32>
    %16 = vector.broadcast %15 : vector<1x16x16xf32> to vector<4x16x16xf32>
    %17 = arith.mulf %13, %16 : vector<4x16x16xf32>
    %cst_9 = arith.constant dense<0xFF800000> : vector<4x16xf32>
    %18 = vector.multi_reduction <maximumf>, %17, %cst_9 [2] : vector<4x16x16xf32> to vector<4x16xf32>
    %19 = vector.shape_cast %18 : vector<4x16xf32> to vector<4x16x1xf32>
    %20 = vector.broadcast %19 : vector<4x16x1xf32> to vector<4x16x16xf32>
    %21 = arith.subf %17, %20 : vector<4x16x16xf32>
    %22 = math.exp %21 : vector<4x16x16xf32>
    %cst_10 = arith.constant dense<0.000000e+00> : vector<4x16xf32>
    %23 = vector.multi_reduction <add>, %22, %cst_10 [2] : vector<4x16x16xf32> to vector<4x16xf32>
    %24 = vector.shape_cast %23 : vector<4x16xf32> to vector<4x16x1xf32>
    %25 = tpu.reciprocal %24 {approx = true} : vector<4x16x1xf32> -> vector<4x16x1xf32>
    %26 = vector.broadcast %25 : vector<4x16x1xf32> to vector<4x16x16xf32>
    %27 = arith.mulf %22, %26 : vector<4x16x16xf32>
    "tpu.trace_start"() <{level = 10 : i32, message = "bcd,bdh->bch"}> : () -> ()
    %cst_11 = arith.constant dense<0.000000e+00> : vector<4x16x128xf32>
    %28 = tpu.matmul %27, %12, %cst_11 {dimension_numbers = #tpu.dot_dimension_numbers<[2], [1], [1], [2], [0, 0, 0, 1, 1, 2], [0], [0]>} : vector<4x16x16xf32>, vector<4x16x128xf32>, vector<4x16x128xf32> -> vector<4x16x128xf32>
    "tpu.trace_stop"() : () -> ()
    %29 = vector.shape_cast %28 : vector<4x16x128xf32> to vector<64x128xf32>
    %c0_12 = arith.constant 0 : index
    %c0_13 = arith.constant 0 : index
    %30 = vector.load %arg4[%c0_12, %c0_13] : memref<128x32xf32, #tpu.memory_space<vmem>>, vector<128x32xf32>
    %cst_14 = arith.constant dense<0.000000e+00> : vector<64x32xf32>
    %31 = tpu.matmul %29, %30, %cst_14 {dimension_numbers = #tpu.dot_dimension_numbers<[1], [0], [0], [1], [0, 0, 1, 1], [], []>} : vector<64x128xf32>, vector<128x32xf32>, vector<64x32xf32> -> vector<64x32xf32>
    %c0_15 = arith.constant 0 : index
    %c0_16 = arith.constant 0 : index
    %32 = vector.load %arg5[%c0_15, %c0_16] : memref<1x32xf32, #tpu.memory_space<vmem>>, vector<1x32xf32>
    %33 = vector.broadcast %32 : vector<1x32xf32> to vector<64x32xf32>
    %34 = arith.addf %31, %33 : vector<64x32xf32>
    %35 = vector.shape_cast %34 : vector<64x32xf32> to vector<4x16x32xf32>
    %c0_17 = arith.constant 0 : index
    %c0_18 = arith.constant 0 : index
    %c0_19 = arith.constant 0 : index
    %36 = vector.load %arg7[%c0_17, %c0_18, %c0_19] : memref<4x16x32xf32, #tpu.memory_space<vmem>>, vector<4x16x32xf32>
    tpu.vector_store %arg7[%c0_17, %c0_18, %c0_19], %35 {strides = array<i32>} : memref<4x16x32xf32, #tpu.memory_space<vmem>>, vector<4x16x32xf32>,
    return
  }
  func.func @transform_0(%arg0: i32) -> (i32, i32, i32) {
    %c0_i32 = arith.constant 0 : i32
    %c0_i32_0 = arith.constant 0 : i32
    %c0_i32_1 = arith.constant 0 : i32
    return %arg0, %c0_i32, %c0_i32_0 : i32, i32, i32
  }
  func.func @transform_1(%arg0: i32) -> (i32, i32) {
    %c0_i32 = arith.constant 0 : i32
    %c0_i32_0 = arith.constant 0 : i32
    %c0_i32_1 = arith.constant 0 : i32
    return %c0_i32, %c0_i32_0 : i32, i32
  }
  func.func @transform_2(%arg0: i32) -> (i32, i32) {
    %c0_i32 = arith.constant 0 : i32
    %c0_i32_0 = arith.constant 0 : i32
    %c0_i32_1 = arith.constant 0 : i32
    return %c0_i32, %c0_i32_0 : i32, i32
  }
  func.func @transform_3(%arg0: i32) -> (i32, i32) {
    %c0_i32 = arith.constant 0 : i32
    %c0_i32_0 = arith.constant 0 : i32
    %c0_i32_1 = arith.constant 0 : i32
    return %c0_i32, %c0_i32_0 : i32, i32
  }
  func.func @transform_4(%arg0: i32) -> (i32, i32) {
    %c0_i32 = arith.constant 0 : i32
    %c0_i32_0 = arith.constant 0 : i32
    %c0_i32_1 = arith.constant 0 : i32
    return %c0_i32, %c0_i32_0 : i32, i32
  }
  func.func @transform_5(%arg0: i32) -> (i32, i32) {
    %c0_i32 = arith.constant 0 : i32
    %c0_i32_0 = arith.constant 0 : i32
    %c0_i32_1 = arith.constant 0 : i32
    return %c0_i32, %c0_i32_0 : i32, i32
  }
  func.func @transform_6(%arg0: i32) -> (i32, i32, i32) {
    %c0_i32 = arith.constant 0 : i32
    %c0_i32_0 = arith.constant 0 : i32
    %c0_i32_1 = arith.constant 0 : i32
    return %arg0, %c0_i32, %c0_i32_0 : i32, i32, i32
  }
}

module attributes {stable_mosaic.version = 11 : i64} {
  func.func @kernel(%arg0: i32, %arg1: memref<4x16x32xf32, #tpu.memory_space<vmem>>, %arg2: memref<32x384xf32, #tpu.memory_space<vmem>>, %arg3: memref<1x384xf32, #tpu.memory_space<vmem>>, %arg4: memref<128x32xf32, #tpu.memory_space<vmem>>, %arg5: memref<1x32xf32, #tpu.memory_space<vmem>>, %arg6: memref<16x16xf32, #tpu.memory_space<vmem>>, %arg7: memref<4x16x32xf32, #tpu.memory_space<vmem>>) attributes {dimension_semantics = [#tpu.dimension_semantics<parallel>], iteration_bounds = array<i64: 2>, scalar_prefetch = 0 : i64, scratch_operands = 0 : i64, tpu.core_type = #tpu.core_type<tc>, window_params = [{transform_indices = @transform_0, window_bounds = array<i64: 4, 16, 32>}, {pipeline_mode = #tpu.pipeline_mode<synchronous>, transform_indices = @transform_1, window_bounds = array<i64: 32, 384>}, {pipeline_mode = #tpu.pipeline_mode<synchronous>, transform_indices = @transform_2, window_bounds = array<i64: 1, 384>}, {pipeline_mode = #tpu.pipeline_mode<synchronous>, transform_indices = @transform_3, window_bounds = array<i64: 128, 32>}, {pipeline_mode = #tpu.pipeline_mode<synchronous>, transform_indices = @transform_4, window_bounds = array<i64: 1, 32>}, {pipeline_mode = #tpu.pipeline_mode<synchronous>, transform_indices = @transform_5, window_bounds = array<i64: 16, 16>}, {transform_indices = @transform_6, window_bounds = array<i64: 4, 16, 32>}]} {
    %c0 = arith.constant 0 : index
    %c0_0 = arith.constant 0 : index
    %c0_1 = arith.constant 0 : index
    %0 = vector.load %arg1[%c0, %c0_0, %c0_1] : memref<4x16x32xf32, #tpu.memory_space<vmem>>, vector<4x16x32xf32>
    %1 = vector.shape_cast %0 : vector<4x16x32xf32> to vector<64x32xf32>
    %c0_2 = arith.constant 0 : index
    %c0_3 = arith.constant 0 : index
    %2 = vector.load %arg2[%c0_2, %c0_3] : memref<32x384xf32, #tpu.memory_space<vmem>>, vector<32x384xf32>
    %cst = arith.constant dense<0.000000e+00> : vector<64x384xf32>
    %3 = tpu.matmul %1, %2, %cst {dimension_numbers = #tpu.dot_dimension_numbers<[1], [0], [0], [1], [0, 0, 1, 1], [], []>} : vector<64x32xf32>, vector<32x384xf32>, vector<64x384xf32> -> vector<64x384xf32>
    %c0_4 = arith.constant 0 : index
    %c0_5 = arith.constant 0 : index
    %4 = vector.load %arg3[%c0_4, %c0_5] : memref<1x384xf32, #tpu.memory_space<vmem>>, vector<1x384xf32>
    %5 = vector.broadcast %4 : vector<1x384xf32> to vector<64x384xf32>
    %6 = arith.addf %3, %5 : vector<64x384xf32>
    %7 = vector.extract_strided_slice %6 {offsets = [0, 0], sizes = [64, 128], strides = [1, 1]} : vector<64x384xf32> to vector<64x128xf32>
    %8 = vector.shape_cast %7 : vector<64x128xf32> to vector<4x16x128xf32>
    %9 = vector.extract_strided_slice %6 {offsets = [0, 128], sizes = [64, 128], strides = [1, 1]} : vector<64x384xf32> to vector<64x128xf32>
    %10 = vector.shape_cast %9 : vector<64x128xf32> to vector<4x16x128xf32>
    %11 = vector.extract_strided_slice %6 {offsets = [0, 256], sizes = [64, 128], strides = [1, 1]} : vector<64x384xf32> to vector<64x128xf32>
    %12 = vector.shape_cast %11 : vector<64x128xf32> to vector<4x16x128xf32>
    "tpu.trace_start"() <{level = 10 : i32, message = "bch,bdh->bcd"}> : () -> ()
    %cst_6 = arith.constant dense<0.000000e+00> : vector<4x16x16xf32>
    %13 = tpu.matmul %8, %10, %cst_6 {dimension_numbers = #tpu.dot_dimension_numbers<[2], [2], [1], [1], [0, 0, 0, 1, 1, 1], [0], [0]>} : vector<4x16x128xf32>, vector<4x16x128xf32>, vector<4x16x16xf32> -> vector<4x16x16xf32>
    "tpu.trace_stop"() : () -> ()
    %c0_7 = arith.constant 0 : index
    %c0_8 = arith.constant 0 : index
    %14 = vector.load %arg6[%c0_7, %c0_8] : memref<16x16xf32, #tpu.memory_space<vmem>>, vector<16x16xf32>
    %15 = vector.shape_cast %14 : vector<16x16xf32> to vector<1x16x16xf32>
    %16 = vector.broadcast %15 : vector<1x16x16xf32> to vector<4x16x16xf32>
    %17 = arith.mulf %13, %16 : vector<4x16x16xf32>
    %cst_9 = arith.constant dense<0xFF800000> : vector<4x16xf32>
    %18 = vector.multi_reduction <maximumf>, %17, %cst_9 [2] : vector<4x16x16xf32> to vector<4x16xf32>
    %19 = vector.shape_cast %18 : vector<4x16xf32> to vector<4x16x1xf32>
    %20 = vector.broadcast %19 : vector<4x16x1xf32> to vector<4x16x16xf32>
    %21 = arith.subf %17, %20 : vector<4x16x16xf32>
    %22 = math.exp %21 : vector<4x16x16xf32>
    %cst_10 = arith.constant dense<0.000000e+00> : vector<4x16xf32>
    %23 = vector.multi_reduction <add>, %22, %cst_10 [2] : vector<4x16x16xf32> to vector<4x16xf32>
    %24 = vector.shape_cast %23 : vector<4x16xf32> to vector<4x16x1xf32>
    %25 = tpu.reciprocal %24 {approx = true} : vector<4x16x1xf32> -> vector<4x16x1xf32>
    %26 = vector.broadcast %25 : vector<4x16x1xf32> to vector<4x16x16xf32>
    %27 = arith.mulf %22, %26 : vector<4x16x16xf32>
    "tpu.trace_start"() <{level = 10 : i32, message = "bcd,bdh->bch"}> : () -> ()
    %cst_11 = arith.constant dense<0.000000e+00> : vector<4x16x128xf32>
    %28 = tpu.matmul %27, %12, %cst_11 {dimension_numbers = #tpu.dot_dimension_numbers<[2], [1], [1], [2], [0, 0, 0, 1, 1, 2], [0], [0]>} : vector<4x16x16xf32>, vector<4x16x128xf32>, vector<4x16x128xf32> -> vector<4x16x128xf32>
    "tpu.trace_stop"() : () -> ()
    %29 = vector.shape_cast %28 : vector<4x16x128xf32> to vector<64x128xf32>
    %c0_12 = arith.constant 0 : index
    %c0_13 = arith.constant 0 : index
    %30 = vector.load %arg4[%c0_12, %c0_13] : memref<128x32xf32, #tpu.memory_space<vmem>>, vector<128x32xf32>
    %cst_14 = arith.constant dense<0.000000e+00> : vector<64x32xf32>
    %31 = tpu.matmul %29, %30, %cst_14 {dimension_numbers = #tpu.dot_dimension_numbers<[1], [0], [0], [1], [0, 0, 1, 1], [], []>} : vector<64x128xf32>, vector<128x32xf32>, vector<64x32xf32> -> vector<64x32xf32>
    %c0_15 = arith.constant 0 : index
    %c0_16 = arith.constant 0 : index
    %32 = vector.load %arg5[%c0_15, %c0_16] : memref<1x32xf32, #tpu.memory_space<vmem>>, vector<1x32xf32>
    %33 = vector.broadcast %32 : vector<1x32xf32> to vector<64x32xf32>
    %34 = arith.addf %31, %33 : vector<64x32xf32>
    %35 = vector.shape_cast %34 : vector<64x32xf32> to vector<4x16x32xf32>
    %c0_17 = arith.constant 0 : index
    %c0_18 = arith.constant 0 : index
    %c0_19 = arith.constant 0 : index
    %36 = vector.load %arg7[%c0_17, %c0_18, %c0_19] : memref<4x16x32xf32, #tpu.memory_space<vmem>>, vector<4x16x32xf32>
    tpu.vector_store %arg7[%c0_17, %c0_18, %c0_19], %35 {strides = array<i32>} : memref<4x16x32xf32, #tpu.memory_space<vmem>>, vector<4x16x32xf32>,
    return
  }
  func.func @transform_0(%arg0: i32) -> (i32, i32, i32) {
    %c0_i32 = arith.constant 0 : i32
    %c0_i32_0 = arith.constant 0 : i32
    %c0_i32_1 = arith.constant 0 : i32
    return %arg0, %c0_i32, %c0_i32_0 : i32, i32, i32
  }
  func.func @transform_1(%arg0: i32) -> (i32, i32) {
    %c0_i32 = arith.constant 0 : i32
    %c0_i32_0 = arith.constant 0 : i32
    %c0_i32_1 = arith.constant 0 : i32
    return %c0_i32, %c0_i32_0 : i32, i32
  }
  func.func @transform_2(%arg0: i32) -> (i32, i32) {
    %c0_i32 = arith.constant 0 : i32
    %c0_i32_0 = arith.constant 0 : i32
    %c0_i32_1 = arith.constant 0 : i32
    return %c0_i32, %c0_i32_0 : i32, i32
  }
  func.func @transform_3(%arg0: i32) -> (i32, i32) {
    %c0_i32 = arith.constant 0 : i32
    %c0_i32_0 = arith.constant 0 : i32
    %c0_i32_1 = arith.constant 0 : i32
    return %c0_i32, %c0_i32_0 : i32, i32
  }
  func.func @transform_4(%arg0: i32) -> (i32, i32) {
    %c0_i32 = arith.constant 0 : i32
    %c0_i32_0 = arith.constant 0 : i32
    %c0_i32_1 = arith.constant 0 : i32
    return %c0_i32, %c0_i32_0 : i32, i32
  }
  func.func @transform_5(%arg0: i32) -> (i32, i32) {
    %c0_i32 = arith.constant 0 : i32
    %c0_i32_0 = arith.constant 0 : i32
    %c0_i32_1 = arith.constant 0 : i32
    return %c0_i32, %c0_i32_0 : i32, i32
  }
  func.func @transform_6(%arg0: i32) -> (i32, i32, i32) {
    %c0_i32 = arith.constant 0 : i32
    %c0_i32_0 = arith.constant 0 : i32
    %c0_i32_1 = arith.constant 0 : i32
    return %arg0, %c0_i32, %c0_i32_0 : i32, i32, i32
  }
}

</mosaic_0001>

<llo_original>
// kernel: tpu_custom_call.1
$region0: #{tpu_custom_call.1}
  #allocation0 [shape = 'u32[]', space=smem, size = 0x4, offset = 0x4, fixed_abs, tag = 'smem constant byte address 0x4 - core index']
  #allocation1 [shape = 'u32[144,128]{1,0:T(1,128)}', space=vmem, size = 0x12000, scoped, tag = 'internal scratch']
  %s0 = inlined_call_operand.vmem [shape: f32[8,16,32], index: 0, kind: input, shape index: {}]
  %s1 = inlined_call_operand.hbm [shape: f32[32,384], index: 1, kind: input, shape index: {}]
  %s2 = inlined_call_operand.vmem [shape: f32[1,384], index: 2, kind: input, shape index: {}]
  %s3 = inlined_call_operand.vmem [shape: f32[128,32], index: 3, kind: input, shape index: {}]
  %s4 = inlined_call_operand.vmem [shape: f32[1,32], index: 4, kind: input, shape index: {}]
  %s5 = inlined_call_operand.vmem [shape: f32[16,16], index: 5, kind: input, shape index: {}]
  %s6 = inlined_call_operand.hbm [shape: f32[8,16,32], index: 6, kind: output, shape index: {}]
  %s7 = sld [smem:[#allocation0]]
  $region61: #{tpu_custom_call.1} parent=0
    _
  %s9 = ssub.s32 1, %s7
  %s10 = scalar_select 0, %s9, %s7
  $region1: #{tpu_custom_call.1} parent=0
    #allocation2 [shape = 'u8[49152]{0}', space=vmem, size = 0xc000, scoped, tag = 'input window, operand 1, single buffered']
    #allocation3 [shape = 's32[2]{0}', space=sflag, size = 0x8, scoped, tag = 'scoped memory for tpu_custom_call.1']
    #allocation4 [shape = 's32[2]{0}', space=sflag, size = 0x8, scoped, tag = 'scoped memory for tpu_custom_call.1']
    #allocation5 [shape = 'u8[65536]{0}', space=vmem, size = 0x10000, scoped, tag = 'output window, operand 0']
    %11 = vsyncpa [#allocation3], 0
    %12 = vsyncpa [#allocation4], 0
    %s13 = scalar_lea.sflag [#allocation4], 1
    %14 = vsyncpa %s13, 0
    loop: start=0, step=1, limit=4
    $region2: #{tpu_custom_call.1} parent=1 // loop_pre_header
      _
    $region3: #{tpu_custom_call.1} parent=1 // loop_header
      %s16 = sphi 0, %s20
      %p17 = scmp.ge.s32.totalorder %s16, 4
      %s26 = sphi 0, %s28
      %s29 = sphi 0, %s26
      %s30 = sphi 0, %s29
      %s46 = sphi 0, %s30
      %s50 = sphi 0, %s50
      %s52 = sphi 0, %s50
      %s53 = sphi 0, %s52
      %s67 = sphi 0, %s53
      %s71 = sphi 0, %s71
      %s73 = sphi 0, %s71
      %s74 = sphi 0, %s73
      %s88 = sphi 0, %s74
      %s92 = sphi 0, %s92
      %s94 = sphi 0, %s92
      %s95 = sphi 0, %s94
      %s109 = sphi 0, %s95
      %s113 = sphi 0, %s113
      %s115 = sphi 0, %s113
      %s116 = sphi 0, %s115
      %s130 = sphi 0, %s116
      %s134 = sphi 0, %s134
      %s136 = sphi 0, %s134
      %s137 = sphi 0, %s136
      %s151 = sphi 0, %s137
      %s157 = sphi 0, %s159
      %s160 = sphi 0, %s157
      %s161 = sphi 0, %s160
      %s177 = sphi 0, %s161
    $region4: #{tpu_custom_call.1} parent=1 // loop_header_branch
      %19 = sbr.rel (%p17) target = $region8
    $region5: #{tpu_custom_call.1} parent=1 // loop_body
      %s21 = ssub.s32 %s16, 1
      %s22 = ssub.s32 %s16, 2
      %s23 = sadd.s32 %s16, 1
      %s24 = ssub.s32 %s16, %s23
      %p25 = scmp.eq.s32.totalorder %s24, 0
      %s27 = sadd.s32 %s26, 1
      %s28 = scalar_select %p25, %s26, %s27
      %p31 = pneg %p25
      %p32 = scmp.eq.s32.totalorder %s16, 1
      %p33 = por %p31, %p32
      %p34 = scmp.ne.s32.totalorder %s26, %s29
      %p35 = scmp.eq.s32.totalorder %s16, 0
      %p36 = por %p34, %p35
      %p37 = scmp.ne.s32.totalorder %s26, %s29
      %p38 = scmp.eq.s32.totalorder %s21, 1
      %p39 = por %p37, %p38
      %p40 = scmp.ne.s32.totalorder %s29, %s30
      %p41 = scmp.eq.s32.totalorder %s21, 0
      %p42 = por %p40, %p41
      %p43 = scmp.ne.s32.totalorder %s29, %s30
      %p44 = scmp.eq.s32.totalorder %s22, 1
      %p45 = por %p43, %p44
      %p47 = scmp.ne.s32.totalorder %s30, %s46
      %p48 = scmp.eq.s32.totalorder %s22, 0
      %p49 = por %p47, %p48
      %s51 = sadd.s32 %s50, 1
      %p54 = scmp.eq.s32.totalorder %s16, 1
      %p55 = scmp.ne.s32.totalorder %s50, %s52
      %p56 = scmp.eq.s32.totalorder %s16, 0
      %p57 = por %p55, %p56
      %p58 = scmp.ne.s32.totalorder %s50, %s52
      %p59 = scmp.eq.s32.totalorder %s21, 1
      %p60 = por %p58, %p59
      %p61 = scmp.ne.s32.totalorder %s52, %s53
      %p62 = scmp.eq.s32.totalorder %s21, 0
      %p63 = por %p61, %p62
      %p64 = scmp.ne.s32.totalorder %s52, %s53
      %p65 = scmp.eq.s32.totalorder %s22, 1
      %p66 = por %p64, %p65
      %p68 = scmp.ne.s32.totalorder %s53, %s67
      %p69 = scmp.eq.s32.totalorder %s22, 0
      %p70 = por %p68, %p69
      %s72 = sadd.s32 %s71, 1
      %p75 = scmp.eq.s32.totalorder %s16, 1
      %p76 = scmp.ne.s32.totalorder %s71, %s73
      %p77 = scmp.eq.s32.totalorder %s16, 0
      %p78 = por %p76, %p77
      %p79 = scmp.ne.s32.totalorder %s71, %s73
      %p80 = scmp.eq.s32.totalorder %s21, 1
      %p81 = por %p79, %p80
      %p82 = scmp.ne.s32.totalorder %s73, %s74
      %p83 = scmp.eq.s32.totalorder %s21, 0
      %p84 = por %p82, %p83
      %p85 = scmp.ne.s32.totalorder %s73, %s74
      %p86 = scmp.eq.s32.totalorder %s22, 1
      %p87 = por %p85, %p86
      %p89 = scmp.ne.s32.totalorder %s74, %s88
      %p90 = scmp.eq.s32.totalorder %s22, 0
      %p91 = por %p89, %p90
      %s93 = sadd.s32 %s92, 1
      %p96 = scmp.eq.s32.totalorder %s16, 1
      %p97 = scmp.ne.s32.totalorder %s92, %s94
      %p98 = scmp.eq.s32.totalorder %s16, 0
      %p99 = por %p97, %p98
      %p100 = scmp.ne.s32.totalorder %s92, %s94
      %p101 = scmp.eq.s32.totalorder %s21, 1
      %p102 = por %p100, %p101
      %p103 = scmp.ne.s32.totalorder %s94, %s95
      %p104 = scmp.eq.s32.totalorder %s21, 0
      %p105 = por %p103, %p104
      %p106 = scmp.ne.s32.totalorder %s94, %s95
      %p107 = scmp.eq.s32.totalorder %s22, 1
      %p108 = por %p106, %p107
      %p110 = scmp.ne.s32.totalorder %s95, %s109
      %p111 = scmp.eq.s32.totalorder %s22, 0
      %p112 = por %p110, %p111
      %s114 = sadd.s32 %s113, 1
      %p117 = scmp.eq.s32.totalorder %s16, 1
      %p118 = scmp.ne.s32.totalorder %s113, %s115
      %p119 = scmp.eq.s32.totalorder %s16, 0
      %p120 = por %p118, %p119
      %p121 = scmp.ne.s32.totalorder %s113, %s115
      %p122 = scmp.eq.s32.totalorder %s21, 1
      %p123 = por %p121, %p122
      %p124 = scmp.ne.s32.totalorder %s115, %s116
      %p125 = scmp.eq.s32.totalorder %s21, 0
      %p126 = por %p124, %p125
      %p127 = scmp.ne.s32.totalorder %s115, %s116
      %p128 = scmp.eq.s32.totalorder %s22, 1
      %p129 = por %p127, %p128
      %p131 = scmp.ne.s32.totalorder %s116, %s130
      %p132 = scmp.eq.s32.totalorder %s22, 0
      %p133 = por %p131, %p132
      %s135 = sadd.s32 %s134, 1
      %p138 = scmp.eq.s32.totalorder %s16, 1
      %p139 = scmp.ne.s32.totalorder %s134, %s136
      %p140 = scmp.eq.s32.totalorder %s16, 0
      %p141 = por %p139, %p140
      %p142 = scmp.ne.s32.totalorder %s134, %s136
      %p143 = scmp.eq.s32.totalorder %s21, 1
      %p144 = por %p142, %p143
      %p145 = scmp.ne.s32.totalorder %s136, %s137
      %p146 = scmp.eq.s32.totalorder %s21, 0
      %p147 = por %p145, %p146
      %p148 = scmp.ne.s32.totalorder %s136, %s137
      %p149 = scmp.eq.s32.totalorder %s22, 1
      %p150 = por %p148, %p149
      %p152 = scmp.ne.s32.totalorder %s137, %s151
      %p153 = scmp.eq.s32.totalorder %s22, 0
      %p154 = por %p152, %p153
      %s155 = ssub.s32 %s16, %s23
      %p156 = scmp.eq.s32.totalorder %s155, 0
      %s158 = sadd.s32 %s157, 1
      %s159 = scalar_select %p156, %s157, %s158
      %p162 = pneg %p156
      %p163 = scmp.eq.s32.totalorder %s16, 1
      %p164 = por %p162, %p163
      %p165 = scmp.ne.s32.totalorder %s157, %s160
      %p166 = scmp.eq.s32.totalorder %s16, 0
      %p167 = por %p165, %p166
      %p168 = scmp.ne.s32.totalorder %s157, %s160
      %p169 = scmp.eq.s32.totalorder %s21, 1
      %p170 = por %p168, %p169
      %p171 = scmp.ne.s32.totalorder %s160, %s161
      %p172 = scmp.eq.s32.totalorder %s21, 0
      %p173 = por %p171, %p172
      %p174 = scmp.ne.s32.totalorder %s160, %s161
      %p175 = scmp.eq.s32.totalorder %s22, 1
      %p176 = por %p174, %p175
      %p178 = scmp.ne.s32.totalorder %s161, %s177
      %p179 = scmp.eq.s32.totalorder %s22, 0
      %p180 = por %p178, %p179
      %p181 = scmp.le.s32.totalorder 1, %s16
      %p182 = scmp.lt.s32.totalorder %s16, 3
      %p183 = pnand %p181, %p182
      %p184 = pneg %p183
      // Predicated region
      $region9: #{tpu_custom_call.1} parent=5 // pred_check
        _
      $region10: #{tpu_custom_call.1} parent=5 // pred_check_branch
        %186 = sbr.rel (%p183) target = $region12
      $region11: #{tpu_custom_call.1} parent=5 // pred_region
        %s187 = ssub.s32 %s16, 1
        // Predicated region
        $region13: #{tpu_custom_call.1} parent=11 // pred_check
          %p188 = pneg %p63
        $region14: #{tpu_custom_call.1} parent=11 // pred_check_branch
          %190 = sbr.rel (%p188) target = $region16
        $region15: #{tpu_custom_call.1} parent=11 // pred_region
          %s192 = ssub.s32 1536, 1536
          %193 = vsyncadd [#allocation3], %s192
          %s194 = sshll.u32 [#allocation2], 4
          %s195 = int_to_ptr.vmem [resolvable:$true] %s194
          %200 = dma.hbm_to_vmem [thread:$0]  %s1, 1536, %s195, [#allocation3], 384, 384, 24
        $region16: #{tpu_custom_call.1} parent=11 // pred_fallthru
          _
        // Predicated region
        $region17: #{tpu_custom_call.1} parent=11 // pred_check
          %p201 = pneg %p84
        $region18: #{tpu_custom_call.1} parent=11 // pred_check_branch
          %203 = sbr.rel (%p201) target = $region20
        $region19: #{tpu_custom_call.1} parent=11 // pred_region
          _
        $region20: #{tpu_custom_call.1} parent=11 // pred_fallthru
          _
        // Predicated region
        $region21: #{tpu_custom_call.1} parent=11 // pred_check
          %p204 = pneg %p105
        $region22: #{tpu_custom_call.1} parent=11 // pred_check_branch
          %206 = sbr.rel (%p204) target = $region24
        $region23: #{tpu_custom_call.1} parent=11 // pred_region
          _
        $region24: #{tpu_custom_call.1} parent=11 // pred_fallthru
          _
        // Predicated region
        $region25: #{tpu_custom_call.1} parent=11 // pred_check
          %p207 = pneg %p126
        $region26: #{tpu_custom_call.1} parent=11 // pred_check_branch
          %209 = sbr.rel (%p207) target = $region28
        $region27: #{tpu_custom_call.1} parent=11 // pred_region
          _
        $region28: #{tpu_custom_call.1} parent=11 // pred_fallthru
          _
        // Predicated region
        $region29: #{tpu_custom_call.1} parent=11 // pred_check
          %p210 = pneg %p147
        $region30: #{tpu_custom_call.1} parent=11 // pred_check_branch
          %212 = sbr.rel (%p210) target = $region32
        $region31: #{tpu_custom_call.1} parent=11 // pred_region
          _
        $region32: #{tpu_custom_call.1} parent=11 // pred_fallthru
          _
      $region12: #{tpu_custom_call.1} parent=5 // pred_fallthru
        _
      %p213 = scmp.lt.s32.totalorder %s16, 2
      // Predicated region
      $region33: #{tpu_custom_call.1} parent=5 // pred_check
        %p214 = pneg %p213
      $region34: #{tpu_custom_call.1} parent=5 // pred_check_branch
        %216 = sbr.rel (%p214) target = $region36
      $region35: #{tpu_custom_call.1} parent=5 // pred_region
        // Predicated region
        $region37: #{tpu_custom_call.1} parent=35 // pred_check
          %p217 = pneg %p36
        $region38: #{tpu_custom_call.1} parent=35 // pred_check_branch
          %219 = sbr.rel (%p217) target = $region40
        $region39: #{tpu_custom_call.1} parent=35 // pred_region
          %s220 = smul.u32 4, %s16
          %p221 = scmp.lt.s32.totalorder %s220, 7
          %s222 = scalar_select %p221, %s220, 7
          %s223 = smul.addr %s222, 2
          %s224 = smul.addr %s223, 8
          %s225 = scalar_lea.vmem %s0, %s224
          %s226 = smul.u32 4, %s16
        $region40: #{tpu_custom_call.1} parent=35 // pred_fallthru
          _
      $region36: #{tpu_custom_call.1} parent=5 // pred_fallthru
        _
      %p227 = scmp.le.s32.totalorder 1, %s16
      %p228 = scmp.lt.s32.totalorder %s16, 3
      %p229 = pnand %p227, %p228
      %p230 = pneg %p229
      // Predicated region
      $region41: #{tpu_custom_call.1} parent=5 // pred_check
        _
      $region42: #{tpu_custom_call.1} parent=5 // pred_check_branch
        %232 = sbr.rel (%p229) target = $region44
      $region43: #{tpu_custom_call.1} parent=5 // pred_region
        %s233 = ssub.s32 %s16, 1
        // Predicated region
        $region45: #{tpu_custom_call.1} parent=43 // pred_check
          %p234 = pneg %p63
        $region46: #{tpu_custom_call.1} parent=43 // pred_check_branch
          %236 = sbr.rel (%p234) target = $region48
        $region47: #{tpu_custom_call.1} parent=43 // pred_region
          %237 = dma.done [#allocation3], 1536
        $region48: #{tpu_custom_call.1} parent=43 // pred_fallthru
          _
        %s238 = smul.u32 4, %s21
        %p239 = scmp.lt.s32.totalorder %s238, 7
        %s240 = scalar_select %p239, %s238, 7
        %s241 = smul.addr %s240, 2
        %s242 = smul.addr %s241, 8
        %s243 = scalar_lea.vmem %s0, %s242
        %p244 = pneg %p42
        %p245 = pneg %p39
        %p246 = pneg %p63
        %p247 = pneg %p60
        %p248 = pneg %p84
        %p249 = pneg %p81
        %p250 = pneg %p105
        %p251 = pneg %p102
        %p252 = pneg %p126
        %p253 = pneg %p123
        %p254 = pneg %p147
        %p255 = pneg %p144
        %p256 = pneg %p173
        %p257 = pneg %p170
        %s258 = sand.u32 %s160, 1
        %s259 = scalar_lea.sflag [#allocation4], %s258
        %s260 = sand.u32 %s160, 1
        %s261 = smul.addr %s260, 64
        %s262 = scalar_lea.vmem [#allocation5], %s261
        %s263 = smul.u32 4, %s21
        %p264 = scmp.lt.s32.totalorder %s263, 7
        %s265 = scalar_select %p264, %s263, 7
        %s266 = smul.addr %s265, 2
        %s267 = smul.addr %s266, 8
        %s268 = scalar_lea.vmem %s0, %s267
        %s269 = smul.u32 4, %s21
        %s270 = smul.u32 4, %s21
        %v271 = vld [vmem:[%s268] sm:$0xff]
        %v272 = vld [vmem:[%s268 + $0x8] sm:$0xff]
        %v273 = vld [vmem:[%s268 + $0x10] sm:$0xff]
        %v274 = vld [vmem:[%s268 + $0x18] sm:$0xff]
        %v275 = vld [vmem:[%s268 + $0x20] sm:$0xff]
        %v276 = vld [vmem:[%s268 + $0x28] sm:$0xff]
        %v277 = vld [vmem:[%s268 + $0x30] sm:$0xff]
        %v278 = vld [vmem:[%s268 + $0x38] sm:$0xff]
        %v279 = vld [vmem:[#allocation2] sm:$0xff]
        %v280 = vld [vmem:[#allocation2 + $0x8] sm:$0xff]
        %v281 = vld [vmem:[#allocation2 + $0x10] sm:$0xff]
        %v282 = vld [vmem:[#allocation2 + $0x18] sm:$0xff]
        %v283 = vld [vmem:[#allocation2 + $0x20] sm:$0xff]
        %v284 = vld [vmem:[#allocation2 + $0x28] sm:$0xff]
        %v285 = vld [vmem:[#allocation2 + $0x30] sm:$0xff]
        %v286 = vld [vmem:[#allocation2 + $0x38] sm:$0xff]
        %v287 = vld [vmem:[#allocation2 + $0x40] sm:$0xff]
        %v288 = vld [vmem:[#allocation2 + $0x48] sm:$0xff]
        %v289 = vld [vmem:[#allocation2 + $0x50] sm:$0xff]
        %v290 = vld [vmem:[#allocation2 + $0x58] sm:$0xff]
        %v291 = vld [vmem:[%s2] sm:$0x7]
        %v293 = vlaneseq
        %v294 = vshrl.u32 %v293, 7
        %v295 = vsub.s32 0, %v294
        %v296 = vrot.slane %v291, %v295
        %v297 = vlaneseq
        %v298 = vshrl.u32 %v297, 7
        %v299 = vsub.s32 1, %v298
        %v300 = vrot.slane %v291, %v299
        %v301 = vlaneseq
        %v302 = vshrl.u32 %v301, 7
        %v303 = vsub.s32 2, %v302
        %v304 = vrot.slane %v291, %v303
        %vm308 = vcmask 261120
        %v310 = vsel %vm308, %v271, 0
        %v313 = vsel %vm308, %v272, 0
        %v316 = vsel %vm308, %v273, 0
        %v319 = vsel %vm308, %v274, 0
        %v322 = vsel %vm308, %v275, 0
        %v325 = vsel %vm308, %v276, 0
        %v328 = vsel %vm308, %v277, 0
        %v331 = vsel %vm308, %v278, 0
        %333 = vmatprep.subr.mxu0 %v280
        %334 = vmatpush1.msra.mxu0 %v279
        %335 = vmatprep.subr.mxu0 %v283
        %336 = vmatpush1.msra.mxu0 %v282
        %337 = vmatprep.subr.mxu0 %v286
        %338 = vmatpush1.msra.mxu0 %v285
        %339 = vmatprep.subr.mxu0 %v289
        %340 = vmatpush1.msra.mxu0 %v288
        %341 = vmatprep.subr.mxu0 0.0
        %342 = vmatpush1.msra.mxu0 0.0
        %343 = vmatprep.subr.mxu0 0.0
        %344 = vmatpush1.msra.mxu0 0.0
        %345 = vmatprep.subr.mxu0 0.0
        %346 = vmatpush1.msra.mxu0 0.0
        %347 = vmatprep.subr.mxu0 0.0
        %348 = vmatpush1.msra.mxu0 0.0
        %349 = vmatprep.subr.mxu0 0.0
        %350 = vmatpush1.msra.mxu0 0.0
        %351 = vmatprep.subr.mxu0 0.0
        %352 = vmatpush1.msra.mxu0 0.0
        %353 = vmatprep.subr.mxu0 0.0
        %354 = vmatpush1.msra.mxu0 0.0
        %355 = vmatprep.subr.mxu0 0.0
        %356 = vmatpush1.msra.mxu0 0.0
        %357 = vmatprep.subr.mxu0 0.0
        %358 = vmatpush1.msra.mxu0 0.0
        %359 = vmatprep.subr.mxu0 0.0
        %360 = vmatpush1.msra.mxu0 0.0
        %361 = vmatprep.subr.mxu0 0.0
        %362 = vmatpush1.msra.mxu0 0.0
        %363 = vmatprep.subr.mxu0 0.0
        %364 = vmatpush1.msra.mxu0 0.0
        %365 = vmatprep.subr.mxu0 0.0
        %366 = vmatpush1.msra.mxu0 0.0
        %367 = vmatprep.subr.mxu0 0.0
        %368 = vmatpush1.msra.mxu0 0.0
        %369 = vmatprep.subr.mxu0 0.0
        %370 = vmatpush1.msra.mxu0 0.0
        %371 = vmatprep.subr.mxu0 0.0
        %372 = vmatpush1.msra.mxu0 0.0
        %373 = vmatprep.subr.mxu0 0.0
        %374 = vmatpush1.msra.mxu0 0.0
        %375 = vmatprep.subr.mxu0 0.0
        %376 = vmatpush1.msra.mxu0 0.0
        %377 = vmatprep.subr.mxu0 0.0
        %378 = vmatpush1.msra.mxu0 0.0
        %379 = vmatprep.subr.mxu0 0.0
        %380 = vmatpush1.msra.mxu0 0.0
        %381 = vmatprep.subr.mxu0 0.0
        %382 = vmatpush1.msra.mxu0 0.0
        %383 = vmatprep.subr.mxu0 0.0
        %384 = vmatpush1.msra.mxu0 0.0
        %385 = vmatprep.subr.mxu0 0.0
        %386 = vmatpush1.msra.mxu0 0.0
        %387 = vmatprep.subr.mxu0 0.0
        %388 = vmatpush1.msra.mxu0 0.0
        %389 = vmatprep.subr.mxu0 0.0
        %390 = vmatpush1.msra.mxu0 0.0
        %391 = vmatprep.subr.mxu0 0.0
        %392 = vmatpush1.msra.mxu0 0.0
        %393 = vmatprep.subr.mxu0 0.0
        %394 = vmatpush1.msra.mxu0 0.0
        %395 = vmatprep.subr.mxu0 0.0
        %396 = vmatpush1.msra.mxu0 0.0
        %397 = vmatprep.mubr.f32.mxu0 0.0
        %398 = vmatmul.mubr.f32.gmra.mrb[0].mxu0 %v310
        %v399 = vpop.f32.mrb[0].mxu0
        %v400 = vadd.f32 %v296, %v399
        %v401 = vpop.f32.mrb[0].mxu0
        %v402 = vadd.f32 %v300, %v401
        %403 = vmatprep.mubr.f32.mxu0 0.0
        %404 = vmatmul.mubr.f32.gmra.mrb[0].mxu0 %v313
        %v405 = vpop.f32.mrb[0].mxu0
        %v406 = vadd.f32 %v296, %v405
        %v407 = vpop.f32.mrb[0].mxu0
        %v408 = vadd.f32 %v300, %v407
        %409 = vmatprep.mubr.f32.mxu0 0.0
        %410 = vmatmul.mubr.f32.gmra.mrb[0].mxu0 %v316
        %v411 = vpop.f32.mrb[0].mxu0
        %v412 = vadd.f32 %v296, %v411
        %v413 = vpop.f32.mrb[0].mxu0
        %v414 = vadd.f32 %v300, %v413
        %415 = vmatprep.mubr.f32.mxu0 0.0
        %416 = vmatmul.mubr.f32.gmra.mrb[0].mxu0 %v319
        %v417 = vpop.f32.mrb[0].mxu0
        %v418 = vadd.f32 %v296, %v417
        %v419 = vpop.f32.mrb[0].mxu0
        %v420 = vadd.f32 %v300, %v419
        %421 = vmatprep.mubr.f32.mxu0 0.0
        %422 = vmatmul.mubr.f32.gmra.mrb[0].mxu0 %v322
        %v423 = vpop.f32.mrb[0].mxu0
        %v424 = vadd.f32 %v296, %v423
        %v425 = vpop.f32.mrb[0].mxu0
        %v426 = vadd.f32 %v300, %v425
        %427 = vmatprep.mubr.f32.mxu0 0.0
        %428 = vmatmul.mubr.f32.gmra.mrb[0].mxu0 %v325
        %v429 = vpop.f32.mrb[0].mxu0
        %v430 = vadd.f32 %v296, %v429
        %v431 = vpop.f32.mrb[0].mxu0
        %v432 = vadd.f32 %v300, %v431
        %433 = vmatprep.mubr.f32.mxu0 0.0
        %434 = vmatmul.mubr.f32.gmra.mrb[0].mxu0 %v328
        %v435 = vpop.f32.mrb[0].mxu0
        %v436 = vadd.f32 %v296, %v435
        %v437 = vpop.f32.mrb[0].mxu0
        %v438 = vadd.f32 %v300, %v437
        %439 = vmatprep.mubr.f32.mxu0 0.0
        %440 = vmatmul.mubr.f32.gmra.mrb[0].mxu0 %v331
        %v441 = vpop.f32.mrb[0].mxu0
        %v442 = vadd.f32 %v296, %v441
        %v443 = vpop.f32.mrb[0].mxu0
        %v444 = vadd.f32 %v300, %v443
        %445 = vdwg.mxu0
        %446 = vmatprep.subr.mxu0 0.0
        %447 = vmatpush1.msra.mxu0 %v281
        %448 = vmatprep.subr.mxu0 0.0
        %449 = vmatpush1.msra.mxu0 %v284
        %450 = vmatprep.subr.mxu0 0.0
        %451 = vmatpush1.msra.mxu0 %v287
        %452 = vmatprep.subr.mxu0 0.0
        %453 = vmatpush1.msra.mxu0 %v290
        %454 = vmatprep.subr.mxu0 0.0
        %455 = vmatpush1.msra.mxu0 0.0
        %456 = vmatprep.subr.mxu0 0.0
        %457 = vmatpush1.msra.mxu0 0.0
        %458 = vmatprep.subr.mxu0 0.0
        %459 = vmatpush1.msra.mxu0 0.0
        %460 = vmatprep.subr.mxu0 0.0
        %461 = vmatpush1.msra.mxu0 0.0
        %462 = vmatprep.subr.mxu0 0.0
        %463 = vmatpush1.msra.mxu0 0.0
        %464 = vmatprep.subr.mxu0 0.0
        %465 = vmatpush1.msra.mxu0 0.0
        %466 = vmatprep.subr.mxu0 0.0
        %467 = vmatpush1.msra.mxu0 0.0
        %468 = vmatprep.subr.mxu0 0.0
        %469 = vmatpush1.msra.mxu0 0.0
        %470 = vmatprep.subr.mxu0 0.0
        %471 = vmatpush1.msra.mxu0 0.0
        %472 = vmatprep.subr.mxu0 0.0
        %473 = vmatpush1.msra.mxu0 0.0
        %474 = vmatprep.subr.mxu0 0.0
        %475 = vmatpush1.msra.mxu0 0.0
        %476 = vmatprep.subr.mxu0 0.0
        %477 = vmatpush1.msra.mxu0 0.0
        %478 = vmatprep.subr.mxu0 0.0
        %479 = vmatpush1.msra.mxu0 0.0
        %480 = vmatprep.subr.mxu0 0.0
        %481 = vmatpush1.msra.mxu0 0.0
        %482 = vmatprep.subr.mxu0 0.0
        %483 = vmatpush1.msra.mxu0 0.0
        %484 = vmatprep.subr.mxu0 0.0
        %485 = vmatpush1.msra.mxu0 0.0
        %486 = vmatprep.subr.mxu0 0.0
        %487 = vmatpush1.msra.mxu0 0.0
        %488 = vmatprep.subr.mxu0 0.0
        %489 = vmatpush1.msra.mxu0 0.0
        %490 = vmatprep.subr.mxu0 0.0
        %491 = vmatpush1.msra.mxu0 0.0
        %492 = vmatprep.subr.mxu0 0.0
        %493 = vmatpush1.msra.mxu0 0.0
        %494 = vmatprep.subr.mxu0 0.0
        %495 = vmatpush1.msra.mxu0 0.0
        %496 = vmatprep.subr.mxu0 0.0
        %497 = vmatpush1.msra.mxu0 0.0
        %498 = vmatprep.subr.mxu0 0.0
        %499 = vmatpush1.msra.mxu0 0.0
        %500 = vmatprep.subr.mxu0 0.0
        %501 = vmatpush1.msra.mxu0 0.0
        %502 = vmatprep.subr.mxu0 0.0
        %503 = vmatpush1.msra.mxu0 0.0
        %504 = vmatprep.subr.mxu0 0.0
        %505 = vmatpush1.msra.mxu0 0.0
        %506 = vmatprep.subr.mxu0 0.0
        %507 = vmatpush1.msra.mxu0 0.0
        %508 = vmatprep.subr.mxu0 0.0
        %509 = vmatpush1.msra.mxu0 0.0
        %510 = vmatprep.mubr.f32.mxu0 0.0
        %511 = vmatmul.mubr.f32.gmra.mrb[0].mxu0 %v310
        %v512 = vpop.f32.mrb[0].mxu0
        %v513 = vadd.f32 %v304, %v512
        %v514 = vpop.f32.mrb[0].mxu0
        %515 = vmatprep.mubr.f32.mxu0 0.0
        %516 = vmatmul.mubr.f32.gmra.mrb[0].mxu0 %v313
        %v517 = vpop.f32.mrb[0].mxu0
        %v518 = vadd.f32 %v304, %v517
        %v519 = vpop.f32.mrb[0].mxu0
        %520 = vmatprep.mubr.f32.mxu0 0.0
        %521 = vmatmul.mubr.f32.gmra.mrb[0].mxu0 %v316
        %v522 = vpop.f32.mrb[0].mxu0
        %v523 = vadd.f32 %v304, %v522
        %v524 = vpop.f32.mrb[0].mxu0
        %525 = vmatprep.mubr.f32.mxu0 0.0
        %526 = vmatmul.mubr.f32.gmra.mrb[0].mxu0 %v319
        %v527 = vpop.f32.mrb[0].mxu0
        %v528 = vadd.f32 %v304, %v527
        %v529 = vpop.f32.mrb[0].mxu0
        %530 = vmatprep.mubr.f32.mxu0 0.0
        %531 = vmatmul.mubr.f32.gmra.mrb[0].mxu0 %v322
        %v532 = vpop.f32.mrb[0].mxu0
        %v533 = vadd.f32 %v304, %v532
        %v534 = vpop.f32.mrb[0].mxu0
        %535 = vmatprep.mubr.f32.mxu0 0.0
        %536 = vmatmul.mubr.f32.gmra.mrb[0].mxu0 %v325
        %v537 = vpop.f32.mrb[0].mxu0
        %v538 = vadd.f32 %v304, %v537
        %v539 = vpop.f32.mrb[0].mxu0
        %540 = vmatprep.mubr.f32.mxu0 0.0
        %541 = vmatmul.mubr.f32.gmra.mrb[0].mxu0 %v328
        %v542 = vpop.f32.mrb[0].mxu0
        %v543 = vadd.f32 %v304, %v542
        %v544 = vpop.f32.mrb[0].mxu0
        %545 = vmatprep.mubr.f32.mxu0 0.0
        %546 = vmatmul.mubr.f32.gmra.mrb[0].mxu0 %v331
        %v547 = vpop.f32.mrb[0].mxu0
        %v548 = vadd.f32 %v304, %v547
        %v549 = vpop.f32.mrb[0].mxu0
        %550 = vdwg.mxu0
        %551 = vmatprep.subr.mxu0 0.0
        %552 = vmatpush1.xpose.msra.mxu0 %v402
        %553 = vmatprep.subr.mxu0 0.0
        %554 = vmatpush1.xpose.msra.mxu0 %v408
        %555 = vmatprep.subr.mxu0 0.0
        %556 = vmatpush1.xpose.msra.mxu0 0.0
        %557 = vmatprep.subr.mxu0 0.0
        %558 = vmatpush1.xpose.msra.mxu0 0.0
        %559 = vmatprep.subr.mxu0 0.0
        %560 = vmatpush1.xpose.msra.mxu0 0.0
        %561 = vmatprep.subr.mxu0 0.0
        %562 = vmatpush1.xpose.msra.mxu0 0.0
        %563 = vmatprep.subr.mxu0 0.0
        %564 = vmatpush1.xpose.msra.mxu0 0.0
        %565 = vmatprep.subr.mxu0 0.0
        %566 = vmatpush1.xpose.msra.mxu0 0.0
        %567 = vmatprep.subr.mxu0 0.0
        %568 = vmatpush1.xpose.msra.mxu0 0.0
        %569 = vmatprep.subr.mxu0 0.0
        %570 = vmatpush1.xpose.msra.mxu0 0.0
        %571 = vmatprep.subr.mxu0 0.0
        %572 = vmatpush1.xpose.msra.mxu0 0.0
        %573 = vmatprep.subr.mxu0 0.0
        %574 = vmatpush1.xpose.msra.mxu0 0.0
        %575 = vmatprep.subr.mxu0 0.0
        %576 = vmatpush1.xpose.msra.mxu0 0.0
        %577 = vmatprep.subr.mxu0 0.0
        %578 = vmatpush1.xpose.msra.mxu0 0.0
        %579 = vmatprep.subr.mxu0 0.0
        %580 = vmatpush1.xpose.msra.mxu0 0.0
        %581 = vmatprep.subr.mxu0 0.0
        %582 = vmatpush1.xpose.msra.mxu0 0.0
        %583 = vmatprep.subr.mxu0 0.0
        %584 = vmatpush1.xpose.msra.mxu0 0.0
        %585 = vmatprep.subr.mxu0 0.0
        %586 = vmatpush1.xpose.msra.mxu0 0.0
        %587 = vmatprep.subr.mxu0 0.0
        %588 = vmatpush1.xpose.msra.mxu0 0.0
        %589 = vmatprep.subr.mxu0 0.0
        %590 = vmatpush1.xpose.msra.mxu0 0.0
        %591 = vmatprep.subr.mxu0 0.0
        %592 = vmatpush1.xpose.msra.mxu0 0.0
        %593 = vmatprep.subr.mxu0 0.0
        %594 = vmatpush1.xpose.msra.mxu0 0.0
        %595 = vmatprep.subr.mxu0 0.0
        %596 = vmatpush1.xpose.msra.mxu0 0.0
        %597 = vmatprep.subr.mxu0 0.0
        %598 = vmatpush1.xpose.msra.mxu0 0.0
        %599 = vmatprep.subr.mxu0 0.0
        %600 = vmatpush1.xpose.msra.mxu0 0.0
        %601 = vmatprep.subr.mxu0 0.0
        %602 = vmatpush1.xpose.msra.mxu0 0.0
        %603 = vmatprep.subr.mxu0 0.0
        %604 = vmatpush1.xpose.msra.mxu0 0.0
        %605 = vmatprep.subr.mxu0 0.0
        %606 = vmatpush1.xpose.msra.mxu0 0.0
        %607 = vmatprep.subr.mxu0 0.0
        %608 = vmatpush1.xpose.msra.mxu0 0.0
        %609 = vmatprep.subr.mxu0 0.0
        %610 = vmatpush1.xpose.msra.mxu0 0.0
        %611 = vmatprep.subr.mxu0 0.0
        %612 = vmatpush1.xpose.msra.mxu0 0.0
        %613 = vmatprep.subr.mxu0 0.0
        %614 = vmatpush1.xpose.msra.mxu0 0.0
        %615 = vmatprep.mubr.f32.mxu0 0.0
        %616 = vmatmul.mubr.f32.gmra.mrb[0].mxu0 %v400
        %v617 = vpop.f32.mrb[0].mxu0
        %v618 = vadd.f32 0.0, %v617
        %v619 = vpop.f32.mrb[0].mxu0
        %620 = vmatprep.mubr.f32.mxu0 0.0
        %621 = vmatmul.mubr.f32.gmra.mrb[0].mxu0 %v406
        %v622 = vpop.f32.mrb[0].mxu0
        %v623 = vadd.f32 0.0, %v622
        %v624 = vpop.f32.mrb[0].mxu0
        %625 = vdwg.mxu0
        %626 = vmatprep.subr.mxu0 0.0
        %627 = vmatpush1.xpose.msra.mxu0 %v414
        %628 = vmatprep.subr.mxu0 0.0
        %629 = vmatpush1.xpose.msra.mxu0 %v420
        %630 = vmatprep.subr.mxu0 0.0
        %631 = vmatpush1.xpose.msra.mxu0 0.0
        %632 = vmatprep.subr.mxu0 0.0
        %633 = vmatpush1.xpose.msra.mxu0 0.0
        %634 = vmatprep.subr.mxu0 0.0
        %635 = vmatpush1.xpose.msra.mxu0 0.0
        %636 = vmatprep.subr.mxu0 0.0
        %637 = vmatpush1.xpose.msra.mxu0 0.0
        %638 = vmatprep.subr.mxu0 0.0
        %639 = vmatpush1.xpose.msra.mxu0 0.0
        %640 = vmatprep.subr.mxu0 0.0
        %641 = vmatpush1.xpose.msra.mxu0 0.0
        %642 = vmatprep.subr.mxu0 0.0
        %643 = vmatpush1.xpose.msra.mxu0 0.0
        %644 = vmatprep.subr.mxu0 0.0
        %645 = vmatpush1.xpose.msra.mxu0 0.0
        %646 = vmatprep.subr.mxu0 0.0
        %647 = vmatpush1.xpose.msra.mxu0 0.0
        %648 = vmatprep.subr.mxu0 0.0
        %649 = vmatpush1.xpose.msra.mxu0 0.0
        %650 = vmatprep.subr.mxu0 0.0
        %651 = vmatpush1.xpose.msra.mxu0 0.0
        %652 = vmatprep.subr.mxu0 0.0
        %653 = vmatpush1.xpose.msra.mxu0 0.0
        %654 = vmatprep.subr.mxu0 0.0
        %655 = vmatpush1.xpose.msra.mxu0 0.0
        %656 = vmatprep.subr.mxu0 0.0
        %657 = vmatpush1.xpose.msra.mxu0 0.0
        %658 = vmatprep.subr.mxu0 0.0
        %659 = vmatpush1.xpose.msra.mxu0 0.0
        %660 = vmatprep.subr.mxu0 0.0
        %661 = vmatpush1.xpose.msra.mxu0 0.0
        %662 = vmatprep.subr.mxu0 0.0
        %663 = vmatpush1.xpose.msra.mxu0 0.0
        %664 = vmatprep.subr.mxu0 0.0
        %665 = vmatpush1.xpose.msra.mxu0 0.0
        %666 = vmatprep.subr.mxu0 0.0
        %667 = vmatpush1.xpose.msra.mxu0 0.0
        %668 = vmatprep.subr.mxu0 0.0
        %669 = vmatpush1.xpose.msra.mxu0 0.0
        %670 = vmatprep.subr.mxu0 0.0
        %671 = vmatpush1.xpose.msra.mxu0 0.0
        %672 = vmatprep.subr.mxu0 0.0
        %673 = vmatpush1.xpose.msra.mxu0 0.0
        %674 = vmatprep.subr.mxu0 0.0
        %675 = vmatpush1.xpose.msra.mxu0 0.0
        %676 = vmatprep.subr.mxu0 0.0
        %677 = vmatpush1.xpose.msra.mxu0 0.0
        %678 = vmatprep.subr.mxu0 0.0
        %679 = vmatpush1.xpose.msra.mxu0 0.0
        %680 = vmatprep.subr.mxu0 0.0
        %681 = vmatpush1.xpose.msra.mxu0 0.0
        %682 = vmatprep.subr.mxu0 0.0
        %683 = vmatpush1.xpose.msra.mxu0 0.0
        %684 = vmatprep.subr.mxu0 0.0
        %685 = vmatpush1.xpose.msra.mxu0 0.0
        %686 = vmatprep.subr.mxu0 0.0
        %687 = vmatpush1.xpose.msra.mxu0 0.0
        %688 = vmatprep.subr.mxu0 0.0
        %689 = vmatpush1.xpose.msra.mxu0 0.0
        %690 = vmatprep.mubr.f32.mxu0 0.0
        %691 = vmatmul.mubr.f32.gmra.mrb[0].mxu0 %v412
        %v692 = vpop.f32.mrb[0].mxu0
        %v693 = vadd.f32 0.0, %v692
        %v694 = vpop.f32.mrb[0].mxu0
        %695 = vmatprep.mubr.f32.mxu0 0.0
        %696 = vmatmul.mubr.f32.gmra.mrb[0].mxu0 %v418
        %v697 = vpop.f32.mrb[0].mxu0
        %v698 = vadd.f32 0.0, %v697
        %v699 = vpop.f32.mrb[0].mxu0
        %700 = vdwg.mxu0
        %701 = vmatprep.subr.mxu0 0.0
        %702 = vmatpush1.xpose.msra.mxu0 %v426
        %703 = vmatprep.subr.mxu0 0.0
        %704 = vmatpush1.xpose.msra.mxu0 %v432
        %705 = vmatprep.subr.mxu0 0.0
        %706 = vmatpush1.xpose.msra.mxu0 0.0
        %707 = vmatprep.subr.mxu0 0.0
        %708 = vmatpush1.xpose.msra.mxu0 0.0
        %709 = vmatprep.subr.mxu0 0.0
        %710 = vmatpush1.xpose.msra.mxu0 0.0
        %711 = vmatprep.subr.mxu0 0.0
        %712 = vmatpush1.xpose.msra.mxu0 0.0
        %713 = vmatprep.subr.mxu0 0.0
        %714 = vmatpush1.xpose.msra.mxu0 0.0
        %715 = vmatprep.subr.mxu0 0.0
        %716 = vmatpush1.xpose.msra.mxu0 0.0
        %717 = vmatprep.subr.mxu0 0.0
        %718 = vmatpush1.xpose.msra.mxu0 0.0
        %719 = vmatprep.subr.mxu0 0.0
        %720 = vmatpush1.xpose.msra.mxu0 0.0
        %721 = vmatprep.subr.mxu0 0.0
        %722 = vmatpush1.xpose.msra.mxu0 0.0
        %723 = vmatprep.subr.mxu0 0.0
        %724 = vmatpush1.xpose.msra.mxu0 0.0
        %725 = vmatprep.subr.mxu0 0.0
        %726 = vmatpush1.xpose.msra.mxu0 0.0
        %727 = vmatprep.subr.mxu0 0.0
        %728 = vmatpush1.xpose.msra.mxu0 0.0
        %729 = vmatprep.subr.mxu0 0.0
        %730 = vmatpush1.xpose.msra.mxu0 0.0
        %731 = vmatprep.subr.mxu0 0.0
        %732 = vmatpush1.xpose.msra.mxu0 0.0
        %733 = vmatprep.subr.mxu0 0.0
        %734 = vmatpush1.xpose.msra.mxu0 0.0
        %735 = vmatprep.subr.mxu0 0.0
        %736 = vmatpush1.xpose.msra.mxu0 0.0
        %737 = vmatprep.subr.mxu0 0.0
        %738 = vmatpush1.xpose.msra.mxu0 0.0
        %739 = vmatprep.subr.mxu0 0.0
        %740 = vmatpush1.xpose.msra.mxu0 0.0
        %741 = vmatprep.subr.mxu0 0.0
        %742 = vmatpush1.xpose.msra.mxu0 0.0
        %743 = vmatprep.subr.mxu0 0.0
        %744 = vmatpush1.xpose.msra.mxu0 0.0
        %745 = vmatprep.subr.mxu0 0.0
        %746 = vmatpush1.xpose.msra.mxu0 0.0
        %747 = vmatprep.subr.mxu0 0.0
        %748 = vmatpush1.xpose.msra.mxu0 0.0
        %749 = vmatprep.subr.mxu0 0.0
        %750 = vmatpush1.xpose.msra.mxu0 0.0
        %751 = vmatprep.subr.mxu0 0.0
        %752 = vmatpush1.xpose.msra.mxu0 0.0
        %753 = vmatprep.subr.mxu0 0.0
        %754 = vmatpush1.xpose.msra.mxu0 0.0
        %755 = vmatprep.subr.mxu0 0.0
        %756 = vmatpush1.xpose.msra.mxu0 0.0
        %757 = vmatprep.subr.mxu0 0.0
        %758 = vmatpush1.xpose.msra.mxu0 0.0
        %759 = vmatprep.subr.mxu0 0.0
        %760 = vmatpush1.xpose.msra.mxu0 0.0
        %761 = vmatprep.subr.mxu0 0.0
        %762 = vmatpush1.xpose.msra.mxu0 0.0
        %763 = vmatprep.subr.mxu0 0.0
        %764 = vmatpush1.xpose.msra.mxu0 0.0
        %765 = vmatprep.mubr.f32.mxu0 0.0
        %766 = vmatmul.mubr.f32.gmra.mrb[0].mxu0 %v424
        %v767 = vpop.f32.mrb[0].mxu0
        %v768 = vadd.f32 0.0, %v767
        %v769 = vpop.f32.mrb[0].mxu0
        %770 = vmatprep.mubr.f32.mxu0 0.0
        %771 = vmatmul.mubr.f32.gmra.mrb[0].mxu0 %v430
        %v772 = vpop.f32.mrb[0].mxu0
        %v773 = vadd.f32 0.0, %v772
        %v774 = vpop.f32.mrb[0].mxu0
        %775 = vdwg.mxu0
        %776 = vmatprep.subr.mxu0 0.0
        %777 = vmatpush1.xpose.msra.mxu0 %v438
        %778 = vmatprep.subr.mxu0 0.0
        %779 = vmatpush1.xpose.msra.mxu0 %v444
        %780 = vmatprep.subr.mxu0 0.0
        %781 = vmatpush1.xpose.msra.mxu0 0.0
        %782 = vmatprep.subr.mxu0 0.0
        %783 = vmatpush1.xpose.msra.mxu0 0.0
        %784 = vmatprep.subr.mxu0 0.0
        %785 = vmatpush1.xpose.msra.mxu0 0.0
        %786 = vmatprep.subr.mxu0 0.0
        %787 = vmatpush1.xpose.msra.mxu0 0.0
        %788 = vmatprep.subr.mxu0 0.0
        %789 = vmatpush1.xpose.msra.mxu0 0.0
        %790 = vmatprep.subr.mxu0 0.0
        %791 = vmatpush1.xpose.msra.mxu0 0.0
        %792 = vmatprep.subr.mxu0 0.0
        %793 = vmatpush1.xpose.msra.mxu0 0.0
        %794 = vmatprep.subr.mxu0 0.0
        %795 = vmatpush1.xpose.msra.mxu0 0.0
        %796 = vmatprep.subr.mxu0 0.0
        %797 = vmatpush1.xpose.msra.mxu0 0.0
        %798 = vmatprep.subr.mxu0 0.0
        %799 = vmatpush1.xpose.msra.mxu0 0.0
        %800 = vmatprep.subr.mxu0 0.0
        %801 = vmatpush1.xpose.msra.mxu0 0.0
        %802 = vmatprep.subr.mxu0 0.0
        %803 = vmatpush1.xpose.msra.mxu0 0.0
        %804 = vmatprep.subr.mxu0 0.0
        %805 = vmatpush1.xpose.msra.mxu0 0.0
        %806 = vmatprep.subr.mxu0 0.0
        %807 = vmatpush1.xpose.msra.mxu0 0.0
        %808 = vmatprep.subr.mxu0 0.0
        %809 = vmatpush1.xpose.msra.mxu0 0.0
        %810 = vmatprep.subr.mxu0 0.0
        %811 = vmatpush1.xpose.msra.mxu0 0.0
        %812 = vmatprep.subr.mxu0 0.0
        %813 = vmatpush1.xpose.msra.mxu0 0.0
        %814 = vmatprep.subr.mxu0 0.0
        %815 = vmatpush1.xpose.msra.mxu0 0.0
        %816 = vmatprep.subr.mxu0 0.0
        %817 = vmatpush1.xpose.msra.mxu0 0.0
        %818 = vmatprep.subr.mxu0 0.0
        %819 = vmatpush1.xpose.msra.mxu0 0.0
        %820 = vmatprep.subr.mxu0 0.0
        %821 = vmatpush1.xpose.msra.mxu0 0.0
        %822 = vmatprep.subr.mxu0 0.0
        %823 = vmatpush1.xpose.msra.mxu0 0.0
        %824 = vmatprep.subr.mxu0 0.0
        %825 = vmatpush1.xpose.msra.mxu0 0.0
        %826 = vmatprep.subr.mxu0 0.0
        %827 = vmatpush1.xpose.msra.mxu0 0.0
        %828 = vmatprep.subr.mxu0 0.0
        %829 = vmatpush1.xpose.msra.mxu0 0.0
        %830 = vmatprep.subr.mxu0 0.0
        %831 = vmatpush1.xpose.msra.mxu0 0.0
        %832 = vmatprep.subr.mxu0 0.0
        %833 = vmatpush1.xpose.msra.mxu0 0.0
        %834 = vmatprep.subr.mxu0 0.0
        %835 = vmatpush1.xpose.msra.mxu0 0.0
        %836 = vmatprep.subr.mxu0 0.0
        %837 = vmatpush1.xpose.msra.mxu0 0.0
        %838 = vmatprep.subr.mxu0 0.0
        %839 = vmatpush1.xpose.msra.mxu0 0.0
        %840 = vmatprep.mubr.f32.mxu0 0.0
        %841 = vmatmul.mubr.f32.gmra.mrb[0].mxu0 %v436
        %v842 = vpop.f32.mrb[0].mxu0
        %v843 = vadd.f32 0.0, %v842
        %v844 = vpop.f32.mrb[0].mxu0
        %845 = vmatprep.mubr.f32.mxu0 0.0
        %846 = vmatmul.mubr.f32.gmra.mrb[0].mxu0 %v442
        %v847 = vpop.f32.mrb[0].mxu0
        %v848 = vadd.f32 0.0, %v847
        %v849 = vpop.f32.mrb[0].mxu0
        %850 = vdwg.mxu0
        %v851 = vld [vmem:[%s5] sm:$0xff]
        %v852 = vld [vmem:[%s5 + $0x8] sm:$0xff]
        %v853 = vmul.f32 %v618, %v851
        %v854 = vmul.f32 %v623, %v852
        %v855 = vmul.f32 %v693, %v851
        %v856 = vmul.f32 %v698, %v852
        %v857 = vmul.f32 %v768, %v851
        %v858 = vmul.f32 %v773, %v852
        %v859 = vmul.f32 %v843, %v851
        %v860 = vmul.f32 %v848, %v852
        %vm861 = vcmask 130048
        %v862 = vsel %vm861, %v853, -inf
        %863 = vmax.xlane.f32.xlu0 %v862
        %v864 = vpop.xlane.xlu0 %863
        %v865 = vsel %vm861, %v854, -inf
        %866 = vmax.xlane.f32.xlu0 %v865
        %v867 = vpop.xlane.xlu0 %866
        %v868 = vsel %vm861, %v855, -inf
        %869 = vmax.xlane.f32.xlu0 %v868
        %v870 = vpop.xlane.xlu0 %869
        %v871 = vsel %vm861, %v856, -inf
        %872 = vmax.xlane.f32.xlu0 %v871
        %v873 = vpop.xlane.xlu0 %872
        %v874 = vsel %vm861, %v857, -inf
        %875 = vmax.xlane.f32.xlu0 %v874
        %v876 = vpop.xlane.xlu0 %875
        %v877 = vsel %vm861, %v858, -inf
        %878 = vmax.xlane.f32.xlu0 %v877
        %v879 = vpop.xlane.xlu0 %878
        %v880 = vsel %vm861, %v859, -inf
        %881 = vmax.xlane.f32.xlu0 %v880
        %v882 = vpop.xlane.xlu0 %881
        %v883 = vsel %vm861, %v860, -inf
        %884 = vmax.xlane.f32.xlu0 %v883
        %v885 = vpop.xlane.xlu0 %884
        %v886 = vsub.f32 %v853, %v864
        %v887 = vsub.f32 %v854, %v867
        %v888 = vsub.f32 %v855, %v870
        %v889 = vsub.f32 %v856, %v873
        %v890 = vsub.f32 %v857, %v876
        %v891 = vsub.f32 %v858, %v879
        %v892 = vsub.f32 %v859, %v882
        %v893 = vsub.f32 %v860, %v885
        %v894 = vmul.f32 %v886, 1.442695
        %v895 = vpow.pop %v894
        %v896 = vmul.f32 %v887, 1.442695
        %v897 = vpow.pop %v896
        %v898 = vmul.f32 %v888, 1.442695
        %v899 = vpow.pop %v898
        %v900 = vmul.f32 %v889, 1.442695
        %v901 = vpow.pop %v900
        %v902 = vmul.f32 %v890, 1.442695
        %v903 = vpow.pop %v902
        %v904 = vmul.f32 %v891, 1.442695
        %v905 = vpow.pop %v904
        %v906 = vmul.f32 %v892, 1.442695
        %v907 = vpow.pop %v906
        %v908 = vmul.f32 %v893, 1.442695
        %v909 = vpow.pop %v908
        %v910 = vsel %vm861, %v895, 0.0
        %911 = vadd.xlane.f32.xlu0 %v910
        %v912 = vpop.xlane.xlu0 %911
        %v913 = vsel %vm861, %v897, 0.0
        %914 = vadd.xlane.f32.xlu0 %v913
        %v915 = vpop.xlane.xlu0 %914
        %v916 = vsel %vm861, %v899, 0.0
        %917 = vadd.xlane.f32.xlu0 %v916
        %v918 = vpop.xlane.xlu0 %917
        %v919 = vsel %vm861, %v901, 0.0
        %920 = vadd.xlane.f32.xlu0 %v919
        %v921 = vpop.xlane.xlu0 %920
        %v922 = vsel %vm861, %v903, 0.0
        %923 = vadd.xlane.f32.xlu0 %v922
        %v924 = vpop.xlane.xlu0 %923
        %v925 = vsel %vm861, %v905, 0.0
        %926 = vadd.xlane.f32.xlu0 %v925
        %v927 = vpop.xlane.xlu0 %926
        %v928 = vsel %vm861, %v907, 0.0
        %929 = vadd.xlane.f32.xlu0 %v928
        %v930 = vpop.xlane.xlu0 %929
        %v931 = vsel %vm861, %v909, 0.0
        %932 = vadd.xlane.f32.xlu0 %v931
        %v933 = vpop.xlane.xlu0 %932
        %v934 = vrcp.pop %v912
        %v935 = vrcp.pop %v915
        %v936 = vrcp.pop %v918
        %v937 = vrcp.pop %v921
        %v938 = vrcp.pop %v924
        %v939 = vrcp.pop %v927
        %v940 = vrcp.pop %v930
        %v941 = vrcp.pop %v933
        %v942 = vmul.f32 %v895, %v934
        %v943 = vmul.f32 %v897, %v935
        %v944 = vmul.f32 %v899, %v936
        %v945 = vmul.f32 %v901, %v937
        %v946 = vmul.f32 %v903, %v938
        %v947 = vmul.f32 %v905, %v939
        %v948 = vmul.f32 %v907, %v940
        %v949 = vmul.f32 %v909, %v941
        %v951 = vsel %vm861, %v942, 0
        %v954 = vsel %vm861, %v943, 0
        %956 = vmatprep.subr.mxu0 0.0
        %957 = vmatpush1.msra.mxu0 %v513
        %958 = vmatprep.subr.mxu0 0.0
        %959 = vmatpush1.msra.mxu0 %v518
        %960 = vmatprep.subr.mxu0 0.0
        %961 = vmatpush1.msra.mxu0 0.0
        %962 = vmatprep.subr.mxu0 0.0
        %963 = vmatpush1.msra.mxu0 0.0
        %964 = vmatprep.subr.mxu0 0.0
        %965 = vmatpush1.msra.mxu0 0.0
        %966 = vmatprep.subr.mxu0 0.0
        %967 = vmatpush1.msra.mxu0 0.0
        %968 = vmatprep.subr.mxu0 0.0
        %969 = vmatpush1.msra.mxu0 0.0
        %970 = vmatprep.subr.mxu0 0.0
        %971 = vmatpush1.msra.mxu0 0.0
        %972 = vmatprep.subr.mxu0 0.0
        %973 = vmatpush1.msra.mxu0 0.0
        %974 = vmatprep.subr.mxu0 0.0
        %975 = vmatpush1.msra.mxu0 0.0
        %976 = vmatprep.subr.mxu0 0.0
        %977 = vmatpush1.msra.mxu0 0.0
        %978 = vmatprep.subr.mxu0 0.0
        %979 = vmatpush1.msra.mxu0 0.0
        %980 = vmatprep.subr.mxu0 0.0
        %981 = vmatpush1.msra.mxu0 0.0
        %982 = vmatprep.subr.mxu0 0.0
        %983 = vmatpush1.msra.mxu0 0.0
        %984 = vmatprep.subr.mxu0 0.0
        %985 = vmatpush1.msra.mxu0 0.0
        %986 = vmatprep.subr.mxu0 0.0
        %987 = vmatpush1.msra.mxu0 0.0
        %988 = vmatprep.subr.mxu0 0.0
        %989 = vmatpush1.msra.mxu0 0.0
        %990 = vmatprep.subr.mxu0 0.0
        %991 = vmatpush1.msra.mxu0 0.0
        %992 = vmatprep.subr.mxu0 0.0
        %993 = vmatpush1.msra.mxu0 0.0
        %994 = vmatprep.subr.mxu0 0.0
        %995 = vmatpush1.msra.mxu0 0.0
        %996 = vmatprep.subr.mxu0 0.0
        %997 = vmatpush1.msra.mxu0 0.0
        %998 = vmatprep.subr.mxu0 0.0
        %999 = vmatpush1.msra.mxu0 0.0
        %1000 = vmatprep.subr.mxu0 0.0
        %1001 = vmatpush1.msra.mxu0 0.0
        %1002 = vmatprep.subr.mxu0 0.0
        %1003 = vmatpush1.msra.mxu0 0.0
        %1004 = vmatprep.subr.mxu0 0.0
        %1005 = vmatpush1.msra.mxu0 0.0
        %1006 = vmatprep.subr.mxu0 0.0
        %1007 = vmatpush1.msra.mxu0 0.0
        %1008 = vmatprep.subr.mxu0 0.0
        %1009 = vmatpush1.msra.mxu0 0.0
        %1010 = vmatprep.subr.mxu0 0.0
        %1011 = vmatpush1.msra.mxu0 0.0
        %1012 = vmatprep.subr.mxu0 0.0
        %1013 = vmatpush1.msra.mxu0 0.0
        %1014 = vmatprep.subr.mxu0 0.0
        %1015 = vmatpush1.msra.mxu0 0.0
        %1016 = vmatprep.subr.mxu0 0.0
        %1017 = vmatpush1.msra.mxu0 0.0
        %1018 = vmatprep.subr.mxu0 0.0
        %1019 = vmatpush1.msra.mxu0 0.0
        %1020 = vmatprep.mubr.f32.mxu0 0.0
        %1021 = vmatmul.mubr.f32.gmra.mrb[0].mxu0 %v951
        %v1022 = vpop.f32.mrb[0].mxu0
        %v1023 = vadd.f32 0.0, %v1022
        %v1024 = vpop.f32.mrb[0].mxu0
        %1025 = vmatprep.mubr.f32.mxu0 0.0
        %1026 = vmatmul.mubr.f32.gmra.mrb[0].mxu0 %v954
        %v1027 = vpop.f32.mrb[0].mxu0
        %v1028 = vadd.f32 0.0, %v1027
        %v1029 = vpop.f32.mrb[0].mxu0
        %1030 = vdwg.mxu0
        %v1032 = vsel %vm861, %v944, 0
        %v1035 = vsel %vm861, %v945, 0
        %1037 = vmatprep.subr.mxu0 0.0
        %1038 = vmatpush1.msra.mxu0 %v523
        %1039 = vmatprep.subr.mxu0 0.0
        %1040 = vmatpush1.msra.mxu0 %v528
        %1041 = vmatprep.subr.mxu0 0.0
        %1042 = vmatpush1.msra.mxu0 0.0
        %1043 = vmatprep.subr.mxu0 0.0
        %1044 = vmatpush1.msra.mxu0 0.0
        %1045 = vmatprep.subr.mxu0 0.0
        %1046 = vmatpush1.msra.mxu0 0.0
        %1047 = vmatprep.subr.mxu0 0.0
        %1048 = vmatpush1.msra.mxu0 0.0
        %1049 = vmatprep.subr.mxu0 0.0
        %1050 = vmatpush1.msra.mxu0 0.0
        %1051 = vmatprep.subr.mxu0 0.0
        %1052 = vmatpush1.msra.mxu0 0.0
        %1053 = vmatprep.subr.mxu0 0.0
        %1054 = vmatpush1.msra.mxu0 0.0
        %1055 = vmatprep.subr.mxu0 0.0
        %1056 = vmatpush1.msra.mxu0 0.0
        %1057 = vmatprep.subr.mxu0 0.0
        %1058 = vmatpush1.msra.mxu0 0.0
        %1059 = vmatprep.subr.mxu0 0.0
        %1060 = vmatpush1.msra.mxu0 0.0
        %1061 = vmatprep.subr.mxu0 0.0
        %1062 = vmatpush1.msra.mxu0 0.0
        %1063 = vmatprep.subr.mxu0 0.0
        %1064 = vmatpush1.msra.mxu0 0.0
        %1065 = vmatprep.subr.mxu0 0.0
        %1066 = vmatpush1.msra.mxu0 0.0
        %1067 = vmatprep.subr.mxu0 0.0
        %1068 = vmatpush1.msra.mxu0 0.0
        %1069 = vmatprep.subr.mxu0 0.0
        %1070 = vmatpush1.msra.mxu0 0.0
        %1071 = vmatprep.subr.mxu0 0.0
        %1072 = vmatpush1.msra.mxu0 0.0
        %1073 = vmatprep.subr.mxu0 0.0
        %1074 = vmatpush1.msra.mxu0 0.0
        %1075 = vmatprep.subr.mxu0 0.0
        %1076 = vmatpush1.msra.mxu0 0.0
        %1077 = vmatprep.subr.mxu0 0.0
        %1078 = vmatpush1.msra.mxu0 0.0
        %1079 = vmatprep.subr.mxu0 0.0
        %1080 = vmatpush1.msra.mxu0 0.0
        %1081 = vmatprep.subr.mxu0 0.0
        %1082 = vmatpush1.msra.mxu0 0.0
        %1083 = vmatprep.subr.mxu0 0.0
        %1084 = vmatpush1.msra.mxu0 0.0
        %1085 = vmatprep.subr.mxu0 0.0
        %1086 = vmatpush1.msra.mxu0 0.0
        %1087 = vmatprep.subr.mxu0 0.0
        %1088 = vmatpush1.msra.mxu0 0.0
        %1089 = vmatprep.subr.mxu0 0.0
        %1090 = vmatpush1.msra.mxu0 0.0
        %1091 = vmatprep.subr.mxu0 0.0
        %1092 = vmatpush1.msra.mxu0 0.0
        %1093 = vmatprep.subr.mxu0 0.0
        %1094 = vmatpush1.msra.mxu0 0.0
        %1095 = vmatprep.subr.mxu0 0.0
        %1096 = vmatpush1.msra.mxu0 0.0
        %1097 = vmatprep.subr.mxu0 0.0
        %1098 = vmatpush1.msra.mxu0 0.0
        %1099 = vmatprep.subr.mxu0 0.0
        %1100 = vmatpush1.msra.mxu0 0.0
        %1101 = vmatprep.mubr.f32.mxu0 0.0
        %1102 = vmatmul.mubr.f32.gmra.mrb[0].mxu0 %v1032
        %v1103 = vpop.f32.mrb[0].mxu0
        %v1104 = vadd.f32 0.0, %v1103
        %v1105 = vpop.f32.mrb[0].mxu0
        %1106 = vmatprep.mubr.f32.mxu0 0.0
        %1107 = vmatmul.mubr.f32.gmra.mrb[0].mxu0 %v1035
        %v1108 = vpop.f32.mrb[0].mxu0
        %v1109 = vadd.f32 0.0, %v1108
        %v1110 = vpop.f32.mrb[0].mxu0
        %1111 = vdwg.mxu0
        %v1113 = vsel %vm861, %v946, 0
        %v1116 = vsel %vm861, %v947, 0
        %1118 = vmatprep.subr.mxu0 0.0
        %1119 = vmatpush1.msra.mxu0 %v533
        %1120 = vmatprep.subr.mxu0 0.0
        %1121 = vmatpush1.msra.mxu0 %v538
        %1122 = vmatprep.subr.mxu0 0.0
        %1123 = vmatpush1.msra.mxu0 0.0
        %1124 = vmatprep.subr.mxu0 0.0
        %1125 = vmatpush1.msra.mxu0 0.0
        %1126 = vmatprep.subr.mxu0 0.0
        %1127 = vmatpush1.msra.mxu0 0.0
        %1128 = vmatprep.subr.mxu0 0.0
        %1129 = vmatpush1.msra.mxu0 0.0
        %1130 = vmatprep.subr.mxu0 0.0
        %1131 = vmatpush1.msra.mxu0 0.0
        %1132 = vmatprep.subr.mxu0 0.0
        %1133 = vmatpush1.msra.mxu0 0.0
        %1134 = vmatprep.subr.mxu0 0.0
        %1135 = vmatpush1.msra.mxu0 0.0
        %1136 = vmatprep.subr.mxu0 0.0
        %1137 = vmatpush1.msra.mxu0 0.0
        %1138 = vmatprep.subr.mxu0 0.0
        %1139 = vmatpush1.msra.mxu0 0.0
        %1140 = vmatprep.subr.mxu0 0.0
        %1141 = vmatpush1.msra.mxu0 0.0
        %1142 = vmatprep.subr.mxu0 0.0
        %1143 = vmatpush1.msra.mxu0 0.0
        %1144 = vmatprep.subr.mxu0 0.0
        %1145 = vmatpush1.msra.mxu0 0.0
        %1146 = vmatprep.subr.mxu0 0.0
        %1147 = vmatpush1.msra.mxu0 0.0
        %1148 = vmatprep.subr.mxu0 0.0
        %1149 = vmatpush1.msra.mxu0 0.0
        %1150 = vmatprep.subr.mxu0 0.0
        %1151 = vmatpush1.msra.mxu0 0.0
        %1152 = vmatprep.subr.mxu0 0.0
        %1153 = vmatpush1.msra.mxu0 0.0
        %1154 = vmatprep.subr.mxu0 0.0
        %1155 = vmatpush1.msra.mxu0 0.0
        %1156 = vmatprep.subr.mxu0 0.0
        %1157 = vmatpush1.msra.mxu0 0.0
        %1158 = vmatprep.subr.mxu0 0.0
        %1159 = vmatpush1.msra.mxu0 0.0
        %1160 = vmatprep.subr.mxu0 0.0
        %1161 = vmatpush1.msra.mxu0 0.0
        %1162 = vmatprep.subr.mxu0 0.0
        %1163 = vmatpush1.msra.mxu0 0.0
        %1164 = vmatprep.subr.mxu0 0.0
        %1165 = vmatpush1.msra.mxu0 0.0
        %1166 = vmatprep.subr.mxu0 0.0
        %1167 = vmatpush1.msra.mxu0 0.0
        %1168 = vmatprep.subr.mxu0 0.0
        %1169 = vmatpush1.msra.mxu0 0.0
        %1170 = vmatprep.subr.mxu0 0.0
        %1171 = vmatpush1.msra.mxu0 0.0
        %1172 = vmatprep.subr.mxu0 0.0
        %1173 = vmatpush1.msra.mxu0 0.0
        %1174 = vmatprep.subr.mxu0 0.0
        %1175 = vmatpush1.msra.mxu0 0.0
        %1176 = vmatprep.subr.mxu0 0.0
        %1177 = vmatpush1.msra.mxu0 0.0
        %1178 = vmatprep.subr.mxu0 0.0
        %1179 = vmatpush1.msra.mxu0 0.0
        %1180 = vmatprep.subr.mxu0 0.0
        %1181 = vmatpush1.msra.mxu0 0.0
        %1182 = vmatprep.mubr.f32.mxu0 0.0
        %1183 = vmatmul.mubr.f32.gmra.mrb[0].mxu0 %v1113
        %v1184 = vpop.f32.mrb[0].mxu0
        %v1185 = vadd.f32 0.0, %v1184
        %v1186 = vpop.f32.mrb[0].mxu0
        %1187 = vmatprep.mubr.f32.mxu0 0.0
        %1188 = vmatmul.mubr.f32.gmra.mrb[0].mxu0 %v1116
        %v1189 = vpop.f32.mrb[0].mxu0
        %v1190 = vadd.f32 0.0, %v1189
        %v1191 = vpop.f32.mrb[0].mxu0
        %1192 = vdwg.mxu0
        %v1194 = vsel %vm861, %v948, 0
        %v1197 = vsel %vm861, %v949, 0
        %1199 = vmatprep.subr.mxu0 0.0
        %1200 = vmatpush1.msra.mxu0 %v543
        %1201 = vmatprep.subr.mxu0 0.0
        %1202 = vmatpush1.msra.mxu0 %v548
        %1203 = vmatprep.subr.mxu0 0.0
        %1204 = vmatpush1.msra.mxu0 0.0
        %1205 = vmatprep.subr.mxu0 0.0
        %1206 = vmatpush1.msra.mxu0 0.0
        %1207 = vmatprep.subr.mxu0 0.0
        %1208 = vmatpush1.msra.mxu0 0.0
        %1209 = vmatprep.subr.mxu0 0.0
        %1210 = vmatpush1.msra.mxu0 0.0
        %1211 = vmatprep.subr.mxu0 0.0
        %1212 = vmatpush1.msra.mxu0 0.0
        %1213 = vmatprep.subr.mxu0 0.0
        %1214 = vmatpush1.msra.mxu0 0.0
        %1215 = vmatprep.subr.mxu0 0.0
        %1216 = vmatpush1.msra.mxu0 0.0
        %1217 = vmatprep.subr.mxu0 0.0
        %1218 = vmatpush1.msra.mxu0 0.0
        %1219 = vmatprep.subr.mxu0 0.0
        %1220 = vmatpush1.msra.mxu0 0.0
        %1221 = vmatprep.subr.mxu0 0.0
        %1222 = vmatpush1.msra.mxu0 0.0
        %1223 = vmatprep.subr.mxu0 0.0
        %1224 = vmatpush1.msra.mxu0 0.0
        %1225 = vmatprep.subr.mxu0 0.0
        %1226 = vmatpush1.msra.mxu0 0.0
        %1227 = vmatprep.subr.mxu0 0.0
        %1228 = vmatpush1.msra.mxu0 0.0
        %1229 = vmatprep.subr.mxu0 0.0
        %1230 = vmatpush1.msra.mxu0 0.0
        %1231 = vmatprep.subr.mxu0 0.0
        %1232 = vmatpush1.msra.mxu0 0.0
        %1233 = vmatprep.subr.mxu0 0.0
        %1234 = vmatpush1.msra.mxu0 0.0
        %1235 = vmatprep.subr.mxu0 0.0
        %1236 = vmatpush1.msra.mxu0 0.0
        %1237 = vmatprep.subr.mxu0 0.0
        %1238 = vmatpush1.msra.mxu0 0.0
        %1239 = vmatprep.subr.mxu0 0.0
        %1240 = vmatpush1.msra.mxu0 0.0
        %1241 = vmatprep.subr.mxu0 0.0
        %1242 = vmatpush1.msra.mxu0 0.0
        %1243 = vmatprep.subr.mxu0 0.0
        %1244 = vmatpush1.msra.mxu0 0.0
        %1245 = vmatprep.subr.mxu0 0.0
        %1246 = vmatpush1.msra.mxu0 0.0
        %1247 = vmatprep.subr.mxu0 0.0
        %1248 = vmatpush1.msra.mxu0 0.0
        %1249 = vmatprep.subr.mxu0 0.0
        %1250 = vmatpush1.msra.mxu0 0.0
        %1251 = vmatprep.subr.mxu0 0.0
        %1252 = vmatpush1.msra.mxu0 0.0
        %1253 = vmatprep.subr.mxu0 0.0
        %1254 = vmatpush1.msra.mxu0 0.0
        %1255 = vmatprep.subr.mxu0 0.0
        %1256 = vmatpush1.msra.mxu0 0.0
        %1257 = vmatprep.subr.mxu0 0.0
        %1258 = vmatpush1.msra.mxu0 0.0
        %1259 = vmatprep.subr.mxu0 0.0
        %1260 = vmatpush1.msra.mxu0 0.0
        %1261 = vmatprep.subr.mxu0 0.0
        %1262 = vmatpush1.msra.mxu0 0.0
        %1263 = vmatprep.mubr.f32.mxu0 0.0
        %1264 = vmatmul.mubr.f32.gmra.mrb[0].mxu0 %v1194
        %v1265 = vpop.f32.mrb[0].mxu0
        %v1266 = vadd.f32 0.0, %v1265
        %v1267 = vpop.f32.mrb[0].mxu0
        %1268 = vmatprep.mubr.f32.mxu0 0.0
        %1269 = vmatmul.mubr.f32.gmra.mrb[0].mxu0 %v1197
        %v1270 = vpop.f32.mrb[0].mxu0
        %v1271 = vadd.f32 0.0, %v1270
        %v1272 = vpop.f32.mrb[0].mxu0
        %1273 = vdwg.mxu0
        %v1274 = vld [vmem:[%s3] sm:$0xff]
        %v1275 = vld [vmem:[%s3 + $0x8] sm:$0xff]
        %v1276 = vld [vmem:[%s3 + $0x10] sm:$0xff]
        %v1277 = vld [vmem:[%s3 + $0x18] sm:$0xff]
        %v1278 = vld [vmem:[%s3 + $0x20] sm:$0xff]
        %v1279 = vld [vmem:[%s3 + $0x28] sm:$0xff]
        %v1280 = vld [vmem:[%s3 + $0x30] sm:$0xff]
        %v1281 = vld [vmem:[%s3 + $0x38] sm:$0xff]
        %v1282 = vld [vmem:[%s3 + $0x40] sm:$0xff]
        %v1283 = vld [vmem:[%s3 + $0x48] sm:$0xff]
        %v1284 = vld [vmem:[%s3 + $0x50] sm:$0xff]
        %v1285 = vld [vmem:[%s3 + $0x58] sm:$0xff]
        %v1286 = vld [vmem:[%s3 + $0x60] sm:$0xff]
        %v1287 = vld [vmem:[%s3 + $0x68] sm:$0xff]
        %v1288 = vld [vmem:[%s3 + $0x70] sm:$0xff]
        %v1289 = vld [vmem:[%s3 + $0x78] sm:$0xff]
        %v1290 = vld [vmem:[%s4] sm:$0x1]
        %v1292 = vlaneseq
        %v1293 = vshrl.u32 %v1292, 7
        %v1294 = vsub.s32 0, %v1293
        %v1295 = vrot.slane %v1290, %v1294
        %1297 = vmatprep.subr.mxu0 0.0
        %1298 = vmatpush1.msra.mxu0 %v1274
        %1299 = vmatprep.subr.mxu0 0.0
        %1300 = vmatpush1.msra.mxu0 %v1275
        %1301 = vmatprep.subr.mxu0 0.0
        %1302 = vmatpush1.msra.mxu0 %v1276
        %1303 = vmatprep.subr.mxu0 0.0
        %1304 = vmatpush1.msra.mxu0 %v1277
        %1305 = vmatprep.subr.mxu0 0.0
        %1306 = vmatpush1.msra.mxu0 %v1278
        %1307 = vmatprep.subr.mxu0 0.0
        %1308 = vmatpush1.msra.mxu0 %v1279
        %1309 = vmatprep.subr.mxu0 0.0
        %1310 = vmatpush1.msra.mxu0 %v1280
        %1311 = vmatprep.subr.mxu0 0.0
        %1312 = vmatpush1.msra.mxu0 %v1281
        %1313 = vmatprep.subr.mxu0 0.0
        %1314 = vmatpush1.msra.mxu0 %v1282
        %1315 = vmatprep.subr.mxu0 0.0
        %1316 = vmatpush1.msra.mxu0 %v1283
        %1317 = vmatprep.subr.mxu0 0.0
        %1318 = vmatpush1.msra.mxu0 %v1284
        %1319 = vmatprep.subr.mxu0 0.0
        %1320 = vmatpush1.msra.mxu0 %v1285
        %1321 = vmatprep.subr.mxu0 0.0
        %1322 = vmatpush1.msra.mxu0 %v1286
        %1323 = vmatprep.subr.mxu0 0.0
        %1324 = vmatpush1.msra.mxu0 %v1287
        %1325 = vmatprep.subr.mxu0 0.0
        %1326 = vmatpush1.msra.mxu0 %v1288
        %1327 = vmatprep.subr.mxu0 0.0
        %1328 = vmatpush1.msra.mxu0 %v1289
        %1329 = vmatprep.subr.mxu0 0.0
        %1330 = vmatpush1.msra.mxu0 0.0
        %1331 = vmatprep.subr.mxu0 0.0
        %1332 = vmatpush1.msra.mxu0 0.0
        %1333 = vmatprep.subr.mxu0 0.0
        %1334 = vmatpush1.msra.mxu0 0.0
        %1335 = vmatprep.subr.mxu0 0.0
        %1336 = vmatpush1.msra.mxu0 0.0
        %1337 = vmatprep.subr.mxu0 0.0
        %1338 = vmatpush1.msra.mxu0 0.0
        %1339 = vmatprep.subr.mxu0 0.0
        %1340 = vmatpush1.msra.mxu0 0.0
        %1341 = vmatprep.subr.mxu0 0.0
        %1342 = vmatpush1.msra.mxu0 0.0
        %1343 = vmatprep.subr.mxu0 0.0
        %1344 = vmatpush1.msra.mxu0 0.0
        %1345 = vmatprep.subr.mxu0 0.0
        %1346 = vmatpush1.msra.mxu0 0.0
        %1347 = vmatprep.subr.mxu0 0.0
        %1348 = vmatpush1.msra.mxu0 0.0
        %1349 = vmatprep.subr.mxu0 0.0
        %1350 = vmatpush1.msra.mxu0 0.0
        %1351 = vmatprep.subr.mxu0 0.0
        %1352 = vmatpush1.msra.mxu0 0.0
        %1353 = vmatprep.subr.mxu0 0.0
        %1354 = vmatpush1.msra.mxu0 0.0
        %1355 = vmatprep.subr.mxu0 0.0
        %1356 = vmatpush1.msra.mxu0 0.0
        %1357 = vmatprep.subr.mxu0 0.0
        %1358 = vmatpush1.msra.mxu0 0.0
        %1359 = vmatprep.subr.mxu0 0.0
        %1360 = vmatpush1.msra.mxu0 0.0
        %1361 = vmatprep.mubr.f32.mxu0 0.0
        %1362 = vmatmul.mubr.f32.gmra.mrb[0].mxu0 %v1023
        %v1363 = vpop.f32.mrb[0].mxu0
        %v1364 = vadd.f32 %v1295, %v1363
        %v1365 = vpop.f32.mrb[0].mxu0
        %1366 = vmatprep.mubr.f32.mxu0 0.0
        %1367 = vmatmul.mubr.f32.gmra.mrb[0].mxu0 %v1028
        %v1368 = vpop.f32.mrb[0].mxu0
        %v1369 = vadd.f32 %v1295, %v1368
        %v1370 = vpop.f32.mrb[0].mxu0
        %1371 = vmatprep.mubr.f32.mxu0 0.0
        %1372 = vmatmul.mubr.f32.gmra.mrb[0].mxu0 %v1104
        %v1373 = vpop.f32.mrb[0].mxu0
        %v1374 = vadd.f32 %v1295, %v1373
        %v1375 = vpop.f32.mrb[0].mxu0
        %1376 = vmatprep.mubr.f32.mxu0 0.0
        %1377 = vmatmul.mubr.f32.gmra.mrb[0].mxu0 %v1109
        %v1378 = vpop.f32.mrb[0].mxu0
        %v1379 = vadd.f32 %v1295, %v1378
        %v1380 = vpop.f32.mrb[0].mxu0
        %1381 = vmatprep.mubr.f32.mxu0 0.0
        %1382 = vmatmul.mubr.f32.gmra.mrb[0].mxu0 %v1185
        %v1383 = vpop.f32.mrb[0].mxu0
        %v1384 = vadd.f32 %v1295, %v1383
        %v1385 = vpop.f32.mrb[0].mxu0
        %1386 = vmatprep.mubr.f32.mxu0 0.0
        %1387 = vmatmul.mubr.f32.gmra.mrb[0].mxu0 %v1190
        %v1388 = vpop.f32.mrb[0].mxu0
        %v1389 = vadd.f32 %v1295, %v1388
        %v1390 = vpop.f32.mrb[0].mxu0
        %1391 = vmatprep.mubr.f32.mxu0 0.0
        %1392 = vmatmul.mubr.f32.gmra.mrb[0].mxu0 %v1266
        %v1393 = vpop.f32.mrb[0].mxu0
        %v1394 = vadd.f32 %v1295, %v1393
        %v1395 = vpop.f32.mrb[0].mxu0
        %1396 = vmatprep.mubr.f32.mxu0 0.0
        %1397 = vmatmul.mubr.f32.gmra.mrb[0].mxu0 %v1271
        %v1398 = vpop.f32.mrb[0].mxu0
        %v1399 = vadd.f32 %v1295, %v1398
        %v1400 = vpop.f32.mrb[0].mxu0
        %1401 = vdwg.mxu0
        %1402 = vst.msk [vmem:[%s262] sm:$0xff] %vm308, %v1364
        %1403 = vst.msk [vmem:[%s262 + $0x8] sm:$0xff] %vm308, %v1369
        %1404 = vst.msk [vmem:[%s262 + $0x10] sm:$0xff] %vm308, %v1374
        %1405 = vst.msk [vmem:[%s262 + $0x18] sm:$0xff] %vm308, %v1379
        %1406 = vst.msk [vmem:[%s262 + $0x20] sm:$0xff] %vm308, %v1384
        %1407 = vst.msk [vmem:[%s262 + $0x28] sm:$0xff] %vm308, %v1389
        %1408 = vst.msk [vmem:[%s262 + $0x30] sm:$0xff] %vm308, %v1394
        %1409 = vst.msk [vmem:[%s262 + $0x38] sm:$0xff] %vm308, %v1399
        %s1410 = sand.u32 %s160, 1
        %s1411 = scalar_lea.sflag [#allocation4], %s1410
        %s1412 = sand.u32 %s160, 1
        %s1413 = smul.addr %s1412, 64
        %s1414 = scalar_lea.vmem [#allocation5], %s1413
        // Predicated region
        $region49: #{tpu_custom_call.1} parent=43 // pred_check
          %p1415 = pneg %p170
        $region50: #{tpu_custom_call.1} parent=43 // pred_check_branch
          %1417 = sbr.rel (%p1415) target = $region52
        $region51: #{tpu_custom_call.1} parent=43 // pred_region
          %s1418 = smul.u32 4, %s21
          %s1420 = ssub.s32 1024, 1024
          %1421 = vsyncadd %s1411, %s1420
          %s1422 = smul.addr %s1418, 2
          %s1423 = smul.addr %s1422, 128
          %s1424 = scalar_lea.hbm %s6, %s1423
          %s1425 = sshll.u32 %s1414, 4
          %s1426 = int_to_ptr.vmem [resolvable:$true] %s1425
          %1431 = dma.vmem_to_hbm [thread:$0]  %s1426, 1024, %s1424, %s1411, 128, 128, 8
        $region52: #{tpu_custom_call.1} parent=43 // pred_fallthru
          _
      $region44: #{tpu_custom_call.1} parent=5 // pred_fallthru
        _
      %p1432 = scmp.le.s32.totalorder 2, %s16
      // Predicated region
      $region53: #{tpu_custom_call.1} parent=5 // pred_check
        %p1433 = pneg %p1432
      $region54: #{tpu_custom_call.1} parent=5 // pred_check_branch
        %1435 = sbr.rel (%p1433) target = $region56
      $region55: #{tpu_custom_call.1} parent=5 // pred_region
        %s1436 = ssub.s32 %s16, 2
        // Predicated region
        $region57: #{tpu_custom_call.1} parent=55 // pred_check
          %p1437 = pneg %p176
        $region58: #{tpu_custom_call.1} parent=55 // pred_check_branch
          %1439 = sbr.rel (%p1437) target = $region60
        $region59: #{tpu_custom_call.1} parent=55 // pred_region
          %s1440 = sand.u32 %s161, 1
          %s1441 = scalar_lea.sflag [#allocation4], %s1440
          %s1442 = sand.u32 %s161, 1
          %s1443 = smul.addr %s1442, 64
          %s1444 = scalar_lea.vmem [#allocation5], %s1443
          %1445 = dma.done %s1441, 1024
        $region60: #{tpu_custom_call.1} parent=55 // pred_fallthru
          _
      $region56: #{tpu_custom_call.1} parent=5 // pred_fallthru
        _
    $region6: #{tpu_custom_call.1} parent=1 // loop_footer
      %s20 = sadd.s32 1, %s16
    $region7: #{tpu_custom_call.1} parent=1 // loop_footer_branch
      %15 = sbr.rel target = $region3
    $region8: #{tpu_custom_call.1} parent=1 // loop_exit
      _
    %1446 = vsyncpa [#allocation3], 1
    %s1447 = scalar_lea.sflag [#allocation3], 1
    %1448 = vsyncpa %s1447, 1
    %1449 = vsyncpa [#allocation4], 1
    %s1450 = scalar_lea.sflag [#allocation4], 1
    %1451 = vsyncpa %s1450, 1

// kernel: tpu_custom_call.1
$region0: #{tpu_custom_call.1}
  #allocation0 [shape = 'u32[]', space=smem, size = 0x4, offset = 0x4, fixed_abs, tag = 'smem constant byte address 0x4 - core index']
  #allocation1 [shape = 'u32[144,128]{1,0:T(1,128)}', space=vmem, size = 0x12000, scoped, tag = 'internal scratch']
  %s0 = inlined_call_operand.vmem [shape: f32[8,16,32], index: 0, kind: input, shape index: {}]
  %s1 = inlined_call_operand.hbm [shape: f32[32,384], index: 1, kind: input, shape index: {}]
  %s2 = inlined_call_operand.vmem [shape: f32[1,384], index: 2, kind: input, shape index: {}]
  %s3 = inlined_call_operand.vmem [shape: f32[128,32], index: 3, kind: input, shape index: {}]
  %s4 = inlined_call_operand.vmem [shape: f32[1,32], index: 4, kind: input, shape index: {}]
  %s5 = inlined_call_operand.vmem [shape: f32[16,16], index: 5, kind: input, shape index: {}]
  %s6 = inlined_call_operand.hbm [shape: f32[8,16,32], index: 6, kind: output, shape index: {}]
  %s7 = sld [smem:[#allocation0]]
  $region61: #{tpu_custom_call.1} parent=0
    _
  %s9 = ssub.s32 1, %s7
  %s10 = scalar_select 0, %s9, %s7
  $region1: #{tpu_custom_call.1} parent=0
    #allocation2 [shape = 'u8[49152]{0}', space=vmem, size = 0xc000, scoped, tag = 'input window, operand 1, single buffered']
    #allocation3 [shape = 's32[2]{0}', space=sflag, size = 0x8, scoped, tag = 'scoped memory for tpu_custom_call.1']
    #allocation4 [shape = 's32[2]{0}', space=sflag, size = 0x8, scoped, tag = 'scoped memory for tpu_custom_call.1']
    #allocation5 [shape = 'u8[65536]{0}', space=vmem, size = 0x10000, scoped, tag = 'output window, operand 0']
    %11 = vsyncpa [#allocation3], 0
    %12 = vsyncpa [#allocation4], 0
    %s13 = scalar_lea.sflag [#allocation4], 1
    %14 = vsyncpa %s13, 0
    loop: start=0, step=1, limit=4
    $region2: #{tpu_custom_call.1} parent=1 // loop_pre_header
      _
    $region3: #{tpu_custom_call.1} parent=1 // loop_header
      %s16 = sphi 0, %s20
      %p17 = scmp.ge.s32.totalorder %s16, 4
      %s26 = sphi 0, %s28
      %s29 = sphi 0, %s26
      %s30 = sphi 0, %s29
      %s46 = sphi 0, %s30
      %s50 = sphi 0, %s50
      %s52 = sphi 0, %s50
      %s53 = sphi 0, %s52
      %s67 = sphi 0, %s53
      %s71 = sphi 0, %s71
      %s73 = sphi 0, %s71
      %s74 = sphi 0, %s73
      %s88 = sphi 0, %s74
      %s92 = sphi 0, %s92
      %s94 = sphi 0, %s92
      %s95 = sphi 0, %s94
      %s109 = sphi 0, %s95
      %s113 = sphi 0, %s113
      %s115 = sphi 0, %s113
      %s116 = sphi 0, %s115
      %s130 = sphi 0, %s116
      %s134 = sphi 0, %s134
      %s136 = sphi 0, %s134
      %s137 = sphi 0, %s136
      %s151 = sphi 0, %s137
      %s157 = sphi 0, %s159
      %s160 = sphi 0, %s157
      %s161 = sphi 0, %s160
      %s177 = sphi 0, %s161
    $region4: #{tpu_custom_call.1} parent=1 // loop_header_branch
      %19 = sbr.rel (%p17) target = $region8
    $region5: #{tpu_custom_call.1} parent=1 // loop_body
      %s21 = ssub.s32 %s16, 1
      %s22 = ssub.s32 %s16, 2
      %s23 = sadd.s32 %s16, 1
      %s24 = ssub.s32 %s16, %s23
      %p25 = scmp.eq.s32.totalorder %s24, 0
      %s27 = sadd.s32 %s26, 1
      %s28 = scalar_select %p25, %s26, %s27
      %p31 = pneg %p25
      %p32 = scmp.eq.s32.totalorder %s16, 1
      %p33 = por %p31, %p32
      %p34 = scmp.ne.s32.totalorder %s26, %s29
      %p35 = scmp.eq.s32.totalorder %s16, 0
      %p36 = por %p34, %p35
      %p37 = scmp.ne.s32.totalorder %s26, %s29
      %p38 = scmp.eq.s32.totalorder %s21, 1
      %p39 = por %p37, %p38
      %p40 = scmp.ne.s32.totalorder %s29, %s30
      %p41 = scmp.eq.s32.totalorder %s21, 0
      %p42 = por %p40, %p41
      %p43 = scmp.ne.s32.totalorder %s29, %s30
      %p44 = scmp.eq.s32.totalorder %s22, 1
      %p45 = por %p43, %p44
      %p47 = scmp.ne.s32.totalorder %s30, %s46
      %p48 = scmp.eq.s32.totalorder %s22, 0
      %p49 = por %p47, %p48
      %s51 = sadd.s32 %s50, 1
      %p54 = scmp.eq.s32.totalorder %s16, 1
      %p55 = scmp.ne.s32.totalorder %s50, %s52
      %p56 = scmp.eq.s32.totalorder %s16, 0
      %p57 = por %p55, %p56
      %p58 = scmp.ne.s32.totalorder %s50, %s52
      %p59 = scmp.eq.s32.totalorder %s21, 1
      %p60 = por %p58, %p59
      %p61 = scmp.ne.s32.totalorder %s52, %s53
      %p62 = scmp.eq.s32.totalorder %s21, 0
      %p63 = por %p61, %p62
      %p64 = scmp.ne.s32.totalorder %s52, %s53
      %p65 = scmp.eq.s32.totalorder %s22, 1
      %p66 = por %p64, %p65
      %p68 = scmp.ne.s32.totalorder %s53, %s67
      %p69 = scmp.eq.s32.totalorder %s22, 0
      %p70 = por %p68, %p69
      %s72 = sadd.s32 %s71, 1
      %p75 = scmp.eq.s32.totalorder %s16, 1
      %p76 = scmp.ne.s32.totalorder %s71, %s73
      %p77 = scmp.eq.s32.totalorder %s16, 0
      %p78 = por %p76, %p77
      %p79 = scmp.ne.s32.totalorder %s71, %s73
      %p80 = scmp.eq.s32.totalorder %s21, 1
      %p81 = por %p79, %p80
      %p82 = scmp.ne.s32.totalorder %s73, %s74
      %p83 = scmp.eq.s32.totalorder %s21, 0
      %p84 = por %p82, %p83
      %p85 = scmp.ne.s32.totalorder %s73, %s74
      %p86 = scmp.eq.s32.totalorder %s22, 1
      %p87 = por %p85, %p86
      %p89 = scmp.ne.s32.totalorder %s74, %s88
      %p90 = scmp.eq.s32.totalorder %s22, 0
      %p91 = por %p89, %p90
      %s93 = sadd.s32 %s92, 1
      %p96 = scmp.eq.s32.totalorder %s16, 1
      %p97 = scmp.ne.s32.totalorder %s92, %s94
      %p98 = scmp.eq.s32.totalorder %s16, 0
      %p99 = por %p97, %p98
      %p100 = scmp.ne.s32.totalorder %s92, %s94
      %p101 = scmp.eq.s32.totalorder %s21, 1
      %p102 = por %p100, %p101
      %p103 = scmp.ne.s32.totalorder %s94, %s95
      %p104 = scmp.eq.s32.totalorder %s21, 0
      %p105 = por %p103, %p104
      %p106 = scmp.ne.s32.totalorder %s94, %s95
      %p107 = scmp.eq.s32.totalorder %s22, 1
      %p108 = por %p106, %p107
      %p110 = scmp.ne.s32.totalorder %s95, %s109
      %p111 = scmp.eq.s32.totalorder %s22, 0
      %p112 = por %p110, %p111
      %s114 = sadd.s32 %s113, 1
      %p117 = scmp.eq.s32.totalorder %s16, 1
      %p118 = scmp.ne.s32.totalorder %s113, %s115
      %p119 = scmp.eq.s32.totalorder %s16, 0
      %p120 = por %p118, %p119
      %p121 = scmp.ne.s32.totalorder %s113, %s115
      %p122 = scmp.eq.s32.totalorder %s21, 1
      %p123 = por %p121, %p122
      %p124 = scmp.ne.s32.totalorder %s115, %s116
      %p125 = scmp.eq.s32.totalorder %s21, 0
      %p126 = por %p124, %p125
      %p127 = scmp.ne.s32.totalorder %s115, %s116
      %p128 = scmp.eq.s32.totalorder %s22, 1
      %p129 = por %p127, %p128
      %p131 = scmp.ne.s32.totalorder %s116, %s130
      %p132 = scmp.eq.s32.totalorder %s22, 0
      %p133 = por %p131, %p132
      %s135 = sadd.s32 %s134, 1
      %p138 = scmp.eq.s32.totalorder %s16, 1
      %p139 = scmp.ne.s32.totalorder %s134, %s136
      %p140 = scmp.eq.s32.totalorder %s16, 0
      %p141 = por %p139, %p140
      %p142 = scmp.ne.s32.totalorder %s134, %s136
      %p143 = scmp.eq.s32.totalorder %s21, 1
      %p144 = por %p142, %p143
      %p145 = scmp.ne.s32.totalorder %s136, %s137
      %p146 = scmp.eq.s32.totalorder %s21, 0
      %p147 = por %p145, %p146
      %p148 = scmp.ne.s32.totalorder %s136, %s137
      %p149 = scmp.eq.s32.totalorder %s22, 1
      %p150 = por %p148, %p149
      %p152 = scmp.ne.s32.totalorder %s137, %s151
      %p153 = scmp.eq.s32.totalorder %s22, 0
      %p154 = por %p152, %p153
      %s155 = ssub.s32 %s16, %s23
      %p156 = scmp.eq.s32.totalorder %s155, 0
      %s158 = sadd.s32 %s157, 1
      %s159 = scalar_select %p156, %s157, %s158
      %p162 = pneg %p156
      %p163 = scmp.eq.s32.totalorder %s16, 1
      %p164 = por %p162, %p163
      %p165 = scmp.ne.s32.totalorder %s157, %s160
      %p166 = scmp.eq.s32.totalorder %s16, 0
      %p167 = por %p165, %p166
      %p168 = scmp.ne.s32.totalorder %s157, %s160
      %p169 = scmp.eq.s32.totalorder %s21, 1
      %p170 = por %p168, %p169
      %p171 = scmp.ne.s32.totalorder %s160, %s161
      %p172 = scmp.eq.s32.totalorder %s21, 0
      %p173 = por %p171, %p172
      %p174 = scmp.ne.s32.totalorder %s160, %s161
      %p175 = scmp.eq.s32.totalorder %s22, 1
      %p176 = por %p174, %p175
      %p178 = scmp.ne.s32.totalorder %s161, %s177
      %p179 = scmp.eq.s32.totalorder %s22, 0
      %p180 = por %p178, %p179
      %p181 = scmp.le.s32.totalorder 1, %s16
      %p182 = scmp.lt.s32.totalorder %s16, 3
      %p183 = pnand %p181, %p182
      %p184 = pneg %p183
      // Predicated region
      $region9: #{tpu_custom_call.1} parent=5 // pred_check
        _
      $region10: #{tpu_custom_call.1} parent=5 // pred_check_branch
        %186 = sbr.rel (%p183) target = $region12
      $region11: #{tpu_custom_call.1} parent=5 // pred_region
        %s187 = ssub.s32 %s16, 1
        // Predicated region
        $region13: #{tpu_custom_call.1} parent=11 // pred_check
          %p188 = pneg %p63
        $region14: #{tpu_custom_call.1} parent=11 // pred_check_branch
          %190 = sbr.rel (%p188) target = $region16
        $region15: #{tpu_custom_call.1} parent=11 // pred_region
          %s192 = ssub.s32 1536, 1536
          %193 = vsyncadd [#allocation3], %s192
          %s194 = sshll.u32 [#allocation2], 4
          %s195 = int_to_ptr.vmem [resolvable:$true] %s194
          %200 = dma.hbm_to_vmem [thread:$0]  %s1, 1536, %s195, [#allocation3], 384, 384, 24
        $region16: #{tpu_custom_call.1} parent=11 // pred_fallthru
          _
        // Predicated region
        $region17: #{tpu_custom_call.1} parent=11 // pred_check
          %p201 = pneg %p84
        $region18: #{tpu_custom_call.1} parent=11 // pred_check_branch
          %203 = sbr.rel (%p201) target = $region20
        $region19: #{tpu_custom_call.1} parent=11 // pred_region
          _
        $region20: #{tpu_custom_call.1} parent=11 // pred_fallthru
          _
        // Predicated region
        $region21: #{tpu_custom_call.1} parent=11 // pred_check
          %p204 = pneg %p105
        $region22: #{tpu_custom_call.1} parent=11 // pred_check_branch
          %206 = sbr.rel (%p204) target = $region24
        $region23: #{tpu_custom_call.1} parent=11 // pred_region
          _
        $region24: #{tpu_custom_call.1} parent=11 // pred_fallthru
          _
        // Predicated region
        $region25: #{tpu_custom_call.1} parent=11 // pred_check
          %p207 = pneg %p126
        $region26: #{tpu_custom_call.1} parent=11 // pred_check_branch
          %209 = sbr.rel (%p207) target = $region28
        $region27: #{tpu_custom_call.1} parent=11 // pred_region
          _
        $region28: #{tpu_custom_call.1} parent=11 // pred_fallthru
          _
        // Predicated region
        $region29: #{tpu_custom_call.1} parent=11 // pred_check
          %p210 = pneg %p147
        $region30: #{tpu_custom_call.1} parent=11 // pred_check_branch
          %212 = sbr.rel (%p210) target = $region32
        $region31: #{tpu_custom_call.1} parent=11 // pred_region
          _
        $region32: #{tpu_custom_call.1} parent=11 // pred_fallthru
          _
      $region12: #{tpu_custom_call.1} parent=5 // pred_fallthru
        _
      %p213 = scmp.lt.s32.totalorder %s16, 2
      // Predicated region
      $region33: #{tpu_custom_call.1} parent=5 // pred_check
        %p214 = pneg %p213
      $region34: #{tpu_custom_call.1} parent=5 // pred_check_branch
        %216 = sbr.rel (%p214) target = $region36
      $region35: #{tpu_custom_call.1} parent=5 // pred_region
        // Predicated region
        $region37: #{tpu_custom_call.1} parent=35 // pred_check
          %p217 = pneg %p36
        $region38: #{tpu_custom_call.1} parent=35 // pred_check_branch
          %219 = sbr.rel (%p217) target = $region40
        $region39: #{tpu_custom_call.1} parent=35 // pred_region
          %s220 = smul.u32 4, %s16
          %p221 = scmp.lt.s32.totalorder %s220, 7
          %s222 = scalar_select %p221, %s220, 7
          %s223 = smul.addr %s222, 2
          %s224 = smul.addr %s223, 8
          %s225 = scalar_lea.vmem %s0, %s224
          %s226 = smul.u32 4, %s16
        $region40: #{tpu_custom_call.1} parent=35 // pred_fallthru
          _
      $region36: #{tpu_custom_call.1} parent=5 // pred_fallthru
        _
      %p227 = scmp.le.s32.totalorder 1, %s16
      %p228 = scmp.lt.s32.totalorder %s16, 3
      %p229 = pnand %p227, %p228
      %p230 = pneg %p229
      // Predicated region
      $region41: #{tpu_custom_call.1} parent=5 // pred_check
        _
      $region42: #{tpu_custom_call.1} parent=5 // pred_check_branch
        %232 = sbr.rel (%p229) target = $region44
      $region43: #{tpu_custom_call.1} parent=5 // pred_region
        %s233 = ssub.s32 %s16, 1
        // Predicated region
        $region45: #{tpu_custom_call.1} parent=43 // pred_check
          %p234 = pneg %p63
        $region46: #{tpu_custom_call.1} parent=43 // pred_check_branch
          %236 = sbr.rel (%p234) target = $region48
        $region47: #{tpu_custom_call.1} parent=43 // pred_region
          %237 = dma.done [#allocation3], 1536
        $region48: #{tpu_custom_call.1} parent=43 // pred_fallthru
          _
        %s238 = smul.u32 4, %s21
        %p239 = scmp.lt.s32.totalorder %s238, 7
        %s240 = scalar_select %p239, %s238, 7
        %s241 = smul.addr %s240, 2
        %s242 = smul.addr %s241, 8
        %s243 = scalar_lea.vmem %s0, %s242
        %p244 = pneg %p42
        %p245 = pneg %p39
        %p246 = pneg %p63
        %p247 = pneg %p60
        %p248 = pneg %p84
        %p249 = pneg %p81
        %p250 = pneg %p105
        %p251 = pneg %p102
        %p252 = pneg %p126
        %p253 = pneg %p123
        %p254 = pneg %p147
        %p255 = pneg %p144
        %p256 = pneg %p173
        %p257 = pneg %p170
        %s258 = sand.u32 %s160, 1
        %s259 = scalar_lea.sflag [#allocation4], %s258
        %s260 = sand.u32 %s160, 1
        %s261 = smul.addr %s260, 64
        %s262 = scalar_lea.vmem [#allocation5], %s261
        %s263 = smul.u32 4, %s21
        %p264 = scmp.lt.s32.totalorder %s263, 7
        %s265 = scalar_select %p264, %s263, 7
        %s266 = smul.addr %s265, 2
        %s267 = smul.addr %s266, 8
        %s268 = scalar_lea.vmem %s0, %s267
        %s269 = smul.u32 4, %s21
        %s270 = smul.u32 4, %s21
        %v271 = vld [vmem:[%s268] sm:$0xff]
        %v272 = vld [vmem:[%s268 + $0x8] sm:$0xff]
        %v273 = vld [vmem:[%s268 + $0x10] sm:$0xff]
        %v274 = vld [vmem:[%s268 + $0x18] sm:$0xff]
        %v275 = vld [vmem:[%s268 + $0x20] sm:$0xff]
        %v276 = vld [vmem:[%s268 + $0x28] sm:$0xff]
        %v277 = vld [vmem:[%s268 + $0x30] sm:$0xff]
        %v278 = vld [vmem:[%s268 + $0x38] sm:$0xff]
        %v279 = vld [vmem:[#allocation2] sm:$0xff]
        %v280 = vld [vmem:[#allocation2 + $0x8] sm:$0xff]
        %v281 = vld [vmem:[#allocation2 + $0x10] sm:$0xff]
        %v282 = vld [vmem:[#allocation2 + $0x18] sm:$0xff]
        %v283 = vld [vmem:[#allocation2 + $0x20] sm:$0xff]
        %v284 = vld [vmem:[#allocation2 + $0x28] sm:$0xff]
        %v285 = vld [vmem:[#allocation2 + $0x30] sm:$0xff]
        %v286 = vld [vmem:[#allocation2 + $0x38] sm:$0xff]
        %v287 = vld [vmem:[#allocation2 + $0x40] sm:$0xff]
        %v288 = vld [vmem:[#allocation2 + $0x48] sm:$0xff]
        %v289 = vld [vmem:[#allocation2 + $0x50] sm:$0xff]
        %v290 = vld [vmem:[#allocation2 + $0x58] sm:$0xff]
        %v291 = vld [vmem:[%s2] sm:$0x7]
        %v293 = vlaneseq
        %v294 = vshrl.u32 %v293, 7
        %v295 = vsub.s32 0, %v294
        %v296 = vrot.slane %v291, %v295
        %v297 = vlaneseq
        %v298 = vshrl.u32 %v297, 7
        %v299 = vsub.s32 1, %v298
        %v300 = vrot.slane %v291, %v299
        %v301 = vlaneseq
        %v302 = vshrl.u32 %v301, 7
        %v303 = vsub.s32 2, %v302
        %v304 = vrot.slane %v291, %v303
        %vm308 = vcmask 261120
        %v310 = vsel %vm308, %v271, 0
        %v313 = vsel %vm308, %v272, 0
        %v316 = vsel %vm308, %v273, 0
        %v319 = vsel %vm308, %v274, 0
        %v322 = vsel %vm308, %v275, 0
        %v325 = vsel %vm308, %v276, 0
        %v328 = vsel %vm308, %v277, 0
        %v331 = vsel %vm308, %v278, 0
        %333 = vmatprep.subr.mxu0 %v280
        %334 = vmatpush1.msra.mxu0 %v279
        %335 = vmatprep.subr.mxu0 %v283
        %336 = vmatpush1.msra.mxu0 %v282
        %337 = vmatprep.subr.mxu0 %v286
        %338 = vmatpush1.msra.mxu0 %v285
        %339 = vmatprep.subr.mxu0 %v289
        %340 = vmatpush1.msra.mxu0 %v288
        %341 = vmatprep.subr.mxu0 0.0
        %342 = vmatpush1.msra.mxu0 0.0
        %343 = vmatprep.subr.mxu0 0.0
        %344 = vmatpush1.msra.mxu0 0.0
        %345 = vmatprep.subr.mxu0 0.0
        %346 = vmatpush1.msra.mxu0 0.0
        %347 = vmatprep.subr.mxu0 0.0
        %348 = vmatpush1.msra.mxu0 0.0
        %349 = vmatprep.subr.mxu0 0.0
        %350 = vmatpush1.msra.mxu0 0.0
        %351 = vmatprep.subr.mxu0 0.0
        %352 = vmatpush1.msra.mxu0 0.0
        %353 = vmatprep.subr.mxu0 0.0
        %354 = vmatpush1.msra.mxu0 0.0
        %355 = vmatprep.subr.mxu0 0.0
        %356 = vmatpush1.msra.mxu0 0.0
        %357 = vmatprep.subr.mxu0 0.0
        %358 = vmatpush1.msra.mxu0 0.0
        %359 = vmatprep.subr.mxu0 0.0
        %360 = vmatpush1.msra.mxu0 0.0
        %361 = vmatprep.subr.mxu0 0.0
        %362 = vmatpush1.msra.mxu0 0.0
        %363 = vmatprep.subr.mxu0 0.0
        %364 = vmatpush1.msra.mxu0 0.0
        %365 = vmatprep.subr.mxu0 0.0
        %366 = vmatpush1.msra.mxu0 0.0
        %367 = vmatprep.subr.mxu0 0.0
        %368 = vmatpush1.msra.mxu0 0.0
        %369 = vmatprep.subr.mxu0 0.0
        %370 = vmatpush1.msra.mxu0 0.0
        %371 = vmatprep.subr.mxu0 0.0
        %372 = vmatpush1.msra.mxu0 0.0
        %373 = vmatprep.subr.mxu0 0.0
        %374 = vmatpush1.msra.mxu0 0.0
        %375 = vmatprep.subr.mxu0 0.0
        %376 = vmatpush1.msra.mxu0 0.0
        %377 = vmatprep.subr.mxu0 0.0
        %378 = vmatpush1.msra.mxu0 0.0
        %379 = vmatprep.subr.mxu0 0.0
        %380 = vmatpush1.msra.mxu0 0.0
        %381 = vmatprep.subr.mxu0 0.0
        %382 = vmatpush1.msra.mxu0 0.0
        %383 = vmatprep.subr.mxu0 0.0
        %384 = vmatpush1.msra.mxu0 0.0
        %385 = vmatprep.subr.mxu0 0.0
        %386 = vmatpush1.msra.mxu0 0.0
        %387 = vmatprep.subr.mxu0 0.0
        %388 = vmatpush1.msra.mxu0 0.0
        %389 = vmatprep.subr.mxu0 0.0
        %390 = vmatpush1.msra.mxu0 0.0
        %391 = vmatprep.subr.mxu0 0.0
        %392 = vmatpush1.msra.mxu0 0.0
        %393 = vmatprep.subr.mxu0 0.0
        %394 = vmatpush1.msra.mxu0 0.0
        %395 = vmatprep.subr.mxu0 0.0
        %396 = vmatpush1.msra.mxu0 0.0
        %397 = vmatprep.mubr.f32.mxu0 0.0
        %398 = vmatmul.mubr.f32.gmra.mrb[0].mxu0 %v310
        %v399 = vpop.f32.mrb[0].mxu0
        %v400 = vadd.f32 %v296, %v399
        %v401 = vpop.f32.mrb[0].mxu0
        %v402 = vadd.f32 %v300, %v401
        %403 = vmatprep.mubr.f32.mxu0 0.0
        %404 = vmatmul.mubr.f32.gmra.mrb[0].mxu0 %v313
        %v405 = vpop.f32.mrb[0].mxu0
        %v406 = vadd.f32 %v296, %v405
        %v407 = vpop.f32.mrb[0].mxu0
        %v408 = vadd.f32 %v300, %v407
        %409 = vmatprep.mubr.f32.mxu0 0.0
        %410 = vmatmul.mubr.f32.gmra.mrb[0].mxu0 %v316
        %v411 = vpop.f32.mrb[0].mxu0
        %v412 = vadd.f32 %v296, %v411
        %v413 = vpop.f32.mrb[0].mxu0
        %v414 = vadd.f32 %v300, %v413
        %415 = vmatprep.mubr.f32.mxu0 0.0
        %416 = vmatmul.mubr.f32.gmra.mrb[0].mxu0 %v319
        %v417 = vpop.f32.mrb[0].mxu0
        %v418 = vadd.f32 %v296, %v417
        %v419 = vpop.f32.mrb[0].mxu0
        %v420 = vadd.f32 %v300, %v419
        %421 = vmatprep.mubr.f32.mxu0 0.0
        %422 = vmatmul.mubr.f32.gmra.mrb[0].mxu0 %v322
        %v423 = vpop.f32.mrb[0].mxu0
        %v424 = vadd.f32 %v296, %v423
        %v425 = vpop.f32.mrb[0].mxu0
        %v426 = vadd.f32 %v300, %v425
        %427 = vmatprep.mubr.f32.mxu0 0.0
        %428 = vmatmul.mubr.f32.gmra.mrb[0].mxu0 %v325
        %v429 = vpop.f32.mrb[0].mxu0
        %v430 = vadd.f32 %v296, %v429
        %v431 = vpop.f32.mrb[0].mxu0
        %v432 = vadd.f32 %v300, %v431
        %433 = vmatprep.mubr.f32.mxu0 0.0
        %434 = vmatmul.mubr.f32.gmra.mrb[0].mxu0 %v328
        %v435 = vpop.f32.mrb[0].mxu0
        %v436 = vadd.f32 %v296, %v435
        %v437 = vpop.f32.mrb[0].mxu0
        %v438 = vadd.f32 %v300, %v437
        %439 = vmatprep.mubr.f32.mxu0 0.0
        %440 = vmatmul.mubr.f32.gmra.mrb[0].mxu0 %v331
        %v441 = vpop.f32.mrb[0].mxu0
        %v442 = vadd.f32 %v296, %v441
        %v443 = vpop.f32.mrb[0].mxu0
        %v444 = vadd.f32 %v300, %v443
        %445 = vdwg.mxu0
        %446 = vmatprep.subr.mxu0 0.0
        %447 = vmatpush1.msra.mxu0 %v281
        %448 = vmatprep.subr.mxu0 0.0
        %449 = vmatpush1.msra.mxu0 %v284
        %450 = vmatprep.subr.mxu0 0.0
        %451 = vmatpush1.msra.mxu0 %v287
        %452 = vmatprep.subr.mxu0 0.0
        %453 = vmatpush1.msra.mxu0 %v290
        %454 = vmatprep.subr.mxu0 0.0
        %455 = vmatpush1.msra.mxu0 0.0
        %456 = vmatprep.subr.mxu0 0.0
        %457 = vmatpush1.msra.mxu0 0.0
        %458 = vmatprep.subr.mxu0 0.0
        %459 = vmatpush1.msra.mxu0 0.0
        %460 = vmatprep.subr.mxu0 0.0
        %461 = vmatpush1.msra.mxu0 0.0
        %462 = vmatprep.subr.mxu0 0.0
        %463 = vmatpush1.msra.mxu0 0.0
        %464 = vmatprep.subr.mxu0 0.0
        %465 = vmatpush1.msra.mxu0 0.0
        %466 = vmatprep.subr.mxu0 0.0
        %467 = vmatpush1.msra.mxu0 0.0
        %468 = vmatprep.subr.mxu0 0.0
        %469 = vmatpush1.msra.mxu0 0.0
        %470 = vmatprep.subr.mxu0 0.0
        %471 = vmatpush1.msra.mxu0 0.0
        %472 = vmatprep.subr.mxu0 0.0
        %473 = vmatpush1.msra.mxu0 0.0
        %474 = vmatprep.subr.mxu0 0.0
        %475 = vmatpush1.msra.mxu0 0.0
        %476 = vmatprep.subr.mxu0 0.0
        %477 = vmatpush1.msra.mxu0 0.0
        %478 = vmatprep.subr.mxu0 0.0
        %479 = vmatpush1.msra.mxu0 0.0
        %480 = vmatprep.subr.mxu0 0.0
        %481 = vmatpush1.msra.mxu0 0.0
        %482 = vmatprep.subr.mxu0 0.0
        %483 = vmatpush1.msra.mxu0 0.0
        %484 = vmatprep.subr.mxu0 0.0
        %485 = vmatpush1.msra.mxu0 0.0
        %486 = vmatprep.subr.mxu0 0.0
        %487 = vmatpush1.msra.mxu0 0.0
        %488 = vmatprep.subr.mxu0 0.0
        %489 = vmatpush1.msra.mxu0 0.0
        %490 = vmatprep.subr.mxu0 0.0
        %491 = vmatpush1.msra.mxu0 0.0
        %492 = vmatprep.subr.mxu0 0.0
        %493 = vmatpush1.msra.mxu0 0.0
        %494 = vmatprep.subr.mxu0 0.0
        %495 = vmatpush1.msra.mxu0 0.0
        %496 = vmatprep.subr.mxu0 0.0
        %497 = vmatpush1.msra.mxu0 0.0
        %498 = vmatprep.subr.mxu0 0.0
        %499 = vmatpush1.msra.mxu0 0.0
        %500 = vmatprep.subr.mxu0 0.0
        %501 = vmatpush1.msra.mxu0 0.0
        %502 = vmatprep.subr.mxu0 0.0
        %503 = vmatpush1.msra.mxu0 0.0
        %504 = vmatprep.subr.mxu0 0.0
        %505 = vmatpush1.msra.mxu0 0.0
        %506 = vmatprep.subr.mxu0 0.0
        %507 = vmatpush1.msra.mxu0 0.0
        %508 = vmatprep.subr.mxu0 0.0
        %509 = vmatpush1.msra.mxu0 0.0
        %510 = vmatprep.mubr.f32.mxu0 0.0
        %511 = vmatmul.mubr.f32.gmra.mrb[0].mxu0 %v310
        %v512 = vpop.f32.mrb[0].mxu0
        %v513 = vadd.f32 %v304, %v512
        %v514 = vpop.f32.mrb[0].mxu0
        %515 = vmatprep.mubr.f32.mxu0 0.0
        %516 = vmatmul.mubr.f32.gmra.mrb[0].mxu0 %v313
        %v517 = vpop.f32.mrb[0].mxu0
        %v518 = vadd.f32 %v304, %v517
        %v519 = vpop.f32.mrb[0].mxu0
        %520 = vmatprep.mubr.f32.mxu0 0.0
        %521 = vmatmul.mubr.f32.gmra.mrb[0].mxu0 %v316
        %v522 = vpop.f32.mrb[0].mxu0
        %v523 = vadd.f32 %v304, %v522
        %v524 = vpop.f32.mrb[0].mxu0
        %525 = vmatprep.mubr.f32.mxu0 0.0
        %526 = vmatmul.mubr.f32.gmra.mrb[0].mxu0 %v319
        %v527 = vpop.f32.mrb[0].mxu0
        %v528 = vadd.f32 %v304, %v527
        %v529 = vpop.f32.mrb[0].mxu0
        %530 = vmatprep.mubr.f32.mxu0 0.0
        %531 = vmatmul.mubr.f32.gmra.mrb[0].mxu0 %v322
        %v532 = vpop.f32.mrb[0].mxu0
        %v533 = vadd.f32 %v304, %v532
        %v534 = vpop.f32.mrb[0].mxu0
        %535 = vmatprep.mubr.f32.mxu0 0.0
        %536 = vmatmul.mubr.f32.gmra.mrb[0].mxu0 %v325
        %v537 = vpop.f32.mrb[0].mxu0
        %v538 = vadd.f32 %v304, %v537
        %v539 = vpop.f32.mrb[0].mxu0
        %540 = vmatprep.mubr.f32.mxu0 0.0
        %541 = vmatmul.mubr.f32.gmra.mrb[0].mxu0 %v328
        %v542 = vpop.f32.mrb[0].mxu0
        %v543 = vadd.f32 %v304, %v542
        %v544 = vpop.f32.mrb[0].mxu0
        %545 = vmatprep.mubr.f32.mxu0 0.0
        %546 = vmatmul.mubr.f32.gmra.mrb[0].mxu0 %v331
        %v547 = vpop.f32.mrb[0].mxu0
        %v548 = vadd.f32 %v304, %v547
        %v549 = vpop.f32.mrb[0].mxu0
        %550 = vdwg.mxu0
        %551 = vmatprep.subr.mxu0 0.0
        %552 = vmatpush1.xpose.msra.mxu0 %v402
        %553 = vmatprep.subr.mxu0 0.0
        %554 = vmatpush1.xpose.msra.mxu0 %v408
        %555 = vmatprep.subr.mxu0 0.0
        %556 = vmatpush1.xpose.msra.mxu0 0.0
        %557 = vmatprep.subr.mxu0 0.0
        %558 = vmatpush1.xpose.msra.mxu0 0.0
        %559 = vmatprep.subr.mxu0 0.0
        %560 = vmatpush1.xpose.msra.mxu0 0.0
        %561 = vmatprep.subr.mxu0 0.0
        %562 = vmatpush1.xpose.msra.mxu0 0.0
        %563 = vmatprep.subr.mxu0 0.0
        %564 = vmatpush1.xpose.msra.mxu0 0.0
        %565 = vmatprep.subr.mxu0 0.0
        %566 = vmatpush1.xpose.msra.mxu0 0.0
        %567 = vmatprep.subr.mxu0 0.0
        %568 = vmatpush1.xpose.msra.mxu0 0.0
        %569 = vmatprep.subr.mxu0 0.0
        %570 = vmatpush1.xpose.msra.mxu0 0.0
        %571 = vmatprep.subr.mxu0 0.0
        %572 = vmatpush1.xpose.msra.mxu0 0.0
        %573 = vmatprep.subr.mxu0 0.0
        %574 = vmatpush1.xpose.msra.mxu0 0.0
        %575 = vmatprep.subr.mxu0 0.0
        %576 = vmatpush1.xpose.msra.mxu0 0.0
        %577 = vmatprep.subr.mxu0 0.0
        %578 = vmatpush1.xpose.msra.mxu0 0.0
        %579 = vmatprep.subr.mxu0 0.0
        %580 = vmatpush1.xpose.msra.mxu0 0.0
        %581 = vmatprep.subr.mxu0 0.0
        %582 = vmatpush1.xpose.msra.mxu0 0.0
        %583 = vmatprep.subr.mxu0 0.0
        %584 = vmatpush1.xpose.msra.mxu0 0.0
        %585 = vmatprep.subr.mxu0 0.0
        %586 = vmatpush1.xpose.msra.mxu0 0.0
        %587 = vmatprep.subr.mxu0 0.0
        %588 = vmatpush1.xpose.msra.mxu0 0.0
        %589 = vmatprep.subr.mxu0 0.0
        %590 = vmatpush1.xpose.msra.mxu0 0.0
        %591 = vmatprep.subr.mxu0 0.0
        %592 = vmatpush1.xpose.msra.mxu0 0.0
        %593 = vmatprep.subr.mxu0 0.0
        %594 = vmatpush1.xpose.msra.mxu0 0.0
        %595 = vmatprep.subr.mxu0 0.0
        %596 = vmatpush1.xpose.msra.mxu0 0.0
        %597 = vmatprep.subr.mxu0 0.0
        %598 = vmatpush1.xpose.msra.mxu0 0.0
        %599 = vmatprep.subr.mxu0 0.0
        %600 = vmatpush1.xpose.msra.mxu0 0.0
        %601 = vmatprep.subr.mxu0 0.0
        %602 = vmatpush1.xpose.msra.mxu0 0.0
        %603 = vmatprep.subr.mxu0 0.0
        %604 = vmatpush1.xpose.msra.mxu0 0.0
        %605 = vmatprep.subr.mxu0 0.0
        %606 = vmatpush1.xpose.msra.mxu0 0.0
        %607 = vmatprep.subr.mxu0 0.0
        %608 = vmatpush1.xpose.msra.mxu0 0.0
        %609 = vmatprep.subr.mxu0 0.0
        %610 = vmatpush1.xpose.msra.mxu0 0.0
        %611 = vmatprep.subr.mxu0 0.0
        %612 = vmatpush1.xpose.msra.mxu0 0.0
        %613 = vmatprep.subr.mxu0 0.0
        %614 = vmatpush1.xpose.msra.mxu0 0.0
        %615 = vmatprep.mubr.f32.mxu0 0.0
        %616 = vmatmul.mubr.f32.gmra.mrb[0].mxu0 %v400
        %v617 = vpop.f32.mrb[0].mxu0
        %v618 = vadd.f32 0.0, %v617
        %v619 = vpop.f32.mrb[0].mxu0
        %620 = vmatprep.mubr.f32.mxu0 0.0
        %621 = vmatmul.mubr.f32.gmra.mrb[0].mxu0 %v406
        %v622 = vpop.f32.mrb[0].mxu0
        %v623 = vadd.f32 0.0, %v622
        %v624 = vpop.f32.mrb[0].mxu0
        %625 = vdwg.mxu0
        %626 = vmatprep.subr.mxu0 0.0
        %627 = vmatpush1.xpose.msra.mxu0 %v414
        %628 = vmatprep.subr.mxu0 0.0
        %629 = vmatpush1.xpose.msra.mxu0 %v420
        %630 = vmatprep.subr.mxu0 0.0
        %631 = vmatpush1.xpose.msra.mxu0 0.0
        %632 = vmatprep.subr.mxu0 0.0
        %633 = vmatpush1.xpose.msra.mxu0 0.0
        %634 = vmatprep.subr.mxu0 0.0
        %635 = vmatpush1.xpose.msra.mxu0 0.0
        %636 = vmatprep.subr.mxu0 0.0
        %637 = vmatpush1.xpose.msra.mxu0 0.0
        %638 = vmatprep.subr.mxu0 0.0
        %639 = vmatpush1.xpose.msra.mxu0 0.0
        %640 = vmatprep.subr.mxu0 0.0
        %641 = vmatpush1.xpose.msra.mxu0 0.0
        %642 = vmatprep.subr.mxu0 0.0
        %643 = vmatpush1.xpose.msra.mxu0 0.0
        %644 = vmatprep.subr.mxu0 0.0
        %645 = vmatpush1.xpose.msra.mxu0 0.0
        %646 = vmatprep.subr.mxu0 0.0
        %647 = vmatpush1.xpose.msra.mxu0 0.0
        %648 = vmatprep.subr.mxu0 0.0
        %649 = vmatpush1.xpose.msra.mxu0 0.0
        %650 = vmatprep.subr.mxu0 0.0
        %651 = vmatpush1.xpose.msra.mxu0 0.0
        %652 = vmatprep.subr.mxu0 0.0
        %653 = vmatpush1.xpose.msra.mxu0 0.0
        %654 = vmatprep.subr.mxu0 0.0
        %655 = vmatpush1.xpose.msra.mxu0 0.0
        %656 = vmatprep.subr.mxu0 0.0
        %657 = vmatpush1.xpose.msra.mxu0 0.0
        %658 = vmatprep.subr.mxu0 0.0
        %659 = vmatpush1.xpose.msra.mxu0 0.0
        %660 = vmatprep.subr.mxu0 0.0
        %661 = vmatpush1.xpose.msra.mxu0 0.0
        %662 = vmatprep.subr.mxu0 0.0
        %663 = vmatpush1.xpose.msra.mxu0 0.0
        %664 = vmatprep.subr.mxu0 0.0
        %665 = vmatpush1.xpose.msra.mxu0 0.0
        %666 = vmatprep.subr.mxu0 0.0
        %667 = vmatpush1.xpose.msra.mxu0 0.0
        %668 = vmatprep.subr.mxu0 0.0
        %669 = vmatpush1.xpose.msra.mxu0 0.0
        %670 = vmatprep.subr.mxu0 0.0
        %671 = vmatpush1.xpose.msra.mxu0 0.0
        %672 = vmatprep.subr.mxu0 0.0
        %673 = vmatpush1.xpose.msra.mxu0 0.0
        %674 = vmatprep.subr.mxu0 0.0
        %675 = vmatpush1.xpose.msra.mxu0 0.0
        %676 = vmatprep.subr.mxu0 0.0
        %677 = vmatpush1.xpose.msra.mxu0 0.0
        %678 = vmatprep.subr.mxu0 0.0
        %679 = vmatpush1.xpose.msra.mxu0 0.0
        %680 = vmatprep.subr.mxu0 0.0
        %681 = vmatpush1.xpose.msra.mxu0 0.0
        %682 = vmatprep.subr.mxu0 0.0
        %683 = vmatpush1.xpose.msra.mxu0 0.0
        %684 = vmatprep.subr.mxu0 0.0
        %685 = vmatpush1.xpose.msra.mxu0 0.0
        %686 = vmatprep.subr.mxu0 0.0
        %687 = vmatpush1.xpose.msra.mxu0 0.0
        %688 = vmatprep.subr.mxu0 0.0
        %689 = vmatpush1.xpose.msra.mxu0 0.0
        %690 = vmatprep.mubr.f32.mxu0 0.0
        %691 = vmatmul.mubr.f32.gmra.mrb[0].mxu0 %v412
        %v692 = vpop.f32.mrb[0].mxu0
        %v693 = vadd.f32 0.0, %v692
        %v694 = vpop.f32.mrb[0].mxu0
        %695 = vmatprep.mubr.f32.mxu0 0.0
        %696 = vmatmul.mubr.f32.gmra.mrb[0].mxu0 %v418
        %v697 = vpop.f32.mrb[0].mxu0
        %v698 = vadd.f32 0.0, %v697
        %v699 = vpop.f32.mrb[0].mxu0
        %700 = vdwg.mxu0
        %701 = vmatprep.subr.mxu0 0.0
        %702 = vmatpush1.xpose.msra.mxu0 %v426
        %703 = vmatprep.subr.mxu0 0.0
        %704 = vmatpush1.xpose.msra.mxu0 %v432
        %705 = vmatprep.subr.mxu0 0.0
        %706 = vmatpush1.xpose.msra.mxu0 0.0
        %707 = vmatprep.subr.mxu0 0.0
        %708 = vmatpush1.xpose.msra.mxu0 0.0
        %709 = vmatprep.subr.mxu0 0.0
        %710 = vmatpush1.xpose.msra.mxu0 0.0
        %711 = vmatprep.subr.mxu0 0.0
        %712 = vmatpush1.xpose.msra.mxu0 0.0
        %713 = vmatprep.subr.mxu0 0.0
        %714 = vmatpush1.xpose.msra.mxu0 0.0
        %715 = vmatprep.subr.mxu0 0.0
        %716 = vmatpush1.xpose.msra.mxu0 0.0
        %717 = vmatprep.subr.mxu0 0.0
        %718 = vmatpush1.xpose.msra.mxu0 0.0
        %719 = vmatprep.subr.mxu0 0.0
        %720 = vmatpush1.xpose.msra.mxu0 0.0
        %721 = vmatprep.subr.mxu0 0.0
        %722 = vmatpush1.xpose.msra.mxu0 0.0
        %723 = vmatprep.subr.mxu0 0.0
        %724 = vmatpush1.xpose.msra.mxu0 0.0
        %725 = vmatprep.subr.mxu0 0.0
        %726 = vmatpush1.xpose.msra.mxu0 0.0
        %727 = vmatprep.subr.mxu0 0.0
        %728 = vmatpush1.xpose.msra.mxu0 0.0
        %729 = vmatprep.subr.mxu0 0.0
        %730 = vmatpush1.xpose.msra.mxu0 0.0
        %731 = vmatprep.subr.mxu0 0.0
        %732 = vmatpush1.xpose.msra.mxu0 0.0
        %733 = vmatprep.subr.mxu0 0.0
        %734 = vmatpush1.xpose.msra.mxu0 0.0
        %735 = vmatprep.subr.mxu0 0.0
        %736 = vmatpush1.xpose.msra.mxu0 0.0
        %737 = vmatprep.subr.mxu0 0.0
        %738 = vmatpush1.xpose.msra.mxu0 0.0
        %739 = vmatprep.subr.mxu0 0.0
        %740 = vmatpush1.xpose.msra.mxu0 0.0
        %741 = vmatprep.subr.mxu0 0.0
        %742 = vmatpush1.xpose.msra.mxu0 0.0
        %743 = vmatprep.subr.mxu0 0.0
        %744 = vmatpush1.xpose.msra.mxu0 0.0
        %745 = vmatprep.subr.mxu0 0.0
        %746 = vmatpush1.xpose.msra.mxu0 0.0
        %747 = vmatprep.subr.mxu0 0.0
        %748 = vmatpush1.xpose.msra.mxu0 0.0
        %749 = vmatprep.subr.mxu0 0.0
        %750 = vmatpush1.xpose.msra.mxu0 0.0
        %751 = vmatprep.subr.mxu0 0.0
        %752 = vmatpush1.xpose.msra.mxu0 0.0
        %753 = vmatprep.subr.mxu0 0.0
        %754 = vmatpush1.xpose.msra.mxu0 0.0
        %755 = vmatprep.subr.mxu0 0.0
        %756 = vmatpush1.xpose.msra.mxu0 0.0
        %757 = vmatprep.subr.mxu0 0.0
        %758 = vmatpush1.xpose.msra.mxu0 0.0
        %759 = vmatprep.subr.mxu0 0.0
        %760 = vmatpush1.xpose.msra.mxu0 0.0
        %761 = vmatprep.subr.mxu0 0.0
        %762 = vmatpush1.xpose.msra.mxu0 0.0
        %763 = vmatprep.subr.mxu0 0.0
        %764 = vmatpush1.xpose.msra.mxu0 0.0
        %765 = vmatprep.mubr.f32.mxu0 0.0
        %766 = vmatmul.mubr.f32.gmra.mrb[0].mxu0 %v424
        %v767 = vpop.f32.mrb[0].mxu0
        %v768 = vadd.f32 0.0, %v767
        %v769 = vpop.f32.mrb[0].mxu0
        %770 = vmatprep.mubr.f32.mxu0 0.0
        %771 = vmatmul.mubr.f32.gmra.mrb[0].mxu0 %v430
        %v772 = vpop.f32.mrb[0].mxu0
        %v773 = vadd.f32 0.0, %v772
        %v774 = vpop.f32.mrb[0].mxu0
        %775 = vdwg.mxu0
        %776 = vmatprep.subr.mxu0 0.0
        %777 = vmatpush1.xpose.msra.mxu0 %v438
        %778 = vmatprep.subr.mxu0 0.0
        %779 = vmatpush1.xpose.msra.mxu0 %v444
        %780 = vmatprep.subr.mxu0 0.0
        %781 = vmatpush1.xpose.msra.mxu0 0.0
        %782 = vmatprep.subr.mxu0 0.0
        %783 = vmatpush1.xpose.msra.mxu0 0.0
        %784 = vmatprep.subr.mxu0 0.0
        %785 = vmatpush1.xpose.msra.mxu0 0.0
        %786 = vmatprep.subr.mxu0 0.0
        %787 = vmatpush1.xpose.msra.mxu0 0.0
        %788 = vmatprep.subr.mxu0 0.0
        %789 = vmatpush1.xpose.msra.mxu0 0.0
        %790 = vmatprep.subr.mxu0 0.0
        %791 = vmatpush1.xpose.msra.mxu0 0.0
        %792 = vmatprep.subr.mxu0 0.0
        %793 = vmatpush1.xpose.msra.mxu0 0.0
        %794 = vmatprep.subr.mxu0 0.0
        %795 = vmatpush1.xpose.msra.mxu0 0.0
        %796 = vmatprep.subr.mxu0 0.0
        %797 = vmatpush1.xpose.msra.mxu0 0.0
        %798 = vmatprep.subr.mxu0 0.0
        %799 = vmatpush1.xpose.msra.mxu0 0.0
        %800 = vmatprep.subr.mxu0 0.0
        %801 = vmatpush1.xpose.msra.mxu0 0.0
        %802 = vmatprep.subr.mxu0 0.0
        %803 = vmatpush1.xpose.msra.mxu0 0.0
        %804 = vmatprep.subr.mxu0 0.0
        %805 = vmatpush1.xpose.msra.mxu0 0.0
        %806 = vmatprep.subr.mxu0 0.0
        %807 = vmatpush1.xpose.msra.mxu0 0.0
        %808 = vmatprep.subr.mxu0 0.0
        %809 = vmatpush1.xpose.msra.mxu0 0.0
        %810 = vmatprep.subr.mxu0 0.0
        %811 = vmatpush1.xpose.msra.mxu0 0.0
        %812 = vmatprep.subr.mxu0 0.0
        %813 = vmatpush1.xpose.msra.mxu0 0.0
        %814 = vmatprep.subr.mxu0 0.0
        %815 = vmatpush1.xpose.msra.mxu0 0.0
        %816 = vmatprep.subr.mxu0 0.0
        %817 = vmatpush1.xpose.msra.mxu0 0.0
        %818 = vmatprep.subr.mxu0 0.0
        %819 = vmatpush1.xpose.msra.mxu0 0.0
        %820 = vmatprep.subr.mxu0 0.0
        %821 = vmatpush1.xpose.msra.mxu0 0.0
        %822 = vmatprep.subr.mxu0 0.0
        %823 = vmatpush1.xpose.msra.mxu0 0.0
        %824 = vmatprep.subr.mxu0 0.0
        %825 = vmatpush1.xpose.msra.mxu0 0.0
        %826 = vmatprep.subr.mxu0 0.0
        %827 = vmatpush1.xpose.msra.mxu0 0.0
        %828 = vmatprep.subr.mxu0 0.0
        %829 = vmatpush1.xpose.msra.mxu0 0.0
        %830 = vmatprep.subr.mxu0 0.0
        %831 = vmatpush1.xpose.msra.mxu0 0.0
        %832 = vmatprep.subr.mxu0 0.0
        %833 = vmatpush1.xpose.msra.mxu0 0.0
        %834 = vmatprep.subr.mxu0 0.0
        %835 = vmatpush1.xpose.msra.mxu0 0.0
        %836 = vmatprep.subr.mxu0 0.0
        %837 = vmatpush1.xpose.msra.mxu0 0.0
        %838 = vmatprep.subr.mxu0 0.0
        %839 = vmatpush1.xpose.msra.mxu0 0.0
        %840 = vmatprep.mubr.f32.mxu0 0.0
        %841 = vmatmul.mubr.f32.gmra.mrb[0].mxu0 %v436
        %v842 = vpop.f32.mrb[0].mxu0
        %v843 = vadd.f32 0.0, %v842
        %v844 = vpop.f32.mrb[0].mxu0
        %845 = vmatprep.mubr.f32.mxu0 0.0
        %846 = vmatmul.mubr.f32.gmra.mrb[0].mxu0 %v442
        %v847 = vpop.f32.mrb[0].mxu0
        %v848 = vadd.f32 0.0, %v847
        %v849 = vpop.f32.mrb[0].mxu0
        %850 = vdwg.mxu0
        %v851 = vld [vmem:[%s5] sm:$0xff]
        %v852 = vld [vmem:[%s5 + $0x8] sm:$0xff]
        %v853 = vmul.f32 %v618, %v851
        %v854 = vmul.f32 %v623, %v852
        %v855 = vmul.f32 %v693, %v851
        %v856 = vmul.f32 %v698, %v852
        %v857 = vmul.f32 %v768, %v851
        %v858 = vmul.f32 %v773, %v852
        %v859 = vmul.f32 %v843, %v851
        %v860 = vmul.f32 %v848, %v852
        %vm861 = vcmask 130048
        %v862 = vsel %vm861, %v853, -inf
        %863 = vmax.xlane.f32.xlu0 %v862
        %v864 = vpop.xlane.xlu0 %863
        %v865 = vsel %vm861, %v854, -inf
        %866 = vmax.xlane.f32.xlu0 %v865
        %v867 = vpop.xlane.xlu0 %866
        %v868 = vsel %vm861, %v855, -inf
        %869 = vmax.xlane.f32.xlu0 %v868
        %v870 = vpop.xlane.xlu0 %869
        %v871 = vsel %vm861, %v856, -inf
        %872 = vmax.xlane.f32.xlu0 %v871
        %v873 = vpop.xlane.xlu0 %872
        %v874 = vsel %vm861, %v857, -inf
        %875 = vmax.xlane.f32.xlu0 %v874
        %v876 = vpop.xlane.xlu0 %875
        %v877 = vsel %vm861, %v858, -inf
        %878 = vmax.xlane.f32.xlu0 %v877
        %v879 = vpop.xlane.xlu0 %878
        %v880 = vsel %vm861, %v859, -inf
        %881 = vmax.xlane.f32.xlu0 %v880
        %v882 = vpop.xlane.xlu0 %881
        %v883 = vsel %vm861, %v860, -inf
        %884 = vmax.xlane.f32.xlu0 %v883
        %v885 = vpop.xlane.xlu0 %884
        %v886 = vsub.f32 %v853, %v864
        %v887 = vsub.f32 %v854, %v867
        %v888 = vsub.f32 %v855, %v870
        %v889 = vsub.f32 %v856, %v873
        %v890 = vsub.f32 %v857, %v876
        %v891 = vsub.f32 %v858, %v879
        %v892 = vsub.f32 %v859, %v882
        %v893 = vsub.f32 %v860, %v885
        %v894 = vmul.f32 %v886, 1.442695
        %v895 = vpow.pop %v894
        %v896 = vmul.f32 %v887, 1.442695
        %v897 = vpow.pop %v896
        %v898 = vmul.f32 %v888, 1.442695
        %v899 = vpow.pop %v898
        %v900 = vmul.f32 %v889, 1.442695
        %v901 = vpow.pop %v900
        %v902 = vmul.f32 %v890, 1.442695
        %v903 = vpow.pop %v902
        %v904 = vmul.f32 %v891, 1.442695
        %v905 = vpow.pop %v904
        %v906 = vmul.f32 %v892, 1.442695
        %v907 = vpow.pop %v906
        %v908 = vmul.f32 %v893, 1.442695
        %v909 = vpow.pop %v908
        %v910 = vsel %vm861, %v895, 0.0
        %911 = vadd.xlane.f32.xlu0 %v910
        %v912 = vpop.xlane.xlu0 %911
        %v913 = vsel %vm861, %v897, 0.0
        %914 = vadd.xlane.f32.xlu0 %v913
        %v915 = vpop.xlane.xlu0 %914
        %v916 = vsel %vm861, %v899, 0.0
        %917 = vadd.xlane.f32.xlu0 %v916
        %v918 = vpop.xlane.xlu0 %917
        %v919 = vsel %vm861, %v901, 0.0
        %920 = vadd.xlane.f32.xlu0 %v919
        %v921 = vpop.xlane.xlu0 %920
        %v922 = vsel %vm861, %v903, 0.0
        %923 = vadd.xlane.f32.xlu0 %v922
        %v924 = vpop.xlane.xlu0 %923
        %v925 = vsel %vm861, %v905, 0.0
        %926 = vadd.xlane.f32.xlu0 %v925
        %v927 = vpop.xlane.xlu0 %926
        %v928 = vsel %vm861, %v907, 0.0
        %929 = vadd.xlane.f32.xlu0 %v928
        %v930 = vpop.xlane.xlu0 %929
        %v931 = vsel %vm861, %v909, 0.0
        %932 = vadd.xlane.f32.xlu0 %v931
        %v933 = vpop.xlane.xlu0 %932
        %v934 = vrcp.pop %v912
        %v935 = vrcp.pop %v915
        %v936 = vrcp.pop %v918
        %v937 = vrcp.pop %v921
        %v938 = vrcp.pop %v924
        %v939 = vrcp.pop %v927
        %v940 = vrcp.pop %v930
        %v941 = vrcp.pop %v933
        %v942 = vmul.f32 %v895, %v934
        %v943 = vmul.f32 %v897, %v935
        %v944 = vmul.f32 %v899, %v936
        %v945 = vmul.f32 %v901, %v937
        %v946 = vmul.f32 %v903, %v938
        %v947 = vmul.f32 %v905, %v939
        %v948 = vmul.f32 %v907, %v940
        %v949 = vmul.f32 %v909, %v941
        %v951 = vsel %vm861, %v942, 0
        %v954 = vsel %vm861, %v943, 0
        %956 = vmatprep.subr.mxu0 0.0
        %957 = vmatpush1.msra.mxu0 %v513
        %958 = vmatprep.subr.mxu0 0.0
        %959 = vmatpush1.msra.mxu0 %v518
        %960 = vmatprep.subr.mxu0 0.0
        %961 = vmatpush1.msra.mxu0 0.0
        %962 = vmatprep.subr.mxu0 0.0
        %963 = vmatpush1.msra.mxu0 0.0
        %964 = vmatprep.subr.mxu0 0.0
        %965 = vmatpush1.msra.mxu0 0.0
        %966 = vmatprep.subr.mxu0 0.0
        %967 = vmatpush1.msra.mxu0 0.0
        %968 = vmatprep.subr.mxu0 0.0
        %969 = vmatpush1.msra.mxu0 0.0
        %970 = vmatprep.subr.mxu0 0.0
        %971 = vmatpush1.msra.mxu0 0.0
        %972 = vmatprep.subr.mxu0 0.0
        %973 = vmatpush1.msra.mxu0 0.0
        %974 = vmatprep.subr.mxu0 0.0
        %975 = vmatpush1.msra.mxu0 0.0
        %976 = vmatprep.subr.mxu0 0.0
        %977 = vmatpush1.msra.mxu0 0.0
        %978 = vmatprep.subr.mxu0 0.0
        %979 = vmatpush1.msra.mxu0 0.0
        %980 = vmatprep.subr.mxu0 0.0
        %981 = vmatpush1.msra.mxu0 0.0
        %982 = vmatprep.subr.mxu0 0.0
        %983 = vmatpush1.msra.mxu0 0.0
        %984 = vmatprep.subr.mxu0 0.0
        %985 = vmatpush1.msra.mxu0 0.0
        %986 = vmatprep.subr.mxu0 0.0
        %987 = vmatpush1.msra.mxu0 0.0
        %988 = vmatprep.subr.mxu0 0.0
        %989 = vmatpush1.msra.mxu0 0.0
        %990 = vmatprep.subr.mxu0 0.0
        %991 = vmatpush1.msra.mxu0 0.0
        %992 = vmatprep.subr.mxu0 0.0
        %993 = vmatpush1.msra.mxu0 0.0
        %994 = vmatprep.subr.mxu0 0.0
        %995 = vmatpush1.msra.mxu0 0.0
        %996 = vmatprep.subr.mxu0 0.0
        %997 = vmatpush1.msra.mxu0 0.0
        %998 = vmatprep.subr.mxu0 0.0
        %999 = vmatpush1.msra.mxu0 0.0
        %1000 = vmatprep.subr.mxu0 0.0
        %1001 = vmatpush1.msra.mxu0 0.0
        %1002 = vmatprep.subr.mxu0 0.0
        %1003 = vmatpush1.msra.mxu0 0.0
        %1004 = vmatprep.subr.mxu0 0.0
        %1005 = vmatpush1.msra.mxu0 0.0
        %1006 = vmatprep.subr.mxu0 0.0
        %1007 = vmatpush1.msra.mxu0 0.0
        %1008 = vmatprep.subr.mxu0 0.0
        %1009 = vmatpush1.msra.mxu0 0.0
        %1010 = vmatprep.subr.mxu0 0.0
        %1011 = vmatpush1.msra.mxu0 0.0
        %1012 = vmatprep.subr.mxu0 0.0
        %1013 = vmatpush1.msra.mxu0 0.0
        %1014 = vmatprep.subr.mxu0 0.0
        %1015 = vmatpush1.msra.mxu0 0.0
        %1016 = vmatprep.subr.mxu0 0.0
        %1017 = vmatpush1.msra.mxu0 0.0
        %1018 = vmatprep.subr.mxu0 0.0
        %1019 = vmatpush1.msra.mxu0 0.0
        %1020 = vmatprep.mubr.f32.mxu0 0.0
        %1021 = vmatmul.mubr.f32.gmra.mrb[0].mxu0 %v951
        %v1022 = vpop.f32.mrb[0].mxu0
        %v1023 = vadd.f32 0.0, %v1022
        %v1024 = vpop.f32.mrb[0].mxu0
        %1025 = vmatprep.mubr.f32.mxu0 0.0
        %1026 = vmatmul.mubr.f32.gmra.mrb[0].mxu0 %v954
        %v1027 = vpop.f32.mrb[0].mxu0
        %v1028 = vadd.f32 0.0, %v1027
        %v1029 = vpop.f32.mrb[0].mxu0
        %1030 = vdwg.mxu0
        %v1032 = vsel %vm861, %v944, 0
        %v1035 = vsel %vm861, %v945, 0
        %1037 = vmatprep.subr.mxu0 0.0
        %1038 = vmatpush1.msra.mxu0 %v523
        %1039 = vmatprep.subr.mxu0 0.0
        %1040 = vmatpush1.msra.mxu0 %v528
        %1041 = vmatprep.subr.mxu0 0.0
        %1042 = vmatpush1.msra.mxu0 0.0
        %1043 = vmatprep.subr.mxu0 0.0
        %1044 = vmatpush1.msra.mxu0 0.0
        %1045 = vmatprep.subr.mxu0 0.0
        %1046 = vmatpush1.msra.mxu0 0.0
        %1047 = vmatprep.subr.mxu0 0.0
        %1048 = vmatpush1.msra.mxu0 0.0
        %1049 = vmatprep.subr.mxu0 0.0
        %1050 = vmatpush1.msra.mxu0 0.0
        %1051 = vmatprep.subr.mxu0 0.0
        %1052 = vmatpush1.msra.mxu0 0.0
        %1053 = vmatprep.subr.mxu0 0.0
        %1054 = vmatpush1.msra.mxu0 0.0
        %1055 = vmatprep.subr.mxu0 0.0
        %1056 = vmatpush1.msra.mxu0 0.0
        %1057 = vmatprep.subr.mxu0 0.0
        %1058 = vmatpush1.msra.mxu0 0.0
        %1059 = vmatprep.subr.mxu0 0.0
        %1060 = vmatpush1.msra.mxu0 0.0
        %1061 = vmatprep.subr.mxu0 0.0
        %1062 = vmatpush1.msra.mxu0 0.0
        %1063 = vmatprep.subr.mxu0 0.0
        %1064 = vmatpush1.msra.mxu0 0.0
        %1065 = vmatprep.subr.mxu0 0.0
        %1066 = vmatpush1.msra.mxu0 0.0
        %1067 = vmatprep.subr.mxu0 0.0
        %1068 = vmatpush1.msra.mxu0 0.0
        %1069 = vmatprep.subr.mxu0 0.0
        %1070 = vmatpush1.msra.mxu0 0.0
        %1071 = vmatprep.subr.mxu0 0.0
        %1072 = vmatpush1.msra.mxu0 0.0
        %1073 = vmatprep.subr.mxu0 0.0
        %1074 = vmatpush1.msra.mxu0 0.0
        %1075 = vmatprep.subr.mxu0 0.0
        %1076 = vmatpush1.msra.mxu0 0.0
        %1077 = vmatprep.subr.mxu0 0.0
        %1078 = vmatpush1.msra.mxu0 0.0
        %1079 = vmatprep.subr.mxu0 0.0
        %1080 = vmatpush1.msra.mxu0 0.0
        %1081 = vmatprep.subr.mxu0 0.0
        %1082 = vmatpush1.msra.mxu0 0.0
        %1083 = vmatprep.subr.mxu0 0.0
        %1084 = vmatpush1.msra.mxu0 0.0
        %1085 = vmatprep.subr.mxu0 0.0
        %1086 = vmatpush1.msra.mxu0 0.0
        %1087 = vmatprep.subr.mxu0 0.0
        %1088 = vmatpush1.msra.mxu0 0.0
        %1089 = vmatprep.subr.mxu0 0.0
        %1090 = vmatpush1.msra.mxu0 0.0
        %1091 = vmatprep.subr.mxu0 0.0
        %1092 = vmatpush1.msra.mxu0 0.0
        %1093 = vmatprep.subr.mxu0 0.0
        %1094 = vmatpush1.msra.mxu0 0.0
        %1095 = vmatprep.subr.mxu0 0.0
        %1096 = vmatpush1.msra.mxu0 0.0
        %1097 = vmatprep.subr.mxu0 0.0
        %1098 = vmatpush1.msra.mxu0 0.0
        %1099 = vmatprep.subr.mxu0 0.0
        %1100 = vmatpush1.msra.mxu0 0.0
        %1101 = vmatprep.mubr.f32.mxu0 0.0
        %1102 = vmatmul.mubr.f32.gmra.mrb[0].mxu0 %v1032
        %v1103 = vpop.f32.mrb[0].mxu0
        %v1104 = vadd.f32 0.0, %v1103
        %v1105 = vpop.f32.mrb[0].mxu0
        %1106 = vmatprep.mubr.f32.mxu0 0.0
        %1107 = vmatmul.mubr.f32.gmra.mrb[0].mxu0 %v1035
        %v1108 = vpop.f32.mrb[0].mxu0
        %v1109 = vadd.f32 0.0, %v1108
        %v1110 = vpop.f32.mrb[0].mxu0
        %1111 = vdwg.mxu0
        %v1113 = vsel %vm861, %v946, 0
        %v1116 = vsel %vm861, %v947, 0
        %1118 = vmatprep.subr.mxu0 0.0
        %1119 = vmatpush1.msra.mxu0 %v533
        %1120 = vmatprep.subr.mxu0 0.0
        %1121 = vmatpush1.msra.mxu0 %v538
        %1122 = vmatprep.subr.mxu0 0.0
        %1123 = vmatpush1.msra.mxu0 0.0
        %1124 = vmatprep.subr.mxu0 0.0
        %1125 = vmatpush1.msra.mxu0 0.0
        %1126 = vmatprep.subr.mxu0 0.0
        %1127 = vmatpush1.msra.mxu0 0.0
        %1128 = vmatprep.subr.mxu0 0.0
        %1129 = vmatpush1.msra.mxu0 0.0
        %1130 = vmatprep.subr.mxu0 0.0
        %1131 = vmatpush1.msra.mxu0 0.0
        %1132 = vmatprep.subr.mxu0 0.0
        %1133 = vmatpush1.msra.mxu0 0.0
        %1134 = vmatprep.subr.mxu0 0.0
        %1135 = vmatpush1.msra.mxu0 0.0
        %1136 = vmatprep.subr.mxu0 0.0
        %1137 = vmatpush1.msra.mxu0 0.0
        %1138 = vmatprep.subr.mxu0 0.0
        %1139 = vmatpush1.msra.mxu0 0.0
        %1140 = vmatprep.subr.mxu0 0.0
        %1141 = vmatpush1.msra.mxu0 0.0
        %1142 = vmatprep.subr.mxu0 0.0
        %1143 = vmatpush1.msra.mxu0 0.0
        %1144 = vmatprep.subr.mxu0 0.0
        %1145 = vmatpush1.msra.mxu0 0.0
        %1146 = vmatprep.subr.mxu0 0.0
        %1147 = vmatpush1.msra.mxu0 0.0
        %1148 = vmatprep.subr.mxu0 0.0
        %1149 = vmatpush1.msra.mxu0 0.0
        %1150 = vmatprep.subr.mxu0 0.0
        %1151 = vmatpush1.msra.mxu0 0.0
        %1152 = vmatprep.subr.mxu0 0.0
        %1153 = vmatpush1.msra.mxu0 0.0
        %1154 = vmatprep.subr.mxu0 0.0
        %1155 = vmatpush1.msra.mxu0 0.0
        %1156 = vmatprep.subr.mxu0 0.0
        %1157 = vmatpush1.msra.mxu0 0.0
        %1158 = vmatprep.subr.mxu0 0.0
        %1159 = vmatpush1.msra.mxu0 0.0
        %1160 = vmatprep.subr.mxu0 0.0
        %1161 = vmatpush1.msra.mxu0 0.0
        %1162 = vmatprep.subr.mxu0 0.0
        %1163 = vmatpush1.msra.mxu0 0.0
        %1164 = vmatprep.subr.mxu0 0.0
        %1165 = vmatpush1.msra.mxu0 0.0
        %1166 = vmatprep.subr.mxu0 0.0
        %1167 = vmatpush1.msra.mxu0 0.0
        %1168 = vmatprep.subr.mxu0 0.0
        %1169 = vmatpush1.msra.mxu0 0.0
        %1170 = vmatprep.subr.mxu0 0.0
        %1171 = vmatpush1.msra.mxu0 0.0
        %1172 = vmatprep.subr.mxu0 0.0
        %1173 = vmatpush1.msra.mxu0 0.0
        %1174 = vmatprep.subr.mxu0 0.0
        %1175 = vmatpush1.msra.mxu0 0.0
        %1176 = vmatprep.subr.mxu0 0.0
        %1177 = vmatpush1.msra.mxu0 0.0
        %1178 = vmatprep.subr.mxu0 0.0
        %1179 = vmatpush1.msra.mxu0 0.0
        %1180 = vmatprep.subr.mxu0 0.0
        %1181 = vmatpush1.msra.mxu0 0.0
        %1182 = vmatprep.mubr.f32.mxu0 0.0
        %1183 = vmatmul.mubr.f32.gmra.mrb[0].mxu0 %v1113
        %v1184 = vpop.f32.mrb[0].mxu0
        %v1185 = vadd.f32 0.0, %v1184
        %v1186 = vpop.f32.mrb[0].mxu0
        %1187 = vmatprep.mubr.f32.mxu0 0.0
        %1188 = vmatmul.mubr.f32.gmra.mrb[0].mxu0 %v1116
        %v1189 = vpop.f32.mrb[0].mxu0
        %v1190 = vadd.f32 0.0, %v1189
        %v1191 = vpop.f32.mrb[0].mxu0
        %1192 = vdwg.mxu0
        %v1194 = vsel %vm861, %v948, 0
        %v1197 = vsel %vm861, %v949, 0
        %1199 = vmatprep.subr.mxu0 0.0
        %1200 = vmatpush1.msra.mxu0 %v543
        %1201 = vmatprep.subr.mxu0 0.0
        %1202 = vmatpush1.msra.mxu0 %v548
        %1203 = vmatprep.subr.mxu0 0.0
        %1204 = vmatpush1.msra.mxu0 0.0
        %1205 = vmatprep.subr.mxu0 0.0
        %1206 = vmatpush1.msra.mxu0 0.0
        %1207 = vmatprep.subr.mxu0 0.0
        %1208 = vmatpush1.msra.mxu0 0.0
        %1209 = vmatprep.subr.mxu0 0.0
        %1210 = vmatpush1.msra.mxu0 0.0
        %1211 = vmatprep.subr.mxu0 0.0
        %1212 = vmatpush1.msra.mxu0 0.0
        %1213 = vmatprep.subr.mxu0 0.0
        %1214 = vmatpush1.msra.mxu0 0.0
        %1215 = vmatprep.subr.mxu0 0.0
        %1216 = vmatpush1.msra.mxu0 0.0
        %1217 = vmatprep.subr.mxu0 0.0
        %1218 = vmatpush1.msra.mxu0 0.0
        %1219 = vmatprep.subr.mxu0 0.0
        %1220 = vmatpush1.msra.mxu0 0.0
        %1221 = vmatprep.subr.mxu0 0.0
        %1222 = vmatpush1.msra.mxu0 0.0
        %1223 = vmatprep.subr.mxu0 0.0
        %1224 = vmatpush1.msra.mxu0 0.0
        %1225 = vmatprep.subr.mxu0 0.0
        %1226 = vmatpush1.msra.mxu0 0.0
        %1227 = vmatprep.subr.mxu0 0.0
        %1228 = vmatpush1.msra.mxu0 0.0
        %1229 = vmatprep.subr.mxu0 0.0
        %1230 = vmatpush1.msra.mxu0 0.0
        %1231 = vmatprep.subr.mxu0 0.0
        %1232 = vmatpush1.msra.mxu0 0.0
        %1233 = vmatprep.subr.mxu0 0.0
        %1234 = vmatpush1.msra.mxu0 0.0
        %1235 = vmatprep.subr.mxu0 0.0
        %1236 = vmatpush1.msra.mxu0 0.0
        %1237 = vmatprep.subr.mxu0 0.0
        %1238 = vmatpush1.msra.mxu0 0.0
        %1239 = vmatprep.subr.mxu0 0.0
        %1240 = vmatpush1.msra.mxu0 0.0
        %1241 = vmatprep.subr.mxu0 0.0
        %1242 = vmatpush1.msra.mxu0 0.0
        %1243 = vmatprep.subr.mxu0 0.0
        %1244 = vmatpush1.msra.mxu0 0.0
        %1245 = vmatprep.subr.mxu0 0.0
        %1246 = vmatpush1.msra.mxu0 0.0
        %1247 = vmatprep.subr.mxu0 0.0
        %1248 = vmatpush1.msra.mxu0 0.0
        %1249 = vmatprep.subr.mxu0 0.0
        %1250 = vmatpush1.msra.mxu0 0.0
        %1251 = vmatprep.subr.mxu0 0.0
        %1252 = vmatpush1.msra.mxu0 0.0
        %1253 = vmatprep.subr.mxu0 0.0
        %1254 = vmatpush1.msra.mxu0 0.0
        %1255 = vmatprep.subr.mxu0 0.0
        %1256 = vmatpush1.msra.mxu0 0.0
        %1257 = vmatprep.subr.mxu0 0.0
        %1258 = vmatpush1.msra.mxu0 0.0
        %1259 = vmatprep.subr.mxu0 0.0
        %1260 = vmatpush1.msra.mxu0 0.0
        %1261 = vmatprep.subr.mxu0 0.0
        %1262 = vmatpush1.msra.mxu0 0.0
        %1263 = vmatprep.mubr.f32.mxu0 0.0
        %1264 = vmatmul.mubr.f32.gmra.mrb[0].mxu0 %v1194
        %v1265 = vpop.f32.mrb[0].mxu0
        %v1266 = vadd.f32 0.0, %v1265
        %v1267 = vpop.f32.mrb[0].mxu0
        %1268 = vmatprep.mubr.f32.mxu0 0.0
        %1269 = vmatmul.mubr.f32.gmra.mrb[0].mxu0 %v1197
        %v1270 = vpop.f32.mrb[0].mxu0
        %v1271 = vadd.f32 0.0, %v1270
        %v1272 = vpop.f32.mrb[0].mxu0
        %1273 = vdwg.mxu0
        %v1274 = vld [vmem:[%s3] sm:$0xff]
        %v1275 = vld [vmem:[%s3 + $0x8] sm:$0xff]
        %v1276 = vld [vmem:[%s3 + $0x10] sm:$0xff]
        %v1277 = vld [vmem:[%s3 + $0x18] sm:$0xff]
        %v1278 = vld [vmem:[%s3 + $0x20] sm:$0xff]
        %v1279 = vld [vmem:[%s3 + $0x28] sm:$0xff]
        %v1280 = vld [vmem:[%s3 + $0x30] sm:$0xff]
        %v1281 = vld [vmem:[%s3 + $0x38] sm:$0xff]
        %v1282 = vld [vmem:[%s3 + $0x40] sm:$0xff]
        %v1283 = vld [vmem:[%s3 + $0x48] sm:$0xff]
        %v1284 = vld [vmem:[%s3 + $0x50] sm:$0xff]
        %v1285 = vld [vmem:[%s3 + $0x58] sm:$0xff]
        %v1286 = vld [vmem:[%s3 + $0x60] sm:$0xff]
        %v1287 = vld [vmem:[%s3 + $0x68] sm:$0xff]
        %v1288 = vld [vmem:[%s3 + $0x70] sm:$0xff]
        %v1289 = vld [vmem:[%s3 + $0x78] sm:$0xff]
        %v1290 = vld [vmem:[%s4] sm:$0x1]
        %v1292 = vlaneseq
        %v1293 = vshrl.u32 %v1292, 7
        %v1294 = vsub.s32 0, %v1293
        %v1295 = vrot.slane %v1290, %v1294
        %1297 = vmatprep.subr.mxu0 0.0
        %1298 = vmatpush1.msra.mxu0 %v1274
        %1299 = vmatprep.subr.mxu0 0.0
        %1300 = vmatpush1.msra.mxu0 %v1275
        %1301 = vmatprep.subr.mxu0 0.0
        %1302 = vmatpush1.msra.mxu0 %v1276
        %1303 = vmatprep.subr.mxu0 0.0
        %1304 = vmatpush1.msra.mxu0 %v1277
        %1305 = vmatprep.subr.mxu0 0.0
        %1306 = vmatpush1.msra.mxu0 %v1278
        %1307 = vmatprep.subr.mxu0 0.0
        %1308 = vmatpush1.msra.mxu0 %v1279
        %1309 = vmatprep.subr.mxu0 0.0
        %1310 = vmatpush1.msra.mxu0 %v1280
        %1311 = vmatprep.subr.mxu0 0.0
        %1312 = vmatpush1.msra.mxu0 %v1281
        %1313 = vmatprep.subr.mxu0 0.0
        %1314 = vmatpush1.msra.mxu0 %v1282
        %1315 = vmatprep.subr.mxu0 0.0
        %1316 = vmatpush1.msra.mxu0 %v1283
        %1317 = vmatprep.subr.mxu0 0.0
        %1318 = vmatpush1.msra.mxu0 %v1284
        %1319 = vmatprep.subr.mxu0 0.0
        %1320 = vmatpush1.msra.mxu0 %v1285
        %1321 = vmatprep.subr.mxu0 0.0
        %1322 = vmatpush1.msra.mxu0 %v1286
        %1323 = vmatprep.subr.mxu0 0.0
        %1324 = vmatpush1.msra.mxu0 %v1287
        %1325 = vmatprep.subr.mxu0 0.0
        %1326 = vmatpush1.msra.mxu0 %v1288
        %1327 = vmatprep.subr.mxu0 0.0
        %1328 = vmatpush1.msra.mxu0 %v1289
        %1329 = vmatprep.subr.mxu0 0.0
        %1330 = vmatpush1.msra.mxu0 0.0
        %1331 = vmatprep.subr.mxu0 0.0
        %1332 = vmatpush1.msra.mxu0 0.0
        %1333 = vmatprep.subr.mxu0 0.0
        %1334 = vmatpush1.msra.mxu0 0.0
        %1335 = vmatprep.subr.mxu0 0.0
        %1336 = vmatpush1.msra.mxu0 0.0
        %1337 = vmatprep.subr.mxu0 0.0
        %1338 = vmatpush1.msra.mxu0 0.0
        %1339 = vmatprep.subr.mxu0 0.0
        %1340 = vmatpush1.msra.mxu0 0.0
        %1341 = vmatprep.subr.mxu0 0.0
        %1342 = vmatpush1.msra.mxu0 0.0
        %1343 = vmatprep.subr.mxu0 0.0
        %1344 = vmatpush1.msra.mxu0 0.0
        %1345 = vmatprep.subr.mxu0 0.0
        %1346 = vmatpush1.msra.mxu0 0.0
        %1347 = vmatprep.subr.mxu0 0.0
        %1348 = vmatpush1.msra.mxu0 0.0
        %1349 = vmatprep.subr.mxu0 0.0
        %1350 = vmatpush1.msra.mxu0 0.0
        %1351 = vmatprep.subr.mxu0 0.0
        %1352 = vmatpush1.msra.mxu0 0.0
        %1353 = vmatprep.subr.mxu0 0.0
        %1354 = vmatpush1.msra.mxu0 0.0
        %1355 = vmatprep.subr.mxu0 0.0
        %1356 = vmatpush1.msra.mxu0 0.0
        %1357 = vmatprep.subr.mxu0 0.0
        %1358 = vmatpush1.msra.mxu0 0.0
        %1359 = vmatprep.subr.mxu0 0.0
        %1360 = vmatpush1.msra.mxu0 0.0
        %1361 = vmatprep.mubr.f32.mxu0 0.0
        %1362 = vmatmul.mubr.f32.gmra.mrb[0].mxu0 %v1023
        %v1363 = vpop.f32.mrb[0].mxu0
        %v1364 = vadd.f32 %v1295, %v1363
        %v1365 = vpop.f32.mrb[0].mxu0
        %1366 = vmatprep.mubr.f32.mxu0 0.0
        %1367 = vmatmul.mubr.f32.gmra.mrb[0].mxu0 %v1028
        %v1368 = vpop.f32.mrb[0].mxu0
        %v1369 = vadd.f32 %v1295, %v1368
        %v1370 = vpop.f32.mrb[0].mxu0
        %1371 = vmatprep.mubr.f32.mxu0 0.0
        %1372 = vmatmul.mubr.f32.gmra.mrb[0].mxu0 %v1104
        %v1373 = vpop.f32.mrb[0].mxu0
        %v1374 = vadd.f32 %v1295, %v1373
        %v1375 = vpop.f32.mrb[0].mxu0
        %1376 = vmatprep.mubr.f32.mxu0 0.0
        %1377 = vmatmul.mubr.f32.gmra.mrb[0].mxu0 %v1109
        %v1378 = vpop.f32.mrb[0].mxu0
        %v1379 = vadd.f32 %v1295, %v1378
        %v1380 = vpop.f32.mrb[0].mxu0
        %1381 = vmatprep.mubr.f32.mxu0 0.0
        %1382 = vmatmul.mubr.f32.gmra.mrb[0].mxu0 %v1185
        %v1383 = vpop.f32.mrb[0].mxu0
        %v1384 = vadd.f32 %v1295, %v1383
        %v1385 = vpop.f32.mrb[0].mxu0
        %1386 = vmatprep.mubr.f32.mxu0 0.0
        %1387 = vmatmul.mubr.f32.gmra.mrb[0].mxu0 %v1190
        %v1388 = vpop.f32.mrb[0].mxu0
        %v1389 = vadd.f32 %v1295, %v1388
        %v1390 = vpop.f32.mrb[0].mxu0
        %1391 = vmatprep.mubr.f32.mxu0 0.0
        %1392 = vmatmul.mubr.f32.gmra.mrb[0].mxu0 %v1266
        %v1393 = vpop.f32.mrb[0].mxu0
        %v1394 = vadd.f32 %v1295, %v1393
        %v1395 = vpop.f32.mrb[0].mxu0
        %1396 = vmatprep.mubr.f32.mxu0 0.0
        %1397 = vmatmul.mubr.f32.gmra.mrb[0].mxu0 %v1271
        %v1398 = vpop.f32.mrb[0].mxu0
        %v1399 = vadd.f32 %v1295, %v1398
        %v1400 = vpop.f32.mrb[0].mxu0
        %1401 = vdwg.mxu0
        %1402 = vst.msk [vmem:[%s262] sm:$0xff] %vm308, %v1364
        %1403 = vst.msk [vmem:[%s262 + $0x8] sm:$0xff] %vm308, %v1369
        %1404 = vst.msk [vmem:[%s262 + $0x10] sm:$0xff] %vm308, %v1374
        %1405 = vst.msk [vmem:[%s262 + $0x18] sm:$0xff] %vm308, %v1379
        %1406 = vst.msk [vmem:[%s262 + $0x20] sm:$0xff] %vm308, %v1384
        %1407 = vst.msk [vmem:[%s262 + $0x28] sm:$0xff] %vm308, %v1389
        %1408 = vst.msk [vmem:[%s262 + $0x30] sm:$0xff] %vm308, %v1394
        %1409 = vst.msk [vmem:[%s262 + $0x38] sm:$0xff] %vm308, %v1399
        %s1410 = sand.u32 %s160, 1
        %s1411 = scalar_lea.sflag [#allocation4], %s1410
        %s1412 = sand.u32 %s160, 1
        %s1413 = smul.addr %s1412, 64
        %s1414 = scalar_lea.vmem [#allocation5], %s1413
        // Predicated region
        $region49: #{tpu_custom_call.1} parent=43 // pred_check
          %p1415 = pneg %p170
        $region50: #{tpu_custom_call.1} parent=43 // pred_check_branch
          %1417 = sbr.rel (%p1415) target = $region52
        $region51: #{tpu_custom_call.1} parent=43 // pred_region
          %s1418 = smul.u32 4, %s21
          %s1420 = ssub.s32 1024, 1024
          %1421 = vsyncadd %s1411, %s1420
          %s1422 = smul.addr %s1418, 2
          %s1423 = smul.addr %s1422, 128
          %s1424 = scalar_lea.hbm %s6, %s1423
          %s1425 = sshll.u32 %s1414, 4
          %s1426 = int_to_ptr.vmem [resolvable:$true] %s1425
          %1431 = dma.vmem_to_hbm [thread:$0]  %s1426, 1024, %s1424, %s1411, 128, 128, 8
        $region52: #{tpu_custom_call.1} parent=43 // pred_fallthru
          _
      $region44: #{tpu_custom_call.1} parent=5 // pred_fallthru
        _
      %p1432 = scmp.le.s32.totalorder 2, %s16
      // Predicated region
      $region53: #{tpu_custom_call.1} parent=5 // pred_check
        %p1433 = pneg %p1432
      $region54: #{tpu_custom_call.1} parent=5 // pred_check_branch
        %1435 = sbr.rel (%p1433) target = $region56
      $region55: #{tpu_custom_call.1} parent=5 // pred_region
        %s1436 = ssub.s32 %s16, 2
        // Predicated region
        $region57: #{tpu_custom_call.1} parent=55 // pred_check
          %p1437 = pneg %p176
        $region58: #{tpu_custom_call.1} parent=55 // pred_check_branch
          %1439 = sbr.rel (%p1437) target = $region60
        $region59: #{tpu_custom_call.1} parent=55 // pred_region
          %s1440 = sand.u32 %s161, 1
          %s1441 = scalar_lea.sflag [#allocation4], %s1440
          %s1442 = sand.u32 %s161, 1
          %s1443 = smul.addr %s1442, 64
          %s1444 = scalar_lea.vmem [#allocation5], %s1443
          %1445 = dma.done %s1441, 1024
        $region60: #{tpu_custom_call.1} parent=55 // pred_fallthru
          _
      $region56: #{tpu_custom_call.1} parent=5 // pred_fallthru
        _
    $region6: #{tpu_custom_call.1} parent=1 // loop_footer
      %s20 = sadd.s32 1, %s16
    $region7: #{tpu_custom_call.1} parent=1 // loop_footer_branch
      %15 = sbr.rel target = $region3
    $region8: #{tpu_custom_call.1} parent=1 // loop_exit
      _
    %1446 = vsyncpa [#allocation3], 1
    %s1447 = scalar_lea.sflag [#allocation3], 1
    %1448 = vsyncpa %s1447, 1
    %1449 = vsyncpa [#allocation4], 1
    %s1450 = scalar_lea.sflag [#allocation4], 1
    %1451 = vsyncpa %s1450, 1

</llo_original>
